<compile_context>
chip_gen: v7x
topology: tpu7x:2x2x1
jax: 0.10.0
libtpu: 0.0.40
codegen_flags: <defaults>
</compile_context>

<pallas_src>
import numpy as np
import jax
import jax.numpy as jnp
from jax import lax
from jax.experimental import pallas as pl
from jax.experimental.pallas import tpu as pltpu


# ----------------------------------------------------------------------------------------
# helpers
# ----------------------------------------------------------------------------------------
def _bilinear_matrix(out_size, in_size, scale):
    """1-D bilinear interpolation matrix matching F.interpolate(align_corners=False).
    Rows sum to 1 (row-stochastic), which is what makes the logits/bias commute exactly."""
    dst = np.arange(out_size, dtype=np.float64)
    src = np.maximum((dst + 0.5) / float(scale) - 0.5, 0.0)
    i0 = np.minimum(np.floor(src).astype(np.int64), in_size - 1)
    i1 = np.minimum(i0 + 1, in_size - 1)
    w1 = src - i0
    w0 = 1.0 - w1
    m = np.zeros((out_size, in_size), dtype=np.float64)
    m[np.arange(out_size), i0] += w0
    m[np.arange(out_size), i1] += w1
    return m


def _vmem_limit_bytes():
    """Generation-aware VMEM budget: ~3/4 of physical, capped at 96 MiB.
    v5e/v6e (128 MiB) -> 96 MiB, v7x (64 MiB) -> 48 MiB, unknown -> 48 MiB.
    (Perf knob only; a conservative fallback is always safe, hence the guarded query.)"""
    cap = None
    try:
        if hasattr(pltpu, "get_tpu_info"):
            cap = getattr(pltpu.get_tpu_info(), "vmem_capacity_bytes", None)
    except Exception:
        cap = None
    if not cap:
        cap = 64 * 1024 * 1024
    return int(min(cap * 3 // 4, 96 * 1024 * 1024))


_ROLL_MODE_CACHE = {}


def _probe_roll_mode(dtype):
    """Empirically determine pltpu.roll's rotation direction for `dtype`.

    Returns 'jnp'  (result[p] = x[p - shift], i.e. jnp.roll semantics),
            'rev'  (result[p] = x[p + shift]), or
            None   (roll unusable for this dtype -> caller uses shifted slices instead).
    The probe keeps the conv kernel correct regardless of the rotate convention or
    per-dtype lowering support of the installed jaxlib."""
    key = jnp.dtype(dtype).name
    if key in _ROLL_MODE_CACHE:
        return _ROLL_MODE_CACHE[key]
    mode = None
    try:
        def _k(o_ref):
            v = lax.broadcasted_iota(jnp.int32, (32, 128), 0).astype(dtype)
            o_ref[...] = pltpu.roll(v, 1, axis=0)

        out = pl.pallas_call(
            _k, out_shape=jax.ShapeDtypeStruct((32, 128), jnp.dtype(dtype)))()
        v00 = int(jax.device_get(out)[0, 0])
        mode = {31: "jnp", 1: "rev"}.get(v00, None)
    except Exception:
        mode = None
    _ROLL_MODE_CACHE[key] = mode
    return mode


# ----------------------------------------------------------------------------------------
# stage 1: per-level, row-tiled conv3x3 + bias + relu, fused with the 1x1 conv_logits
# ----------------------------------------------------------------------------------------
def _make_conv_logits_kernel(th, wi, add_bias, cdt, roll_mode):
    """One row-tile of one level.

    xw_ref : ((th+4)*wi, Cin)  flattened H-padded row window (2-row halo each side)
    w9_ref : (9, Cin, C)       3x3 conv weights, tap-major
    wl_ref : (C, ncls)         conv_logits weight
    b_ref  : (1, C)            conv bias (f32)
    bl_ref : (1, ncls)         conv_logits bias (only added when add_bias, i.e. level 0)
    z_ref  : (th*wi, ncls)     per-level logits output (f32)
    """
    npix = th * wi

    def kernel(xw_ref, w9_ref, wl_ref, b_ref, bl_ref, z_ref):
        col = lax.broadcasted_iota(jnp.int32, (npix, 1), 0) % wi
        left_ok = col > 0            # dx = -1 tap invalid in first column
        right_ok = col < (wi - 1)    # dx = +1 tap invalid in last column
        acc = None
        for dy in range(3):
            base = (dy + 1) * wi                         # sublane-aligned when wi % 8 == 0
            tap_c = xw_ref[base:base + npix, :]
            if roll_mode is None:
                tap_l = xw_ref[base - 1:base - 1 + npix, :]
                tap_r = xw_ref[base + 1:base + 1 + npix, :]
            else:
                # XLU rotations instead of sublane-misaligned slices; the circular
                # wrap-around rows land only on masked (edge-column) positions.
                s_l = 1 if roll_mode == "jnp" else npix - 1
                s_r = npix - 1 if roll_mode == "jnp" else 1
                tap_l = pltpu.roll(tap_c, s_l, axis=0)
                tap_r = pltpu.roll(tap_c, s_r, axis=0)
            tap_l = jnp.where(left_ok, tap_l, jnp.zeros_like(tap_l))
            tap_r = jnp.where(right_ok, tap_r, jnp.zeros_like(tap_r))
            for dx, tap in ((0, tap_l), (1, tap_c), (2, tap_r)):
                part = jnp.dot(tap, w9_ref[dy * 3 + dx],
                               preferred_element_type=jnp.float32)
                acc = part if acc is None else acc + part
        y = jnp.maximum(acc + b_ref[...], 0.0)                       # (npix, C) f32
        z = jnp.dot(y.astype(cdt), wl_ref[...],
                    preferred_element_type=jnp.float32)              # (npix, ncls) f32
        if add_bias:
            z = z + bl_ref[...]
        z_ref[...] = z

    return kernel


# ----------------------------------------------------------------------------------------
# stage 2: per (batch, class-tile): sum over levels of composed separable bilinear
#          upsamples applied to the per-level logits; writes NCHW f32 output directly.
# ----------------------------------------------------------------------------------------
def _make_upsample_sum_kernel(n_lvl, kc):
    def kernel(*refs):
        z_refs = refs[0:n_lvl]                    # each (kc, Hi, Wi)      f32
        uh_refs = refs[n_lvl:2 * n_lvl]           # each (4H0, Hi)         f32
        uwT_refs = refs[2 * n_lvl:3 * n_lvl]      # each (Wi, 4W0)         f32
        out_ref = refs[3 * n_lvl]                 # (kc, 4H0, 4W0)         f32
        uh = [uh_refs[i][...] for i in range(n_lvl)]      # hoisted loads
        uwT = [uwT_refs[i][...] for i in range(n_lvl)]
        for cc in range(kc):
            acc = None
            for i in range(n_lvl):
                zc = z_refs[i][cc]                                            # (Hi, Wi)
                t = jnp.dot(uh[i], zc, preferred_element_type=jnp.float32)    # (4H0, Wi)
                up = jnp.dot(t, uwT[i], preferred_element_type=jnp.float32)   # (4H0, 4W0)
                acc = up if acc is None else acc + up
            out_ref[cc] = acc
    return kernel


# ----------------------------------------------------------------------------------------
# wrapper
# ----------------------------------------------------------------------------------------
def fcn_seg_head_forward(xs_nchw, conv_ws, conv_bs, logit_w, logit_b,
                         upsample_ratio=2, compute_dtype=jnp.bfloat16,
                         max_tile_rows=8, max_class_tile=8):
    """xs_nchw: list of num_convs arrays (N, Cin, H0//r**i, W0//r**i), NCHW.
    Returns seg_pred (N, num_classes, 4*H0, 4*W0), NCHW, float32 (written directly)."""
    n_lvl = len(xs_nchw)
    n, cin, h0, w0 = (int(s) for s in xs_nchw[0].shape)
    c = int(conv_ws[0].shape[0])
    ncls = int(logit_w.shape[0])
    oh, ow = 4 * h0, 4 * w0
    cdt = jnp.dtype(compute_dtype)
    hs = [int(x.shape[2]) for x in xs_nchw]
    wds = [int(x.shape[3]) for x in xs_nchw]
    for i in range(n_lvl):
        assert hs[i] * upsample_ratio ** i == h0, "level sizes inconsistent with ratio"
        assert wds[i] * upsample_ratio ** i == w0, "level sizes inconsistent with ratio"
    vmem_limit = _vmem_limit_bytes()

    # shared conv_logits params: torch (ncls, C, 1, 1) -> (C, ncls); bias (1, ncls) f32.
    wl = jnp.transpose(jnp.asarray(logit_w).reshape(ncls, c), (1, 0)).astype(cdt)
    bl = jnp.asarray(logit_b).reshape(1, ncls).astype(jnp.float32)

    # -------- stage 1: per level, grid (batch, row_tile), conv3x3+relu then logits -----
    z_lvls = []
    for i in range(n_lvl):
        hi, wi = hs[i], wds[i]
        th = hi
        while th > max_tile_rows and th % 2 == 0:
            th //= 2
        nt = hi // th
        npix = th * wi

        x = jnp.transpose(xs_nchw[i], (0, 2, 3, 1)).astype(cdt)        # NHWC
        xp = jnp.pad(x, ((0, 0), (2, 2), (0, 0), (0, 0)))              # pad H by 2/2
        if nt == 1:
            xw = xp.reshape(n, 1, (hi + 4) * wi, cin)
        else:
            # overlapping row windows (2-row halo each side) built as cheap XLA glue
            xw = jnp.stack([xp[:, t * th:t * th + th + 4] for t in range(nt)], axis=1)
            xw = xw.reshape(n, nt, (th + 4) * wi, cin)

        # torch weight (C, Cin, 3, 3) -> (3, 3, Cin, C) -> (9, Cin, C)
        w9 = (jnp.transpose(jnp.asarray(conv_ws[i]), (2, 3, 1, 0))
              .reshape(9, cin, c).astype(cdt))
        bias = jnp.asarray(conv_bs[i]).reshape(1, c).astype(jnp.float32)

        roll_mode = _probe_roll_mode(cdt) if (wi % 8 == 0) else None

        z = pl.pallas_call(
            _make_conv_logits_kernel(th, wi, add_bias=(i == 0), cdt=cdt,
                                     roll_mode=roll_mode),
            grid=(n, nt),
            in_specs=[
                pl.BlockSpec((None, None, (th + 4) * wi, cin), lambda b, t: (b, t, 0, 0)),
                pl.BlockSpec((9, cin, c), lambda b, t: (0, 0, 0)),
                pl.BlockSpec((c, ncls), lambda b, t: (0, 0)),
                pl.BlockSpec((1, c), lambda b, t: (0, 0)),
                pl.BlockSpec((1, ncls), lambda b, t: (0, 0)),
            ],
            out_specs=pl.BlockSpec((None, None, npix, ncls), lambda b, t: (b, t, 0, 0)),
            out_shape=jax.ShapeDtypeStruct((n, nt, npix, ncls), jnp.float32),
            compiler_params=pltpu.CompilerParams(
                dimension_semantics=("parallel", "parallel"),
                vmem_limit_bytes=vmem_limit),
        )(xw, w9, wl, bias, bl)
        z_lvls.append(z.reshape(n, hi, wi, ncls))

    # layout glue: small per-level logits tensors -> class-major (N, ncls, Hi, Wi)
    z_chw = [jnp.transpose(z, (0, 3, 1, 2)) for z in z_lvls]

    # composed separable upsample matrices (Up4 o Up_{r**i}), built in f64, used in f32.
    uh4 = _bilinear_matrix(oh, h0, 4)
    uw4 = _bilinear_matrix(ow, w0, 4)
    uh_tot, uwT_tot = [], []
    for i in range(n_lvl):
        if i == 0:
            uh_c, uw_c = uh4, uw4
        else:
            s = upsample_ratio ** i
            uh_c = uh4 @ _bilinear_matrix(h0, hs[i], s)
            uw_c = uw4 @ _bilinear_matrix(w0, wds[i], s)
        uh_tot.append(jnp.asarray(uh_c.astype(np.float32)))                       # (4H0, Hi)
        uwT_tot.append(jnp.asarray(np.ascontiguousarray(uw_c.T).astype(np.float32)))  # (Wi, 4W0)

    # class tile: largest divisor of ncls <= max_class_tile (no padded output lanes)
    kc = 1
    for cand in range(min(max_class_tile, ncls), 0, -1):
        if ncls % cand == 0:
            kc = cand
            break

    # -------- stage 2: sum of composed upsamples per class tile, NCHW f32 output -------
    in_specs = (
        [pl.BlockSpec((None, kc, hs[i], wds[i]), lambda b, t: (b, t, 0, 0))
         for i in range(n_lvl)]
        + [pl.BlockSpec((oh, hs[i]), lambda b, t: (0, 0)) for i in range(n_lvl)]
        + [pl.BlockSpec((wds[i], ow), lambda b, t: (0, 0)) for i in range(n_lvl)]
    )
    out = pl.pallas_call(
        _make_upsample_sum_kernel(n_lvl, kc),
        grid=(n, ncls // kc),
        in_specs=in_specs,
        out_specs=pl.BlockSpec((None, kc, oh, ow), lambda b, t: (b, t, 0, 0)),
        out_shape=jax.ShapeDtypeStruct((n, ncls, oh, ow), jnp.float32),
        compiler_params=pltpu.CompilerParams(
            dimension_semantics=("parallel", "parallel"),
            vmem_limit_bytes=vmem_limit),
    )(*z_chw, *uh_tot, *uwT_tot)
    return out


# ----------------------------------------------------------------------------------------
# independent pure-JAX reference (f32) for sanity checking the kernels
# ----------------------------------------------------------------------------------------
def _reference_forward(xs_nchw, conv_ws, conv_bs, logit_w, logit_b, upsample_ratio=2):
    def bilinear_up(x, scale):   # x: NHWC, align_corners=False semantics
        nn, h, w, cc = x.shape
        ohh, oww = h * scale, w * scale

        def grid1d(o, i, s):
            dst = jnp.arange(o, dtype=jnp.float32)
            src = jnp.maximum((dst + 0.5) / s - 0.5, 0.0)
            i0 = jnp.clip(jnp.floor(src).astype(jnp.int32), 0, i - 1)
            i1 = jnp.minimum(i0 + 1, i - 1)
            w1 = src - i0.astype(jnp.float32)
            return i0, i1, w1

        h0, h1, wh = grid1d(ohh, h, scale)
        w0, w1_, ww = grid1d(oww, w, scale)
        xh = x[:, h0] * (1 - wh)[None, :, None, None] + x[:, h1] * wh[None, :, None, None]
        return (xh[:, :, w0] * (1 - ww)[None, None, :, None]
                + xh[:, :, w1_] * ww[None, None, :, None])

    seg = None
    for i, x in enumerate(xs_nchw):
        xh = jnp.transpose(x, (0, 2, 3, 1)).astype(jnp.float32)
        w = jnp.transpose(conv_ws[i], (2, 3, 1, 0))           # HWIO
        y = lax.conv_general_dilated(xh, w, (1, 1), "SAME",
                                     dimension_numbers=("NHWC", "HWIO", "NHWC"))
        y = jnp.maximum(y + conv_bs[i][None, None, None, :], 0.0)
        up = bilinear_up(y, upsample_ratio ** i)
        seg = up if seg is None else seg + up
    seg4 = bilinear_up(seg, 4)
    ncls, c = logit_w.shape[:2]
    pred = jnp.einsum("nhwc,kc->nkhw", seg4, logit_w.reshape(ncls, c))
    return pred + logit_b[None, :, None, None]


# ----------------------------------------------------------------------------------------
if __name__ == "__main__":
    # Small synthetic config (module defaults are in_channels=256, num_classes=133;
    # channels kept lane-aligned at 128 for the demo, classes small & unpadded).
    N, CIN, COUT, NCLS = 2, 128, 128, 5
    H0 = W0 = 16
    NUM_CONVS = 4

    key = jax.random.PRNGKey(0)
    keys = jax.random.split(key, 3 * NUM_CONVS + 2)

    xs, conv_ws, conv_bs = [], [], []
    ki = 0
    for i in range(NUM_CONVS):
        h = H0 // (2 ** i)
        xs.append(jax.random.normal(keys[ki], (N, CIN, h, h), jnp.float32)); ki += 1
        conv_ws.append(0.2 * jax.random.normal(keys[ki], (COUT, CIN, 3, 3), jnp.float32)); ki += 1
        conv_bs.append(0.1 * jax.random.normal(keys[ki], (COUT,), jnp.float32)); ki += 1
    logit_w = 0.2 * jax.random.normal(keys[ki], (NCLS, COUT, 1, 1), jnp.float32); ki += 1
    logit_b = 0.1 * jax.random.normal(keys[ki], (NCLS,), jnp.float32)

    ref = _reference_forward(xs, conv_ws, conv_bs, logit_w, logit_b)

    # f32 compute path: proves algorithmic correctness (incl. the logits commuting,
    # composed upsample matrices, row tiling and the roll-based conv taps).
    pred_f32 = jax.block_until_ready(
        fcn_seg_head_forward(xs, conv_ws, conv_bs, logit_w, logit_b,
                             compute_dtype=jnp.float32))
    assert pred_f32.shape == (N, NCLS, 4 * H0, 4 * W0), pred_f32.shape
    if not jnp.allclose(pred_f32, ref, rtol=1e-3, atol=5e-3):
        raise AssertionError(
            "f32 kernel mismatch vs reference, max abs err = "
            f"{float(jnp.max(jnp.abs(pred_f32 - ref)))}")

    # bf16 fast path (f32 accumulation everywhere): bf16-appropriate tolerance
    pred_bf16 = jax.block_until_ready(
        fcn_seg_head_forward(xs, conv_ws, conv_bs, logit_w, logit_b,
                             compute_dtype=jnp.bfloat16))
    assert pred_bf16.shape == (N, NCLS, 4 * H0, 4 * W0), pred_bf16.shape
    err = float(jnp.max(jnp.abs(pred_bf16 - ref)))
    scale = float(jnp.max(jnp.abs(ref))) + 1e-6
    if err > 3e-2 * scale:
        raise AssertionError(f"bf16 kernel error too large: {err} (ref scale {scale})")

    print("KERNEL_OK")
</pallas_src>

<mosaic_0001>
module attributes {stable_mosaic.version = 11 : i64} {
  func.func @kernel(%arg0: i32, %arg1: i32, %arg2: memref<1x1x192x128xf32, #tpu.memory_space<vmem>>, %arg3: memref<9x128x128xf32, #tpu.memory_space<vmem>>, %arg4: memref<128x5xf32, #tpu.memory_space<vmem>>, %arg5: memref<1x128xf32, #tpu.memory_space<vmem>>, %arg6: memref<1x5xf32, #tpu.memory_space<vmem>>, %arg7: memref<1x1x128x5xf32, #tpu.memory_space<vmem>>) attributes {dimension_semantics = [#tpu.dimension_semantics<parallel>, #tpu.dimension_semantics<parallel>], iteration_bounds = array<i64: 2, 2>, scalar_prefetch = 0 : i64, scratch_operands = 0 : i64, tpu.core_type = #tpu.core_type<tc>, window_params = [{transform_indices = @transform_0, window_bounds = array<i64: 1, 1, 192, 128>}, {pipeline_mode = #tpu.pipeline_mode<synchronous>, transform_indices = @transform_1, window_bounds = array<i64: 9, 128, 128>}, {pipeline_mode = #tpu.pipeline_mode<synchronous>, transform_indices = @transform_2, window_bounds = array<i64: 128, 5>}, {pipeline_mode = #tpu.pipeline_mode<synchronous>, transform_indices = @transform_3, window_bounds = array<i64: 1, 128>}, {pipeline_mode = #tpu.pipeline_mode<synchronous>, transform_indices = @transform_4, window_bounds = array<i64: 1, 5>}, {transform_indices = @transform_5, window_bounds = array<i64: 1, 1, 128, 5>}]} {
    %0 = tpu.iota {dimensions = array<i32: 0>} : vector<128x1xi32>
    %c16_i32 = arith.constant 16 : i32
    %c0_i32 = arith.constant 0 : i32
    %1 = arith.cmpi eq, %c16_i32, %c0_i32 : i32
    %c1_i32 = arith.constant 1 : i32
    %2 = arith.select %1, %c1_i32, %c16_i32 : i32
    %3 = vector.broadcast %2 : i32 to vector<128x1xi32>
    %4 = arith.remsi %0, %3 : vector<128x1xi32>
    %c0_i32_0 = arith.constant 0 : i32
    %5 = vector.broadcast %c0_i32_0 : i32 to vector<128x1xi32>
    %6 = arith.cmpi ne, %4, %5 : vector<128x1xi32>
    %c0_i32_1 = arith.constant 0 : i32
    %7 = vector.broadcast %c0_i32_1 : i32 to vector<128x1xi32>
    %8 = arith.cmpi slt, %4, %7 : vector<128x1xi32>
    %c0_i32_2 = arith.constant 0 : i32
    %9 = arith.cmpi slt, %2, %c0_i32_2 : i32
    %10 = vector.broadcast %9 : i1 to vector<128x1xi1>
    %11 = vector.broadcast %10 : vector<128x1xi1> to vector<128x1xi1>
    %12 = arith.xori %8, %11 : vector<128x1xi1>
    %13 = arith.andi %12, %6 : vector<128x1xi1>
    %14 = vector.broadcast %2 : i32 to vector<128x1xi32>
    %15 = arith.addi %4, %14 : vector<128x1xi32>
    %16 = arith.select %13, %15, %4 : vector<128x1xi1>, vector<128x1xi32>
    %c0_i32_3 = arith.constant 0 : i32
    %17 = vector.broadcast %c0_i32_3 : i32 to vector<128x1xi32>
    %18 = arith.cmpi sgt, %16, %17 : vector<128x1xi32>
    %c15_i32 = arith.constant 15 : i32
    %19 = vector.broadcast %c15_i32 : i32 to vector<128x1xi32>
    %20 = arith.cmpi slt, %16, %19 : vector<128x1xi32>
    %c0 = arith.constant 0 : index
    %c0_4 = arith.constant 0 : index
    %c16 = arith.constant 16 : index
    %c0_5 = arith.constant 0 : index
    %21 = vector.load %arg2[%c0, %c0_4, %c16, %c0_5] : memref<1x1x192x128xf32, #tpu.memory_space<vmem>>, vector<1x1x128x128xf32>
    %22 = vector.shape_cast %21 : vector<1x1x128x128xf32> to vector<128x128xf32>
    %c0_6 = arith.constant 0 : index
    %c0_7 = arith.constant 0 : index
    %c15 = arith.constant 15 : index
    %c0_8 = arith.constant 0 : index
    %23 = vector.load %arg2[%c0_6, %c0_7, %c15, %c0_8] : memref<1x1x192x128xf32, #tpu.memory_space<vmem>>, vector<1x1x128x128xf32>
    %24 = vector.shape_cast %23 : vector<1x1x128x128xf32> to vector<128x128xf32>
    %c0_9 = arith.constant 0 : index
    %c0_10 = arith.constant 0 : index
    %c17 = arith.constant 17 : index
    %c0_11 = arith.constant 0 : index
    %25 = vector.load %arg2[%c0_9, %c0_10, %c17, %c0_11] : memref<1x1x192x128xf32, #tpu.memory_space<vmem>>, vector<1x1x128x128xf32>
    %26 = vector.shape_cast %25 : vector<1x1x128x128xf32> to vector<128x128xf32>
    %cst = arith.constant 0.000000e+00 : f32
    %27 = vector.broadcast %cst : f32 to vector<128x128xf32>
    %28 = vector.shape_cast %18 : vector<128x1xi1> to vector<128x1xi1>
    %29 = vector.broadcast %28 : vector<128x1xi1> to vector<128x128xi1>
    %30 = arith.select %29, %24, %27 : vector<128x128xi1>, vector<128x128xf32>
    %cst_12 = arith.constant 0.000000e+00 : f32
    %31 = vector.broadcast %cst_12 : f32 to vector<128x128xf32>
    %32 = vector.shape_cast %20 : vector<128x1xi1> to vector<128x1xi1>
    %33 = vector.broadcast %32 : vector<128x1xi1> to vector<128x128xi1>
    %34 = arith.select %33, %26, %31 : vector<128x128xi1>, vector<128x128xf32>
    %c0_13 = arith.constant 0 : index
    %c0_14 = arith.constant 0 : index
    %c0_15 = arith.constant 0 : index
    %35 = vector.load %arg3[%c0_13, %c0_14, %c0_15] : memref<9x128x128xf32, #tpu.memory_space<vmem>>, vector<1x128x128xf32>
    %36 = vector.shape_cast %35 : vector<1x128x128xf32> to vector<128x128xf32>
    %cst_16 = arith.constant dense<0.000000e+00> : vector<128x128xf32>
    %37 = tpu.matmul %30, %36, %cst_16 {dimension_numbers = #tpu.dot_dimension_numbers<[1], [0], [0], [1], [0, 0, 1, 1], [], []>} : vector<128x128xf32>, vector<128x128xf32>, vector<128x128xf32> -> vector<128x128xf32>
    %c1 = arith.constant 1 : index
    %c0_17 = arith.constant 0 : index
    %c0_18 = arith.constant 0 : index
    %38 = vector.load %arg3[%c1, %c0_17, %c0_18] : memref<9x128x128xf32, #tpu.memory_space<vmem>>, vector<1x128x128xf32>
    %39 = vector.shape_cast %38 : vector<1x128x128xf32> to vector<128x128xf32>
    %cst_19 = arith.constant dense<0.000000e+00> : vector<128x128xf32>
    %40 = tpu.matmul %22, %39, %cst_19 {dimension_numbers = #tpu.dot_dimension_numbers<[1], [0], [0], [1], [0, 0, 1, 1], [], []>} : vector<128x128xf32>, vector<128x128xf32>, vector<128x128xf32> -> vector<128x128xf32>
    %41 = arith.addf %37, %40 : vector<128x128xf32>
    %c2 = arith.constant 2 : index
    %c0_20 = arith.constant 0 : index
    %c0_21 = arith.constant 0 : index
    %42 = vector.load %arg3[%c2, %c0_20, %c0_21] : memref<9x128x128xf32, #tpu.memory_space<vmem>>, vector<1x128x128xf32>
    %43 = vector.shape_cast %42 : vector<1x128x128xf32> to vector<128x128xf32>
    %cst_22 = arith.constant dense<0.000000e+00> : vector<128x128xf32>
    %44 = tpu.matmul %34, %43, %cst_22 {dimension_numbers = #tpu.dot_dimension_numbers<[1], [0], [0], [1], [0, 0, 1, 1], [], []>} : vector<128x128xf32>, vector<128x128xf32>, vector<128x128xf32> -> vector<128x128xf32>
    %45 = arith.addf %41, %44 : vector<128x128xf32>
    %c0_23 = arith.constant 0 : index
    %c0_24 = arith.constant 0 : index
    %c32 = arith.constant 32 : index
    %c0_25 = arith.constant 0 : index
    %46 = vector.load %arg2[%c0_23, %c0_24, %c32, %c0_25] : memref<1x1x192x128xf32, #tpu.memory_space<vmem>>, vector<1x1x128x128xf32>
    %47 = vector.shape_cast %46 : vector<1x1x128x128xf32> to vector<128x128xf32>
    %c0_26 = arith.constant 0 : index
    %c0_27 = arith.constant 0 : index
    %c31 = arith.constant 31 : index
    %c0_28 = arith.constant 0 : index
    %48 = vector.load %arg2[%c0_26, %c0_27, %c31, %c0_28] : memref<1x1x192x128xf32, #tpu.memory_space<vmem>>, vector<1x1x128x128xf32>
    %49 = vector.shape_cast %48 : vector<1x1x128x128xf32> to vector<128x128xf32>
    %c0_29 = arith.constant 0 : index
    %c0_30 = arith.constant 0 : index
    %c33 = arith.constant 33 : index
    %c0_31 = arith.constant 0 : index
    %50 = vector.load %arg2[%c0_29, %c0_30, %c33, %c0_31] : memref<1x1x192x128xf32, #tpu.memory_space<vmem>>, vector<1x1x128x128xf32>
    %51 = vector.shape_cast %50 : vector<1x1x128x128xf32> to vector<128x128xf32>
    %cst_32 = arith.constant 0.000000e+00 : f32
    %52 = vector.broadcast %cst_32 : f32 to vector<128x128xf32>
    %53 = vector.shape_cast %18 : vector<128x1xi1> to vector<128x1xi1>
    %54 = vector.broadcast %53 : vector<128x1xi1> to vector<128x128xi1>
    %55 = arith.select %54, %49, %52 : vector<128x128xi1>, vector<128x128xf32>
    %cst_33 = arith.constant 0.000000e+00 : f32
    %56 = vector.broadcast %cst_33 : f32 to vector<128x128xf32>
    %57 = vector.shape_cast %20 : vector<128x1xi1> to vector<128x1xi1>
    %58 = vector.broadcast %57 : vector<128x1xi1> to vector<128x128xi1>
    %59 = arith.select %58, %51, %56 : vector<128x128xi1>, vector<128x128xf32>
    %c3 = arith.constant 3 : index
    %c0_34 = arith.constant 0 : index
    %c0_35 = arith.constant 0 : index
    %60 = vector.load %arg3[%c3, %c0_34, %c0_35] : memref<9x128x128xf32, #tpu.memory_space<vmem>>, vector<1x128x128xf32>
    %61 = vector.shape_cast %60 : vector<1x128x128xf32> to vector<128x128xf32>
    %cst_36 = arith.constant dense<0.000000e+00> : vector<128x128xf32>
    %62 = tpu.matmul %55, %61, %cst_36 {dimension_numbers = #tpu.dot_dimension_numbers<[1], [0], [0], [1], [0, 0, 1, 1], [], []>} : vector<128x128xf32>, vector<128x128xf32>, vector<128x128xf32> -> vector<128x128xf32>
    %63 = arith.addf %45, %62 : vector<128x128xf32>
    %c4 = arith.constant 4 : index
    %c0_37 = arith.constant 0 : index
    %c0_38 = arith.constant 0 : index
    %64 = vector.load %arg3[%c4, %c0_37, %c0_38] : memref<9x128x128xf32, #tpu.memory_space<vmem>>, vector<1x128x128xf32>
    %65 = vector.shape_cast %64 : vector<1x128x128xf32> to vector<128x128xf32>
    %cst_39 = arith.constant dense<0.000000e+00> : vector<128x128xf32>
    %66 = tpu.matmul %47, %65, %cst_39 {dimension_numbers = #tpu.dot_dimension_numbers<[1], [0], [0], [1], [0, 0, 1, 1], [], []>} : vector<128x128xf32>, vector<128x128xf32>, vector<128x128xf32> -> vector<128x128xf32>
    %67 = arith.addf %63, %66 : vector<128x128xf32>
    %c5 = arith.constant 5 : index
    %c0_40 = arith.constant 0 : index
    %c0_41 = arith.constant 0 : index
    %68 = vector.load %arg3[%c5, %c0_40, %c0_41] : memref<9x128x128xf32, #tpu.memory_space<vmem>>, vector<1x128x128xf32>
    %69 = vector.shape_cast %68 : vector<1x128x128xf32> to vector<128x128xf32>
    %cst_42 = arith.constant dense<0.000000e+00> : vector<128x128xf32>
    %70 = tpu.matmul %59, %69, %cst_42 {dimension_numbers = #tpu.dot_dimension_numbers<[1], [0], [0], [1], [0, 0, 1, 1], [], []>} : vector<128x128xf32>, vector<128x128xf32>, vector<128x128xf32> -> vector<128x128xf32>
    %71 = arith.addf %67, %70 : vector<128x128xf32>
    %c0_43 = arith.constant 0 : index
    %c0_44 = arith.constant 0 : index
    %c48 = arith.constant 48 : index
    %c0_45 = arith.constant 0 : index
    %72 = vector.load %arg2[%c0_43, %c0_44, %c48, %c0_45] : memref<1x1x192x128xf32, #tpu.memory_space<vmem>>, vector<1x1x128x128xf32>
    %73 = vector.shape_cast %72 : vector<1x1x128x128xf32> to vector<128x128xf32>
    %c0_46 = arith.constant 0 : index
    %c0_47 = arith.constant 0 : index
    %c47 = arith.constant 47 : index
    %c0_48 = arith.constant 0 : index
    %74 = vector.load %arg2[%c0_46, %c0_47, %c47, %c0_48] : memref<1x1x192x128xf32, #tpu.memory_space<vmem>>, vector<1x1x128x128xf32>
    %75 = vector.shape_cast %74 : vector<1x1x128x128xf32> to vector<128x128xf32>
    %c0_49 = arith.constant 0 : index
    %c0_50 = arith.constant 0 : index
    %c49 = arith.constant 49 : index
    %c0_51 = arith.constant 0 : index
    %76 = vector.load %arg2[%c0_49, %c0_50, %c49, %c0_51] : memref<1x1x192x128xf32, #tpu.memory_space<vmem>>, vector<1x1x128x128xf32>
    %77 = vector.shape_cast %76 : vector<1x1x128x128xf32> to vector<128x128xf32>
    %cst_52 = arith.constant 0.000000e+00 : f32
    %78 = vector.broadcast %cst_52 : f32 to vector<128x128xf32>
    %79 = vector.shape_cast %18 : vector<128x1xi1> to vector<128x1xi1>
    %80 = vector.broadcast %79 : vector<128x1xi1> to vector<128x128xi1>
    %81 = arith.select %80, %75, %78 : vector<128x128xi1>, vector<128x128xf32>
    %cst_53 = arith.constant 0.000000e+00 : f32
    %82 = vector.broadcast %cst_53 : f32 to vector<128x128xf32>
    %83 = vector.shape_cast %20 : vector<128x1xi1> to vector<128x1xi1>
    %84 = vector.broadcast %83 : vector<128x1xi1> to vector<128x128xi1>
    %85 = arith.select %84, %77, %82 : vector<128x128xi1>, vector<128x128xf32>
    %c6 = arith.constant 6 : index
    %c0_54 = arith.constant 0 : index
    %c0_55 = arith.constant 0 : index
    %86 = vector.load %arg3[%c6, %c0_54, %c0_55] : memref<9x128x128xf32, #tpu.memory_space<vmem>>, vector<1x128x128xf32>
    %87 = vector.shape_cast %86 : vector<1x128x128xf32> to vector<128x128xf32>
    %cst_56 = arith.constant dense<0.000000e+00> : vector<128x128xf32>
    %88 = tpu.matmul %81, %87, %cst_56 {dimension_numbers = #tpu.dot_dimension_numbers<[1], [0], [0], [1], [0, 0, 1, 1], [], []>} : vector<128x128xf32>, vector<128x128xf32>, vector<128x128xf32> -> vector<128x128xf32>
    %89 = arith.addf %71, %88 : vector<128x128xf32>
    %c7 = arith.constant 7 : index
    %c0_57 = arith.constant 0 : index
    %c0_58 = arith.constant 0 : index
    %90 = vector.load %arg3[%c7, %c0_57, %c0_58] : memref<9x128x128xf32, #tpu.memory_space<vmem>>, vector<1x128x128xf32>
    %91 = vector.shape_cast %90 : vector<1x128x128xf32> to vector<128x128xf32>
    %cst_59 = arith.constant dense<0.000000e+00> : vector<128x128xf32>
    %92 = tpu.matmul %73, %91, %cst_59 {dimension_numbers = #tpu.dot_dimension_numbers<[1], [0], [0], [1], [0, 0, 1, 1], [], []>} : vector<128x128xf32>, vector<128x128xf32>, vector<128x128xf32> -> vector<128x128xf32>
    %93 = arith.addf %89, %92 : vector<128x128xf32>
    %c8 = arith.constant 8 : index
    %c0_60 = arith.constant 0 : index
    %c0_61 = arith.constant 0 : index
    %94 = vector.load %arg3[%c8, %c0_60, %c0_61] : memref<9x128x128xf32, #tpu.memory_space<vmem>>, vector<1x128x128xf32>
    %95 = vector.shape_cast %94 : vector<1x128x128xf32> to vector<128x128xf32>
    %cst_62 = arith.constant dense<0.000000e+00> : vector<128x128xf32>
    %96 = tpu.matmul %85, %95, %cst_62 {dimension_numbers = #tpu.dot_dimension_numbers<[1], [0], [0], [1], [0, 0, 1, 1], [], []>} : vector<128x128xf32>, vector<128x128xf32>, vector<128x128xf32> -> vector<128x128xf32>
    %97 = arith.addf %93, %96 : vector<128x128xf32>
    %c0_63 = arith.constant 0 : index
    %c0_64 = arith.constant 0 : index
    %98 = vector.load %arg5[%c0_63, %c0_64] : memref<1x128xf32, #tpu.memory_space<vmem>>, vector<1x128xf32>
    %99 = vector.broadcast %98 : vector<1x128xf32> to vector<128x128xf32>
    %100 = arith.addf %97, %99 : vector<128x128xf32>
    %cst_65 = arith.constant 0.000000e+00 : f32
    %101 = vector.broadcast %cst_65 : f32 to vector<128x128xf32>
    %102 = arith.maximumf %100, %101 : vector<128x128xf32>
    %c0_66 = arith.constant 0 : index
    %c0_67 = arith.constant 0 : index
    %103 = vector.load %arg4[%c0_66, %c0_67] : memref<128x5xf32, #tpu.memory_space<vmem>>, vector<128x5xf32>
    %cst_68 = arith.constant dense<0.000000e+00> : vector<128x5xf32>
    %104 = tpu.matmul %102, %103, %cst_68 {dimension_numbers = #tpu.dot_dimension_numbers<[1], [0], [0], [1], [0, 0, 1, 1], [], []>} : vector<128x128xf32>, vector<128x5xf32>, vector<128x5xf32> -> vector<128x5xf32>
    %c0_69 = arith.constant 0 : index
    %c0_70 = arith.constant 0 : index
    %105 = vector.load %arg6[%c0_69, %c0_70] : memref<1x5xf32, #tpu.memory_space<vmem>>, vector<1x5xf32>
    %106 = vector.broadcast %105 : vector<1x5xf32> to vector<128x5xf32>
    %107 = arith.addf %104, %106 : vector<128x5xf32>
    %c0_71 = arith.constant 0 : index
    %c0_72 = arith.constant 0 : index
    %c0_73 = arith.constant 0 : index
    %c0_74 = arith.constant 0 : index
    %108 = vector.load %arg7[%c0_71, %c0_72, %c0_73, %c0_74] : memref<1x1x128x5xf32, #tpu.memory_space<vmem>>, vector<1x1x128x5xf32>
    %109 = vector.shape_cast %108 : vector<1x1x128x5xf32> to vector<128x5xf32>
    %110 = vector.shape_cast %107 : vector<128x5xf32> to vector<1x1x128x5xf32>
    tpu.vector_store %arg7[%c0_71, %c0_72, %c0_73, %c0_74], %110 {strides = array<i32>} : memref<1x1x128x5xf32, #tpu.memory_space<vmem>>, vector<1x1x128x5xf32>,
    return
  }
  func.func @transform_0(%arg0: i32, %arg1: i32) -> (i32, i32, i32, i32) {
    %c0_i32 = arith.constant 0 : i32
    %c0_i32_0 = arith.constant 0 : i32
    %c0_i32_1 = arith.constant 0 : i32
    return %arg0, %arg1, %c0_i32, %c0_i32_0 : i32, i32, i32, i32
  }
  func.func @transform_1(%arg0: i32, %arg1: i32) -> (i32, i32, i32) {
    %c0_i32 = arith.constant 0 : i32
    %c0_i32_0 = arith.constant 0 : i32
    %c0_i32_1 = arith.constant 0 : i32
    %c0_i32_2 = arith.constant 0 : i32
    return %c0_i32, %c0_i32_0, %c0_i32_1 : i32, i32, i32
  }
  func.func @transform_2(%arg0: i32, %arg1: i32) -> (i32, i32) {
    %c0_i32 = arith.constant 0 : i32
    %c0_i32_0 = arith.constant 0 : i32
    %c0_i32_1 = arith.constant 0 : i32
    return %c0_i32, %c0_i32_0 : i32, i32
  }
  func.func @transform_3(%arg0: i32, %arg1: i32) -> (i32, i32) {
    %c0_i32 = arith.constant 0 : i32
    %c0_i32_0 = arith.constant 0 : i32
    %c0_i32_1 = arith.constant 0 : i32
    return %c0_i32, %c0_i32_0 : i32, i32
  }
  func.func @transform_4(%arg0: i32, %arg1: i32) -> (i32, i32) {
    %c0_i32 = arith.constant 0 : i32
    %c0_i32_0 = arith.constant 0 : i32
    %c0_i32_1 = arith.constant 0 : i32
    return %c0_i32, %c0_i32_0 : i32, i32
  }
  func.func @transform_5(%arg0: i32, %arg1: i32) -> (i32, i32, i32, i32) {
    %c0_i32 = arith.constant 0 : i32
    %c0_i32_0 = arith.constant 0 : i32
    %c0_i32_1 = arith.constant 0 : i32
    return %arg0, %arg1, %c0_i32, %c0_i32_0 : i32, i32, i32, i32
  }
}

</mosaic_0001>

<llo_original>
// kernel: tpu_custom_call.1
$region0: #{tpu_custom_call.1}
  #allocation0 [shape = 'u32[]', space=smem, size = 0x4, offset = 0x4, fixed_abs, tag = 'smem constant byte address 0x4 - core index']
  #allocation1 [shape = 'u32[144,128]{1,0:T(1,128)}', space=vmem, size = 0x12000, scoped, tag = 'internal scratch']
  %s0 = inlined_call_operand.hbm [shape: f32[2,2,192,128], index: 0, kind: input, shape index: {}]
  %s1 = inlined_call_operand.hbm [shape: f32[9,128,128], index: 1, kind: input, shape index: {}]
  %s2 = inlined_call_operand.vmem [shape: f32[128,5], index: 2, kind: input, shape index: {}]
  %s3 = inlined_call_operand.vmem [shape: f32[1,128], index: 3, kind: input, shape index: {}]
  %s4 = inlined_call_operand.vmem [shape: f32[1,5], index: 4, kind: input, shape index: {}]
  %s5 = inlined_call_operand.vmem [shape: f32[2,2,128,5], index: 5, kind: output, shape index: {}]
  %s6 = sld [smem:[#allocation0]]
  $region61: #{tpu_custom_call.1} parent=0
    _
  %s8 = ssub.s32 1, %s6
  %s9 = scalar_select 0, %s8, %s6
  $region1: #{tpu_custom_call.1} parent=0
    #allocation2 [shape = 'u8[196608]{0}', space=vmem, size = 0x30000, scoped, tag = 'input window, operand 0']
    #allocation3 [shape = 's32[2]{0}', space=sflag, size = 0x8, scoped, tag = 'scoped memory for tpu_custom_call.1']
    #allocation4 [shape = 'u8[589824]{0}', space=vmem, size = 0x90000, scoped, tag = 'input window, operand 1, single buffered']
    #allocation5 [shape = 's32[1]{0}', space=sflag, size = 0x4, scoped, tag = 'scoped memory for tpu_custom_call.1']
    %10 = vsyncpa [#allocation3], 0
    %s11 = scalar_lea.sflag [#allocation3], 1
    %12 = vsyncpa %s11, 0
    %13 = vsyncpa [#allocation5], 0
    loop: start=0, step=1, limit=6
    $region2: #{tpu_custom_call.1} parent=1 // loop_pre_header
      _
    $region3: #{tpu_custom_call.1} parent=1 // loop_header
      %s15 = sphi 0, %s19
      %p16 = scmp.ge.s32.totalorder %s15, 6
      %s22 = sphi 0, %s34
      %s23 = sphi 0, %s30
      %s24 = sphi 0, %s22
      %s25 = sphi 0, %s23
      %s26 = sphi 0, %s24
      %s27 = sphi 0, %s25
      %s39 = sphi 0, %s41
      %s42 = sphi 0, %s39
      %s43 = sphi 0, %s42
      %s59 = sphi 0, %s43
      %s63 = sphi 0, %s63
      %s65 = sphi 0, %s63
      %s66 = sphi 0, %s65
      %s80 = sphi 0, %s66
      %s84 = sphi 0, %s84
      %s86 = sphi 0, %s84
      %s87 = sphi 0, %s86
      %s101 = sphi 0, %s87
      %s105 = sphi 0, %s105
      %s107 = sphi 0, %s105
      %s108 = sphi 0, %s107
      %s122 = sphi 0, %s108
      %s126 = sphi 0, %s126
      %s128 = sphi 0, %s126
      %s129 = sphi 0, %s128
      %s143 = sphi 0, %s129
      %s151 = sphi 0, %s153
      %s154 = sphi 0, %s151
      %s155 = sphi 0, %s154
      %s171 = sphi 0, %s155
    $region4: #{tpu_custom_call.1} parent=1 // loop_header_branch
      %18 = sbr.rel (%p16) target = $region8
    $region5: #{tpu_custom_call.1} parent=1 // loop_body
      %s20 = ssub.s32 %s15, 1
      %s21 = ssub.s32 %s15, 2
      %s28 = sadd.s32 1, %s23
      %p29 = scmp.ge.s32.totalorder %s28, 2
      %s30 = scalar_select %p29, 0, %s28
      %s31 = sadd.s32 1, %s22
      %s32 = scalar_select %p29, %s31, %s22
      %p33 = scmp.ge.s32.totalorder %s32, 2
      %s34 = scalar_select %p33, 0, %s32
      %s35 = ssub.s32 %s22, %s34
      %s36 = ssub.s32 %s23, %s30
      %s37 = sor.u32 %s35, %s36
      %p38 = scmp.eq.s32.totalorder %s37, 0
      %s40 = sadd.s32 %s39, 1
      %s41 = scalar_select %p38, %s39, %s40
      %p44 = pneg %p38
      %p45 = scmp.eq.s32.totalorder %s15, 3
      %p46 = por %p44, %p45
      %p47 = scmp.ne.s32.totalorder %s39, %s42
      %p48 = scmp.eq.s32.totalorder %s15, 0
      %p49 = por %p47, %p48
      %p50 = scmp.ne.s32.totalorder %s39, %s42
      %p51 = scmp.eq.s32.totalorder %s20, 3
      %p52 = por %p50, %p51
      %p53 = scmp.ne.s32.totalorder %s42, %s43
      %p54 = scmp.eq.s32.totalorder %s20, 0
      %p55 = por %p53, %p54
      %p56 = scmp.ne.s32.totalorder %s42, %s43
      %p57 = scmp.eq.s32.totalorder %s21, 3
      %p58 = por %p56, %p57
      %p60 = scmp.ne.s32.totalorder %s43, %s59
      %p61 = scmp.eq.s32.totalorder %s21, 0
      %p62 = por %p60, %p61
      %s64 = sadd.s32 %s63, 1
      %p67 = scmp.eq.s32.totalorder %s15, 3
      %p68 = scmp.ne.s32.totalorder %s63, %s65
      %p69 = scmp.eq.s32.totalorder %s15, 0
      %p70 = por %p68, %p69
      %p71 = scmp.ne.s32.totalorder %s63, %s65
      %p72 = scmp.eq.s32.totalorder %s20, 3
      %p73 = por %p71, %p72
      %p74 = scmp.ne.s32.totalorder %s65, %s66
      %p75 = scmp.eq.s32.totalorder %s20, 0
      %p76 = por %p74, %p75
      %p77 = scmp.ne.s32.totalorder %s65, %s66
      %p78 = scmp.eq.s32.totalorder %s21, 3
      %p79 = por %p77, %p78
      %p81 = scmp.ne.s32.totalorder %s66, %s80
      %p82 = scmp.eq.s32.totalorder %s21, 0
      %p83 = por %p81, %p82
      %s85 = sadd.s32 %s84, 1
      %p88 = scmp.eq.s32.totalorder %s15, 3
      %p89 = scmp.ne.s32.totalorder %s84, %s86
      %p90 = scmp.eq.s32.totalorder %s15, 0
      %p91 = por %p89, %p90
      %p92 = scmp.ne.s32.totalorder %s84, %s86
      %p93 = scmp.eq.s32.totalorder %s20, 3
      %p94 = por %p92, %p93
      %p95 = scmp.ne.s32.totalorder %s86, %s87
      %p96 = scmp.eq.s32.totalorder %s20, 0
      %p97 = por %p95, %p96
      %p98 = scmp.ne.s32.totalorder %s86, %s87
      %p99 = scmp.eq.s32.totalorder %s21, 3
      %p100 = por %p98, %p99
      %p102 = scmp.ne.s32.totalorder %s87, %s101
      %p103 = scmp.eq.s32.totalorder %s21, 0
      %p104 = por %p102, %p103
      %s106 = sadd.s32 %s105, 1
      %p109 = scmp.eq.s32.totalorder %s15, 3
      %p110 = scmp.ne.s32.totalorder %s105, %s107
      %p111 = scmp.eq.s32.totalorder %s15, 0
      %p112 = por %p110, %p111
      %p113 = scmp.ne.s32.totalorder %s105, %s107
      %p114 = scmp.eq.s32.totalorder %s20, 3
      %p115 = por %p113, %p114
      %p116 = scmp.ne.s32.totalorder %s107, %s108
      %p117 = scmp.eq.s32.totalorder %s20, 0
      %p118 = por %p116, %p117
      %p119 = scmp.ne.s32.totalorder %s107, %s108
      %p120 = scmp.eq.s32.totalorder %s21, 3
      %p121 = por %p119, %p120
      %p123 = scmp.ne.s32.totalorder %s108, %s122
      %p124 = scmp.eq.s32.totalorder %s21, 0
      %p125 = por %p123, %p124
      %s127 = sadd.s32 %s126, 1
      %p130 = scmp.eq.s32.totalorder %s15, 3
      %p131 = scmp.ne.s32.totalorder %s126, %s128
      %p132 = scmp.eq.s32.totalorder %s15, 0
      %p133 = por %p131, %p132
      %p134 = scmp.ne.s32.totalorder %s126, %s128
      %p135 = scmp.eq.s32.totalorder %s20, 3
      %p136 = por %p134, %p135
      %p137 = scmp.ne.s32.totalorder %s128, %s129
      %p138 = scmp.eq.s32.totalorder %s20, 0
      %p139 = por %p137, %p138
      %p140 = scmp.ne.s32.totalorder %s128, %s129
      %p141 = scmp.eq.s32.totalorder %s21, 3
      %p142 = por %p140, %p141
      %p144 = scmp.ne.s32.totalorder %s129, %s143
      %p145 = scmp.eq.s32.totalorder %s21, 0
      %p146 = por %p144, %p145
      %s147 = ssub.s32 %s22, %s34
      %s148 = ssub.s32 %s23, %s30
      %s149 = sor.u32 %s147, %s148
      %p150 = scmp.eq.s32.totalorder %s149, 0
      %s152 = sadd.s32 %s151, 1
      %s153 = scalar_select %p150, %s151, %s152
      %p156 = pneg %p150
      %p157 = scmp.eq.s32.totalorder %s15, 3
      %p158 = por %p156, %p157
      %p159 = scmp.ne.s32.totalorder %s151, %s154
      %p160 = scmp.eq.s32.totalorder %s15, 0
      %p161 = por %p159, %p160
      %p162 = scmp.ne.s32.totalorder %s151, %s154
      %p163 = scmp.eq.s32.totalorder %s20, 3
      %p164 = por %p162, %p163
      %p165 = scmp.ne.s32.totalorder %s154, %s155
      %p166 = scmp.eq.s32.totalorder %s20, 0
      %p167 = por %p165, %p166
      %p168 = scmp.ne.s32.totalorder %s154, %s155
      %p169 = scmp.eq.s32.totalorder %s21, 3
      %p170 = por %p168, %p169
      %p172 = scmp.ne.s32.totalorder %s155, %s171
      %p173 = scmp.eq.s32.totalorder %s21, 0
      %p174 = por %p172, %p173
      %p175 = scmp.le.s32.totalorder 1, %s15
      %p176 = scmp.lt.s32.totalorder %s15, 5
      %p177 = pnand %p175, %p176
      %p178 = pneg %p177
      // Predicated region
      $region9: #{tpu_custom_call.1} parent=5 // pred_check
        _
      $region10: #{tpu_custom_call.1} parent=5 // pred_check_branch
        %180 = sbr.rel (%p177) target = $region12
      $region11: #{tpu_custom_call.1} parent=5 // pred_region
        %s181 = ssub.s32 %s15, 1
        // Predicated region
        $region13: #{tpu_custom_call.1} parent=11 // pred_check
          %p182 = pneg %p76
        $region14: #{tpu_custom_call.1} parent=11 // pred_check_branch
          %184 = sbr.rel (%p182) target = $region16
        $region15: #{tpu_custom_call.1} parent=11 // pred_region
          %s186 = ssub.s32 18432, 18432
          %187 = vsyncadd [#allocation5], %s186
          %s188 = sshll.u32 [#allocation4], 4
          %s189 = int_to_ptr.vmem [resolvable:$true] %s188
          %194 = dma.hbm_to_vmem [thread:$0]  %s1, 18432, %s189, [#allocation5], 128, 128, 8
        $region16: #{tpu_custom_call.1} parent=11 // pred_fallthru
          _
        // Predicated region
        $region17: #{tpu_custom_call.1} parent=11 // pred_check
          %p195 = pneg %p97
        $region18: #{tpu_custom_call.1} parent=11 // pred_check_branch
          %197 = sbr.rel (%p195) target = $region20
        $region19: #{tpu_custom_call.1} parent=11 // pred_region
          _
        $region20: #{tpu_custom_call.1} parent=11 // pred_fallthru
          _
        // Predicated region
        $region21: #{tpu_custom_call.1} parent=11 // pred_check
          %p198 = pneg %p118
        $region22: #{tpu_custom_call.1} parent=11 // pred_check_branch
          %200 = sbr.rel (%p198) target = $region24
        $region23: #{tpu_custom_call.1} parent=11 // pred_region
          _
        $region24: #{tpu_custom_call.1} parent=11 // pred_fallthru
          _
        // Predicated region
        $region25: #{tpu_custom_call.1} parent=11 // pred_check
          %p201 = pneg %p139
        $region26: #{tpu_custom_call.1} parent=11 // pred_check_branch
          %203 = sbr.rel (%p201) target = $region28
        $region27: #{tpu_custom_call.1} parent=11 // pred_region
          _
        $region28: #{tpu_custom_call.1} parent=11 // pred_fallthru
          _
      $region12: #{tpu_custom_call.1} parent=5 // pred_fallthru
        _
      %p204 = scmp.lt.s32.totalorder %s15, 4
      // Predicated region
      $region29: #{tpu_custom_call.1} parent=5 // pred_check
        %p205 = pneg %p204
      $region30: #{tpu_custom_call.1} parent=5 // pred_check_branch
        %207 = sbr.rel (%p205) target = $region32
      $region31: #{tpu_custom_call.1} parent=5 // pred_region
        // Predicated region
        $region33: #{tpu_custom_call.1} parent=31 // pred_check
          %p208 = pneg %p49
        $region34: #{tpu_custom_call.1} parent=31 // pred_check_branch
          %210 = sbr.rel (%p208) target = $region36
        $region35: #{tpu_custom_call.1} parent=31 // pred_region
          %s211 = sand.u32 %s39, 1
          %s212 = scalar_lea.sflag [#allocation3], %s211
          %s213 = sand.u32 %s39, 1
          %s214 = smul.addr %s213, 192
          %s215 = scalar_lea.vmem [#allocation2], %s214
          %s217 = ssub.s32 3072, 3072
          %218 = vsyncadd %s212, %s217
          %s219 = smul.addr %s23, 24
          %s220 = smul.addr %s22, 48
          %s221 = sadd.s32 %s219, %s220
          %s222 = smul.addr %s221, 128
          %s223 = scalar_lea.hbm %s0, %s222
          %s224 = sshll.u32 %s215, 4
          %s225 = int_to_ptr.vmem [resolvable:$true] %s224
          %230 = dma.hbm_to_vmem [thread:$0]  %s223, 3072, %s225, %s212, 128, 128, 8
        $region36: #{tpu_custom_call.1} parent=31 // pred_fallthru
          _
      $region32: #{tpu_custom_call.1} parent=5 // pred_fallthru
        _
      %p231 = scmp.le.s32.totalorder 1, %s15
      %p232 = scmp.lt.s32.totalorder %s15, 5
      %p233 = pnand %p231, %p232
      %p234 = pneg %p233
      // Predicated region
      $region37: #{tpu_custom_call.1} parent=5 // pred_check
        _
      $region38: #{tpu_custom_call.1} parent=5 // pred_check_branch
        %236 = sbr.rel (%p233) target = $region40
      $region39: #{tpu_custom_call.1} parent=5 // pred_region
        %s237 = ssub.s32 %s15, 1
        %s238 = sand.u32 %s42, 1
        %s239 = scalar_lea.sflag [#allocation3], %s238
        %s240 = sand.u32 %s42, 1
        %s241 = smul.addr %s240, 192
        %s242 = scalar_lea.vmem [#allocation2], %s241
        // Predicated region
        $region41: #{tpu_custom_call.1} parent=39 // pred_check
          %p243 = pneg %p55
        $region42: #{tpu_custom_call.1} parent=39 // pred_check_branch
          %245 = sbr.rel (%p243) target = $region44
        $region43: #{tpu_custom_call.1} parent=39 // pred_region
          %246 = dma.done %s239, 3072
        $region44: #{tpu_custom_call.1} parent=39 // pred_fallthru
          _
        // Predicated region
        $region45: #{tpu_custom_call.1} parent=39 // pred_check
          %p247 = pneg %p76
        $region46: #{tpu_custom_call.1} parent=39 // pred_check_branch
          %249 = sbr.rel (%p247) target = $region48
        $region47: #{tpu_custom_call.1} parent=39 // pred_region
          %250 = dma.done [#allocation5], 18432
        $region48: #{tpu_custom_call.1} parent=39 // pred_fallthru
          _
        %s251 = sand.u32 %s42, 1
        %s252 = scalar_lea.sflag [#allocation3], %s251
        %s253 = sand.u32 %s42, 1
        %s254 = smul.addr %s253, 192
        %s255 = scalar_lea.vmem [#allocation2], %s254
        %p256 = pneg %p55
        %p257 = pneg %p52
        %p258 = pneg %p76
        %p259 = pneg %p73
        %p260 = pneg %p97
        %p261 = pneg %p94
        %p262 = pneg %p118
        %p263 = pneg %p115
        %p264 = pneg %p139
        %p265 = pneg %p136
        %p266 = pneg %p167
        %p267 = pneg %p164
        %p268 = scmp.lt.s32.totalorder %s24, 1
        %s269 = scalar_select %p268, %s24, 1
        %p270 = scmp.lt.s32.totalorder %s25, 1
        %s271 = scalar_select %p270, %s25, 1
        %s272 = smul.addr %s271, 16
        %s273 = smul.addr %s269, 32
        %s274 = sadd.s32 %s272, %s273
        %s275 = smul.addr %s274, 8
        %s276 = scalar_lea.vmem %s5, %s275
        %p277 = scmp.lt.s32.totalorder %s24, 1
        %s278 = scalar_select %p277, %s24, 1
        %p279 = scmp.lt.s32.totalorder %s25, 1
        %s280 = scalar_select %p279, %s25, 1
        %s281 = smul.addr %s280, 16
        %s282 = smul.addr %s278, 32
        %s283 = sadd.s32 %s281, %s282
        %s284 = smul.addr %s283, 8
        %s285 = scalar_lea.vmem %s5, %s284
        %v286 = vlaneseq
        %v287 = vshrl.u32 %v286, 7
        %v288 = vadd.s32 %v287, 8
        %v289 = vadd.s32 %v287, 16
        %v290 = vadd.s32 %v287, 24
        %v291 = vadd.s32 %v287, 32
        %v292 = vadd.s32 %v287, 40
        %v293 = vadd.s32 %v287, 48
        %v294 = vadd.s32 %v287, 56
        %v295 = vadd.s32 %v287, 64
        %v296 = vadd.s32 %v287, 72
        %v297 = vadd.s32 %v287, 80
        %v298 = vadd.s32 %v287, 88
        %v299 = vadd.s32 %v287, 96
        %v300 = vadd.s32 %v287, 104
        %v301 = vadd.s32 %v287, 112
        %v302 = vadd.s32 %v287, 120
        %vm303 = vcmp.lt.s32.totalorder %v287, 0
        %v304 = vsub.s32 0, %v287
        %v305 = vsel %vm303, %v304, %v287
        %v306 = vshrl.u32 %v305, 4
        %v307 = vand.u32 %v305, 15
        %v308 = vsub.s32 0, %v307
        %v309 = vsel %vm303, %v308, %v307
        %vm310 = vcmp.lt.s32.totalorder %v288, 0
        %v311 = vsub.s32 0, %v288
        %v312 = vsel %vm310, %v311, %v288
        %v313 = vshrl.u32 %v312, 4
        %v314 = vand.u32 %v312, 15
        %v315 = vsub.s32 0, %v314
        %v316 = vsel %vm310, %v315, %v314
        %vm317 = vcmp.lt.s32.totalorder %v289, 0
        %v318 = vsub.s32 0, %v289
        %v319 = vsel %vm317, %v318, %v289
        %v320 = vshrl.u32 %v319, 4
        %v321 = vand.u32 %v319, 15
        %v322 = vsub.s32 0, %v321
        %v323 = vsel %vm317, %v322, %v321
        %vm324 = vcmp.lt.s32.totalorder %v290, 0
        %v325 = vsub.s32 0, %v290
        %v326 = vsel %vm324, %v325, %v290
        %v327 = vshrl.u32 %v326, 4
        %v328 = vand.u32 %v326, 15
        %v329 = vsub.s32 0, %v328
        %v330 = vsel %vm324, %v329, %v328
        %vm331 = vcmp.lt.s32.totalorder %v291, 0
        %v332 = vsub.s32 0, %v291
        %v333 = vsel %vm331, %v332, %v291
        %v334 = vshrl.u32 %v333, 4
        %v335 = vand.u32 %v333, 15
        %v336 = vsub.s32 0, %v335
        %v337 = vsel %vm331, %v336, %v335
        %vm338 = vcmp.lt.s32.totalorder %v292, 0
        %v339 = vsub.s32 0, %v292
        %v340 = vsel %vm338, %v339, %v292
        %v341 = vshrl.u32 %v340, 4
        %v342 = vand.u32 %v340, 15
        %v343 = vsub.s32 0, %v342
        %v344 = vsel %vm338, %v343, %v342
        %vm345 = vcmp.lt.s32.totalorder %v293, 0
        %v346 = vsub.s32 0, %v293
        %v347 = vsel %vm345, %v346, %v293
        %v348 = vshrl.u32 %v347, 4
        %v349 = vand.u32 %v347, 15
        %v350 = vsub.s32 0, %v349
        %v351 = vsel %vm345, %v350, %v349
        %vm352 = vcmp.lt.s32.totalorder %v294, 0
        %v353 = vsub.s32 0, %v294
        %v354 = vsel %vm352, %v353, %v294
        %v355 = vshrl.u32 %v354, 4
        %v356 = vand.u32 %v354, 15
        %v357 = vsub.s32 0, %v356
        %v358 = vsel %vm352, %v357, %v356
        %vm359 = vcmp.lt.s32.totalorder %v295, 0
        %v360 = vsub.s32 0, %v295
        %v361 = vsel %vm359, %v360, %v295
        %v362 = vshrl.u32 %v361, 4
        %v363 = vand.u32 %v361, 15
        %v364 = vsub.s32 0, %v363
        %v365 = vsel %vm359, %v364, %v363
        %vm366 = vcmp.lt.s32.totalorder %v296, 0
        %v367 = vsub.s32 0, %v296
        %v368 = vsel %vm366, %v367, %v296
        %v369 = vshrl.u32 %v368, 4
        %v370 = vand.u32 %v368, 15
        %v371 = vsub.s32 0, %v370
        %v372 = vsel %vm366, %v371, %v370
        %vm373 = vcmp.lt.s32.totalorder %v297, 0
        %v374 = vsub.s32 0, %v297
        %v375 = vsel %vm373, %v374, %v297
        %v376 = vshrl.u32 %v375, 4
        %v377 = vand.u32 %v375, 15
        %v378 = vsub.s32 0, %v377
        %v379 = vsel %vm373, %v378, %v377
        %vm380 = vcmp.lt.s32.totalorder %v298, 0
        %v381 = vsub.s32 0, %v298
        %v382 = vsel %vm380, %v381, %v298
        %v383 = vshrl.u32 %v382, 4
        %v384 = vand.u32 %v382, 15
        %v385 = vsub.s32 0, %v384
        %v386 = vsel %vm380, %v385, %v384
        %vm387 = vcmp.lt.s32.totalorder %v299, 0
        %v388 = vsub.s32 0, %v299
        %v389 = vsel %vm387, %v388, %v299
        %v390 = vshrl.u32 %v389, 4
        %v391 = vand.u32 %v389, 15
        %v392 = vsub.s32 0, %v391
        %v393 = vsel %vm387, %v392, %v391
        %vm394 = vcmp.lt.s32.totalorder %v300, 0
        %v395 = vsub.s32 0, %v300
        %v396 = vsel %vm394, %v395, %v300
        %v397 = vshrl.u32 %v396, 4
        %v398 = vand.u32 %v396, 15
        %v399 = vsub.s32 0, %v398
        %v400 = vsel %vm394, %v399, %v398
        %vm401 = vcmp.lt.s32.totalorder %v301, 0
        %v402 = vsub.s32 0, %v301
        %v403 = vsel %vm401, %v402, %v301
        %v404 = vshrl.u32 %v403, 4
        %v405 = vand.u32 %v403, 15
        %v406 = vsub.s32 0, %v405
        %v407 = vsel %vm401, %v406, %v405
        %vm408 = vcmp.lt.s32.totalorder %v302, 0
        %v409 = vsub.s32 0, %v302
        %v410 = vsel %vm408, %v409, %v302
        %v411 = vshrl.u32 %v410, 4
        %v412 = vand.u32 %v410, 15
        %v413 = vsub.s32 0, %v412
        %v414 = vsel %vm408, %v413, %v412
        %vm415 = vcmp.ne.s32.totalorder %v309, 0
        %vm416 = vcmp.ne.s32.totalorder %v316, 0
        %vm417 = vcmp.ne.s32.totalorder %v323, 0
        %vm418 = vcmp.ne.s32.totalorder %v330, 0
        %vm419 = vcmp.ne.s32.totalorder %v337, 0
        %vm420 = vcmp.ne.s32.totalorder %v344, 0
        %vm421 = vcmp.ne.s32.totalorder %v351, 0
        %vm422 = vcmp.ne.s32.totalorder %v358, 0
        %vm423 = vcmp.ne.s32.totalorder %v365, 0
        %vm424 = vcmp.ne.s32.totalorder %v372, 0
        %vm425 = vcmp.ne.s32.totalorder %v379, 0
        %vm426 = vcmp.ne.s32.totalorder %v386, 0
        %vm427 = vcmp.ne.s32.totalorder %v393, 0
        %vm428 = vcmp.ne.s32.totalorder %v400, 0
        %vm429 = vcmp.ne.s32.totalorder %v407, 0
        %vm430 = vcmp.ne.s32.totalorder %v414, 0
        %vm431 = vcmp.lt.s32.totalorder %v309, 0
        %vm432 = vcmp.lt.s32.totalorder %v316, 0
        %vm433 = vcmp.lt.s32.totalorder %v323, 0
        %vm434 = vcmp.lt.s32.totalorder %v330, 0
        %vm435 = vcmp.lt.s32.totalorder %v337, 0
        %vm436 = vcmp.lt.s32.totalorder %v344, 0
        %vm437 = vcmp.lt.s32.totalorder %v351, 0
        %vm438 = vcmp.lt.s32.totalorder %v358, 0
        %vm439 = vcmp.lt.s32.totalorder %v365, 0
        %vm440 = vcmp.lt.s32.totalorder %v372, 0
        %vm441 = vcmp.lt.s32.totalorder %v379, 0
        %vm442 = vcmp.lt.s32.totalorder %v386, 0
        %vm443 = vcmp.lt.s32.totalorder %v393, 0
        %vm444 = vcmp.lt.s32.totalorder %v400, 0
        %vm445 = vcmp.lt.s32.totalorder %v407, 0
        %vm446 = vcmp.lt.s32.totalorder %v414, 0
        %vm447 = vmand %vm431, %vm415
        %vm448 = vmand %vm432, %vm416
        %vm449 = vmand %vm433, %vm417
        %vm450 = vmand %vm434, %vm418
        %vm451 = vmand %vm435, %vm419
        %vm452 = vmand %vm436, %vm420
        %vm453 = vmand %vm437, %vm421
        %vm454 = vmand %vm438, %vm422
        %vm455 = vmand %vm439, %vm423
        %vm456 = vmand %vm440, %vm424
        %vm457 = vmand %vm441, %vm425
        %vm458 = vmand %vm442, %vm426
        %vm459 = vmand %vm443, %vm427
        %vm460 = vmand %vm444, %vm428
        %vm461 = vmand %vm445, %vm429
        %vm462 = vmand %vm446, %vm430
        %v463 = vadd.s32 %v309, 16
        %v464 = vadd.s32 %v316, 16
        %v465 = vadd.s32 %v323, 16
        %v466 = vadd.s32 %v330, 16
        %v467 = vadd.s32 %v337, 16
        %v468 = vadd.s32 %v344, 16
        %v469 = vadd.s32 %v351, 16
        %v470 = vadd.s32 %v358, 16
        %v471 = vadd.s32 %v365, 16
        %v472 = vadd.s32 %v372, 16
        %v473 = vadd.s32 %v379, 16
        %v474 = vadd.s32 %v386, 16
        %v475 = vadd.s32 %v393, 16
        %v476 = vadd.s32 %v400, 16
        %v477 = vadd.s32 %v407, 16
        %v478 = vadd.s32 %v414, 16
        %v479 = vsel %vm447, %v463, %v309
        %v480 = vsel %vm448, %v464, %v316
        %v481 = vsel %vm449, %v465, %v323
        %v482 = vsel %vm450, %v466, %v330
        %v483 = vsel %vm451, %v467, %v337
        %v484 = vsel %vm452, %v468, %v344
        %v485 = vsel %vm453, %v469, %v351
        %v486 = vsel %vm454, %v470, %v358
        %v487 = vsel %vm455, %v471, %v365
        %v488 = vsel %vm456, %v472, %v372
        %v489 = vsel %vm457, %v473, %v379
        %v490 = vsel %vm458, %v474, %v386
        %v491 = vsel %vm459, %v475, %v393
        %v492 = vsel %vm460, %v476, %v400
        %v493 = vsel %vm461, %v477, %v407
        %v494 = vsel %vm462, %v478, %v414
        %vm495 = vcmp.gt.s32.totalorder %v479, 0
        %vm496 = vcmp.gt.s32.totalorder %v480, 0
        %vm497 = vcmp.gt.s32.totalorder %v481, 0
        %vm498 = vcmp.gt.s32.totalorder %v482, 0
        %vm499 = vcmp.gt.s32.totalorder %v483, 0
        %vm500 = vcmp.gt.s32.totalorder %v484, 0
        %vm501 = vcmp.gt.s32.totalorder %v485, 0
        %vm502 = vcmp.gt.s32.totalorder %v486, 0
        %vm503 = vcmp.gt.s32.totalorder %v487, 0
        %vm504 = vcmp.gt.s32.totalorder %v488, 0
        %vm505 = vcmp.gt.s32.totalorder %v489, 0
        %vm506 = vcmp.gt.s32.totalorder %v490, 0
        %vm507 = vcmp.gt.s32.totalorder %v491, 0
        %vm508 = vcmp.gt.s32.totalorder %v492, 0
        %vm509 = vcmp.gt.s32.totalorder %v493, 0
        %vm510 = vcmp.gt.s32.totalorder %v494, 0
        %vm511 = vcmp.lt.s32.totalorder %v479, 15
        %vm512 = vcmp.lt.s32.totalorder %v480, 15
        %vm513 = vcmp.lt.s32.totalorder %v481, 15
        %vm514 = vcmp.lt.s32.totalorder %v482, 15
        %vm515 = vcmp.lt.s32.totalorder %v483, 15
        %vm516 = vcmp.lt.s32.totalorder %v484, 15
        %vm517 = vcmp.lt.s32.totalorder %v485, 15
        %vm518 = vcmp.lt.s32.totalorder %v486, 15
        %vm519 = vcmp.lt.s32.totalorder %v487, 15
        %vm520 = vcmp.lt.s32.totalorder %v488, 15
        %vm521 = vcmp.lt.s32.totalorder %v489, 15
        %vm522 = vcmp.lt.s32.totalorder %v490, 15
        %vm523 = vcmp.lt.s32.totalorder %v491, 15
        %vm524 = vcmp.lt.s32.totalorder %v492, 15
        %vm525 = vcmp.lt.s32.totalorder %v493, 15
        %vm526 = vcmp.lt.s32.totalorder %v494, 15
        %v527 = vld [vmem:[%s242 + $0x10] sm:$0xff]
        %v528 = vld [vmem:[%s242 + $0x18] sm:$0xff]
        %v529 = vld [vmem:[%s242 + $0x20] sm:$0xff]
        %v530 = vld [vmem:[%s242 + $0x28] sm:$0xff]
        %v531 = vld [vmem:[%s242 + $0x30] sm:$0xff]
        %v532 = vld [vmem:[%s242 + $0x38] sm:$0xff]
        %v533 = vld [vmem:[%s242 + $0x40] sm:$0xff]
        %v534 = vld [vmem:[%s242 + $0x48] sm:$0xff]
        %v535 = vld [vmem:[%s242 + $0x50] sm:$0xff]
        %v536 = vld [vmem:[%s242 + $0x58] sm:$0xff]
        %v537 = vld [vmem:[%s242 + $0x60] sm:$0xff]
        %v538 = vld [vmem:[%s242 + $0x68] sm:$0xff]
        %v539 = vld [vmem:[%s242 + $0x70] sm:$0xff]
        %v540 = vld [vmem:[%s242 + $0x78] sm:$0xff]
        %v541 = vld [vmem:[%s242 + $0x80] sm:$0xff]
        %v542 = vld [vmem:[%s242 + $0x88] sm:$0xff]
        %v543 = vld [vmem:[%s242 + $0xf] sm:$0xff]
        %v544 = vld [vmem:[%s242 + $0x17] sm:$0xff]
        %v545 = vld [vmem:[%s242 + $0x1f] sm:$0xff]
        %v546 = vld [vmem:[%s242 + $0x27] sm:$0xff]
        %v547 = vld [vmem:[%s242 + $0x2f] sm:$0xff]
        %v548 = vld [vmem:[%s242 + $0x37] sm:$0xff]
        %v549 = vld [vmem:[%s242 + $0x3f] sm:$0xff]
        %v550 = vld [vmem:[%s242 + $0x47] sm:$0xff]
        %v551 = vld [vmem:[%s242 + $0x4f] sm:$0xff]
        %v552 = vld [vmem:[%s242 + $0x57] sm:$0xff]
        %v553 = vld [vmem:[%s242 + $0x5f] sm:$0xff]
        %v554 = vld [vmem:[%s242 + $0x67] sm:$0xff]
        %v555 = vld [vmem:[%s242 + $0x6f] sm:$0xff]
        %v556 = vld [vmem:[%s242 + $0x77] sm:$0xff]
        %v557 = vld [vmem:[%s242 + $0x7f] sm:$0xff]
        %v558 = vld [vmem:[%s242 + $0x87] sm:$0xff]
        %v559 = vld [vmem:[%s242 + $0x11] sm:$0xff]
        %v560 = vld [vmem:[%s242 + $0x19] sm:$0xff]
        %v561 = vld [vmem:[%s242 + $0x21] sm:$0xff]
        %v562 = vld [vmem:[%s242 + $0x29] sm:$0xff]
        %v563 = vld [vmem:[%s242 + $0x31] sm:$0xff]
        %v564 = vld [vmem:[%s242 + $0x39] sm:$0xff]
        %v565 = vld [vmem:[%s242 + $0x41] sm:$0xff]
        %v566 = vld [vmem:[%s242 + $0x49] sm:$0xff]
        %v567 = vld [vmem:[%s242 + $0x51] sm:$0xff]
        %v568 = vld [vmem:[%s242 + $0x59] sm:$0xff]
        %v569 = vld [vmem:[%s242 + $0x61] sm:$0xff]
        %v570 = vld [vmem:[%s242 + $0x69] sm:$0xff]
        %v571 = vld [vmem:[%s242 + $0x71] sm:$0xff]
        %v572 = vld [vmem:[%s242 + $0x79] sm:$0xff]
        %v573 = vld [vmem:[%s242 + $0x81] sm:$0xff]
        %v574 = vld [vmem:[%s242 + $0x89] sm:$0xff]
        %v575 = vsel %vm495, 1, 0
        %v576 = vsel %vm496, 1, 0
        %v577 = vsel %vm497, 1, 0
        %v578 = vsel %vm498, 1, 0
        %v579 = vsel %vm499, 1, 0
        %v580 = vsel %vm500, 1, 0
        %v581 = vsel %vm501, 1, 0
        %v582 = vsel %vm502, 1, 0
        %v583 = vsel %vm503, 1, 0
        %v584 = vsel %vm504, 1, 0
        %v585 = vsel %vm505, 1, 0
        %v586 = vsel %vm506, 1, 0
        %v587 = vsel %vm507, 1, 0
        %v588 = vsel %vm508, 1, 0
        %v589 = vsel %vm509, 1, 0
        %v590 = vsel %vm510, 1, 0
        %vm591 = vcmp.eq.s32.totalorder %v575, 1
        %vm592 = vcmp.eq.s32.totalorder %v576, 1
        %vm593 = vcmp.eq.s32.totalorder %v577, 1
        %vm594 = vcmp.eq.s32.totalorder %v578, 1
        %vm595 = vcmp.eq.s32.totalorder %v579, 1
        %vm596 = vcmp.eq.s32.totalorder %v580, 1
        %vm597 = vcmp.eq.s32.totalorder %v581, 1
        %vm598 = vcmp.eq.s32.totalorder %v582, 1
        %vm599 = vcmp.eq.s32.totalorder %v583, 1
        %vm600 = vcmp.eq.s32.totalorder %v584, 1
        %vm601 = vcmp.eq.s32.totalorder %v585, 1
        %vm602 = vcmp.eq.s32.totalorder %v586, 1
        %vm603 = vcmp.eq.s32.totalorder %v587, 1
        %vm604 = vcmp.eq.s32.totalorder %v588, 1
        %vm605 = vcmp.eq.s32.totalorder %v589, 1
        %vm606 = vcmp.eq.s32.totalorder %v590, 1
        %v607 = vsel %vm591, %v543, 0.0
        %v608 = vsel %vm592, %v544, 0.0
        %v609 = vsel %vm593, %v545, 0.0
        %v610 = vsel %vm594, %v546, 0.0
        %v611 = vsel %vm595, %v547, 0.0
        %v612 = vsel %vm596, %v548, 0.0
        %v613 = vsel %vm597, %v549, 0.0
        %v614 = vsel %vm598, %v550, 0.0
        %v615 = vsel %vm599, %v551, 0.0
        %v616 = vsel %vm600, %v552, 0.0
        %v617 = vsel %vm601, %v553, 0.0
        %v618 = vsel %vm602, %v554, 0.0
        %v619 = vsel %vm603, %v555, 0.0
        %v620 = vsel %vm604, %v556, 0.0
        %v621 = vsel %vm605, %v557, 0.0
        %v622 = vsel %vm606, %v558, 0.0
        %v623 = vsel %vm511, 1, 0
        %v624 = vsel %vm512, 1, 0
        %v625 = vsel %vm513, 1, 0
        %v626 = vsel %vm514, 1, 0
        %v627 = vsel %vm515, 1, 0
        %v628 = vsel %vm516, 1, 0
        %v629 = vsel %vm517, 1, 0
        %v630 = vsel %vm518, 1, 0
        %v631 = vsel %vm519, 1, 0
        %v632 = vsel %vm520, 1, 0
        %v633 = vsel %vm521, 1, 0
        %v634 = vsel %vm522, 1, 0
        %v635 = vsel %vm523, 1, 0
        %v636 = vsel %vm524, 1, 0
        %v637 = vsel %vm525, 1, 0
        %v638 = vsel %vm526, 1, 0
        %vm639 = vcmp.eq.s32.totalorder %v623, 1
        %vm640 = vcmp.eq.s32.totalorder %v624, 1
        %vm641 = vcmp.eq.s32.totalorder %v625, 1
        %vm642 = vcmp.eq.s32.totalorder %v626, 1
        %vm643 = vcmp.eq.s32.totalorder %v627, 1
        %vm644 = vcmp.eq.s32.totalorder %v628, 1
        %vm645 = vcmp.eq.s32.totalorder %v629, 1
        %vm646 = vcmp.eq.s32.totalorder %v630, 1
        %vm647 = vcmp.eq.s32.totalorder %v631, 1
        %vm648 = vcmp.eq.s32.totalorder %v632, 1
        %vm649 = vcmp.eq.s32.totalorder %v633, 1
        %vm650 = vcmp.eq.s32.totalorder %v634, 1
        %vm651 = vcmp.eq.s32.totalorder %v635, 1
        %vm652 = vcmp.eq.s32.totalorder %v636, 1
        %vm653 = vcmp.eq.s32.totalorder %v637, 1
        %vm654 = vcmp.eq.s32.totalorder %v638, 1
        %v655 = vsel %vm639, %v559, 0.0
        %v656 = vsel %vm640, %v560, 0.0
        %v657 = vsel %vm641, %v561, 0.0
        %v658 = vsel %vm642, %v562, 0.0
        %v659 = vsel %vm643, %v563, 0.0
        %v660 = vsel %vm644, %v564, 0.0
        %v661 = vsel %vm645, %v565, 0.0
        %v662 = vsel %vm646, %v566, 0.0
        %v663 = vsel %vm647, %v567, 0.0
        %v664 = vsel %vm648, %v568, 0.0
        %v665 = vsel %vm649, %v569, 0.0
        %v666 = vsel %vm650, %v570, 0.0
        %v667 = vsel %vm651, %v571, 0.0
        %v668 = vsel %vm652, %v572, 0.0
        %v669 = vsel %vm653, %v573, 0.0
        %v670 = vsel %vm654, %v574, 0.0
        %v671 = vld [vmem:[#allocation4] sm:$0xff]
        %v672 = vld [vmem:[#allocation4 + $0x8] sm:$0xff]
        %v673 = vld [vmem:[#allocation4 + $0x10] sm:$0xff]
        %v674 = vld [vmem:[#allocation4 + $0x18] sm:$0xff]
        %v675 = vld [vmem:[#allocation4 + $0x20] sm:$0xff]
        %v676 = vld [vmem:[#allocation4 + $0x28] sm:$0xff]
        %v677 = vld [vmem:[#allocation4 + $0x30] sm:$0xff]
        %v678 = vld [vmem:[#allocation4 + $0x38] sm:$0xff]
        %v679 = vld [vmem:[#allocation4 + $0x40] sm:$0xff]
        %v680 = vld [vmem:[#allocation4 + $0x48] sm:$0xff]
        %v681 = vld [vmem:[#allocation4 + $0x50] sm:$0xff]
        %v682 = vld [vmem:[#allocation4 + $0x58] sm:$0xff]
        %v683 = vld [vmem:[#allocation4 + $0x60] sm:$0xff]
        %v684 = vld [vmem:[#allocation4 + $0x68] sm:$0xff]
        %v685 = vld [vmem:[#allocation4 + $0x70] sm:$0xff]
        %v686 = vld [vmem:[#allocation4 + $0x78] sm:$0xff]
        %s687 = scalar_lea.vmem [#allocation4], 128
        %v688 = vld [vmem:[%s687] sm:$0xff]
        %v689 = vld [vmem:[%s687 + $0x8] sm:$0xff]
        %v690 = vld [vmem:[%s687 + $0x10] sm:$0xff]
        %v691 = vld [vmem:[%s687 + $0x18] sm:$0xff]
        %v692 = vld [vmem:[%s687 + $0x20] sm:$0xff]
        %v693 = vld [vmem:[%s687 + $0x28] sm:$0xff]
        %v694 = vld [vmem:[%s687 + $0x30] sm:$0xff]
        %v695 = vld [vmem:[%s687 + $0x38] sm:$0xff]
        %v696 = vld [vmem:[%s687 + $0x40] sm:$0xff]
        %v697 = vld [vmem:[%s687 + $0x48] sm:$0xff]
        %v698 = vld [vmem:[%s687 + $0x50] sm:$0xff]
        %v699 = vld [vmem:[%s687 + $0x58] sm:$0xff]
        %v700 = vld [vmem:[%s687 + $0x60] sm:$0xff]
        %v701 = vld [vmem:[%s687 + $0x68] sm:$0xff]
        %v702 = vld [vmem:[%s687 + $0x70] sm:$0xff]
        %v703 = vld [vmem:[%s687 + $0x78] sm:$0xff]
        %704 = vmatprep.subr.mxu0 0.0
        %705 = vmatpush1.msra.mxu0 %v688
        %706 = vmatprep.subr.mxu0 0.0
        %707 = vmatpush1.msra.mxu0 %v689
        %708 = vmatprep.subr.mxu0 0.0
        %709 = vmatpush1.msra.mxu0 %v690
        %710 = vmatprep.subr.mxu0 0.0
        %711 = vmatpush1.msra.mxu0 %v691
        %712 = vmatprep.subr.mxu0 0.0
        %713 = vmatpush1.msra.mxu0 %v692
        %714 = vmatprep.subr.mxu0 0.0
        %715 = vmatpush1.msra.mxu0 %v693
        %716 = vmatprep.subr.mxu0 0.0
        %717 = vmatpush1.msra.mxu0 %v694
        %718 = vmatprep.subr.mxu0 0.0
        %719 = vmatpush1.msra.mxu0 %v695
        %720 = vmatprep.subr.mxu0 0.0
        %721 = vmatpush1.msra.mxu0 %v696
        %722 = vmatprep.subr.mxu0 0.0
        %723 = vmatpush1.msra.mxu0 %v697
        %724 = vmatprep.subr.mxu0 0.0
        %725 = vmatpush1.msra.mxu0 %v698
        %726 = vmatprep.subr.mxu0 0.0
        %727 = vmatpush1.msra.mxu0 %v699
        %728 = vmatprep.subr.mxu0 0.0
        %729 = vmatpush1.msra.mxu0 %v700
        %730 = vmatprep.subr.mxu0 0.0
        %731 = vmatpush1.msra.mxu0 %v701
        %732 = vmatprep.subr.mxu0 0.0
        %733 = vmatpush1.msra.mxu0 %v702
        %734 = vmatprep.subr.mxu0 0.0
        %735 = vmatpush1.msra.mxu0 %v703
        %736 = vmatprep.subr.mxu0 0.0
        %737 = vmatpush1.msra.mxu0 0.0
        %738 = vmatprep.subr.mxu0 0.0
        %739 = vmatpush1.msra.mxu0 0.0
        %740 = vmatprep.subr.mxu0 0.0
        %741 = vmatpush1.msra.mxu0 0.0
        %742 = vmatprep.subr.mxu0 0.0
        %743 = vmatpush1.msra.mxu0 0.0
        %744 = vmatprep.subr.mxu0 0.0
        %745 = vmatpush1.msra.mxu0 0.0
        %746 = vmatprep.subr.mxu0 0.0
        %747 = vmatpush1.msra.mxu0 0.0
        %748 = vmatprep.subr.mxu0 0.0
        %749 = vmatpush1.msra.mxu0 0.0
        %750 = vmatprep.subr.mxu0 0.0
        %751 = vmatpush1.msra.mxu0 0.0
        %752 = vmatprep.subr.mxu0 0.0
        %753 = vmatpush1.msra.mxu0 0.0
        %754 = vmatprep.subr.mxu0 0.0
        %755 = vmatpush1.msra.mxu0 0.0
        %756 = vmatprep.subr.mxu0 0.0
        %757 = vmatpush1.msra.mxu0 0.0
        %758 = vmatprep.subr.mxu0 0.0
        %759 = vmatpush1.msra.mxu0 0.0
        %760 = vmatprep.subr.mxu0 0.0
        %761 = vmatpush1.msra.mxu0 0.0
        %762 = vmatprep.subr.mxu0 0.0
        %763 = vmatpush1.msra.mxu0 0.0
        %764 = vmatprep.subr.mxu0 0.0
        %765 = vmatpush1.msra.mxu0 0.0
        %766 = vmatprep.subr.mxu0 0.0
        %767 = vmatpush1.msra.mxu0 0.0
        %768 = vmatprep.mubr.f32.mxu0 0.0
        %769 = vmatmul.mubr.f32.gmra.mrb[0].mxu0 %v527
        %v770 = vpop.f32.mrb[0].mxu0
        %v771 = vadd.f32 0.0, %v770
        %v772 = vpop.f32.mrb[0].mxu0
        %773 = vmatprep.mubr.f32.mxu0 0.0
        %774 = vmatmul.mubr.f32.gmra.mrb[0].mxu0 %v528
        %v775 = vpop.f32.mrb[0].mxu0
        %v776 = vadd.f32 0.0, %v775
        %v777 = vpop.f32.mrb[0].mxu0
        %778 = vmatprep.mubr.f32.mxu0 0.0
        %779 = vmatmul.mubr.f32.gmra.mrb[0].mxu0 %v529
        %v780 = vpop.f32.mrb[0].mxu0
        %v781 = vadd.f32 0.0, %v780
        %v782 = vpop.f32.mrb[0].mxu0
        %783 = vmatprep.mubr.f32.mxu0 0.0
        %784 = vmatmul.mubr.f32.gmra.mrb[0].mxu0 %v530
        %v785 = vpop.f32.mrb[0].mxu0
        %v786 = vadd.f32 0.0, %v785
        %v787 = vpop.f32.mrb[0].mxu0
        %788 = vmatprep.mubr.f32.mxu0 0.0
        %789 = vmatmul.mubr.f32.gmra.mrb[0].mxu0 %v531
        %v790 = vpop.f32.mrb[0].mxu0
        %v791 = vadd.f32 0.0, %v790
        %v792 = vpop.f32.mrb[0].mxu0
        %793 = vmatprep.mubr.f32.mxu0 0.0
        %794 = vmatmul.mubr.f32.gmra.mrb[0].mxu0 %v532
        %v795 = vpop.f32.mrb[0].mxu0
        %v796 = vadd.f32 0.0, %v795
        %v797 = vpop.f32.mrb[0].mxu0
        %798 = vmatprep.mubr.f32.mxu0 0.0
        %799 = vmatmul.mubr.f32.gmra.mrb[0].mxu0 %v533
        %v800 = vpop.f32.mrb[0].mxu0
        %v801 = vadd.f32 0.0, %v800
        %v802 = vpop.f32.mrb[0].mxu0
        %803 = vmatprep.mubr.f32.mxu0 0.0
        %804 = vmatmul.mubr.f32.gmra.mrb[0].mxu0 %v534
        %v805 = vpop.f32.mrb[0].mxu0
        %v806 = vadd.f32 0.0, %v805
        %v807 = vpop.f32.mrb[0].mxu0
        %808 = vmatprep.mubr.f32.mxu0 0.0
        %809 = vmatmul.mubr.f32.gmra.mrb[0].mxu0 %v535
        %v810 = vpop.f32.mrb[0].mxu0
        %v811 = vadd.f32 0.0, %v810
        %v812 = vpop.f32.mrb[0].mxu0
        %813 = vmatprep.mubr.f32.mxu0 0.0
        %814 = vmatmul.mubr.f32.gmra.mrb[0].mxu0 %v536
        %v815 = vpop.f32.mrb[0].mxu0
        %v816 = vadd.f32 0.0, %v815
        %v817 = vpop.f32.mrb[0].mxu0
        %818 = vmatprep.mubr.f32.mxu0 0.0
        %819 = vmatmul.mubr.f32.gmra.mrb[0].mxu0 %v537
        %v820 = vpop.f32.mrb[0].mxu0
        %v821 = vadd.f32 0.0, %v820
        %v822 = vpop.f32.mrb[0].mxu0
        %823 = vmatprep.mubr.f32.mxu0 0.0
        %824 = vmatmul.mubr.f32.gmra.mrb[0].mxu0 %v538
        %v825 = vpop.f32.mrb[0].mxu0
        %v826 = vadd.f32 0.0, %v825
        %v827 = vpop.f32.mrb[0].mxu0
        %828 = vmatprep.mubr.f32.mxu0 0.0
        %829 = vmatmul.mubr.f32.gmra.mrb[0].mxu0 %v539
        %v830 = vpop.f32.mrb[0].mxu0
        %v831 = vadd.f32 0.0, %v830
        %v832 = vpop.f32.mrb[0].mxu0
        %833 = vmatprep.mubr.f32.mxu0 0.0
        %834 = vmatmul.mubr.f32.gmra.mrb[0].mxu0 %v540
        %v835 = vpop.f32.mrb[0].mxu0
        %v836 = vadd.f32 0.0, %v835
        %v837 = vpop.f32.mrb[0].mxu0
        %838 = vmatprep.mubr.f32.mxu0 0.0
        %839 = vmatmul.mubr.f32.gmra.mrb[0].mxu0 %v541
        %v840 = vpop.f32.mrb[0].mxu0
        %v841 = vadd.f32 0.0, %v840
        %v842 = vpop.f32.mrb[0].mxu0
        %843 = vmatprep.mubr.f32.mxu0 0.0
        %844 = vmatmul.mubr.f32.gmra.mrb[0].mxu0 %v542
        %v845 = vpop.f32.mrb[0].mxu0
        %v846 = vadd.f32 0.0, %v845
        %v847 = vpop.f32.mrb[0].mxu0
        %848 = vdwg.mxu0
        %849 = vmatprep.subr.mxu0 0.0
        %850 = vmatpush1.msra.mxu0 %v671
        %851 = vmatprep.subr.mxu0 0.0
        %852 = vmatpush1.msra.mxu0 %v672
        %853 = vmatprep.subr.mxu0 0.0
        %854 = vmatpush1.msra.mxu0 %v673
        %855 = vmatprep.subr.mxu0 0.0
        %856 = vmatpush1.msra.mxu0 %v674
        %857 = vmatprep.subr.mxu0 0.0
        %858 = vmatpush1.msra.mxu0 %v675
        %859 = vmatprep.subr.mxu0 0.0
        %860 = vmatpush1.msra.mxu0 %v676
        %861 = vmatprep.subr.mxu0 0.0
        %862 = vmatpush1.msra.mxu0 %v677
        %863 = vmatprep.subr.mxu0 0.0
        %864 = vmatpush1.msra.mxu0 %v678
        %865 = vmatprep.subr.mxu0 0.0
        %866 = vmatpush1.msra.mxu0 %v679
        %867 = vmatprep.subr.mxu0 0.0
        %868 = vmatpush1.msra.mxu0 %v680
        %869 = vmatprep.subr.mxu0 0.0
        %870 = vmatpush1.msra.mxu0 %v681
        %871 = vmatprep.subr.mxu0 0.0
        %872 = vmatpush1.msra.mxu0 %v682
        %873 = vmatprep.subr.mxu0 0.0
        %874 = vmatpush1.msra.mxu0 %v683
        %875 = vmatprep.subr.mxu0 0.0
        %876 = vmatpush1.msra.mxu0 %v684
        %877 = vmatprep.subr.mxu0 0.0
        %878 = vmatpush1.msra.mxu0 %v685
        %879 = vmatprep.subr.mxu0 0.0
        %880 = vmatpush1.msra.mxu0 %v686
        %881 = vmatprep.subr.mxu0 0.0
        %882 = vmatpush1.msra.mxu0 0.0
        %883 = vmatprep.subr.mxu0 0.0
        %884 = vmatpush1.msra.mxu0 0.0
        %885 = vmatprep.subr.mxu0 0.0
        %886 = vmatpush1.msra.mxu0 0.0
        %887 = vmatprep.subr.mxu0 0.0
        %888 = vmatpush1.msra.mxu0 0.0
        %889 = vmatprep.subr.mxu0 0.0
        %890 = vmatpush1.msra.mxu0 0.0
        %891 = vmatprep.subr.mxu0 0.0
        %892 = vmatpush1.msra.mxu0 0.0
        %893 = vmatprep.subr.mxu0 0.0
        %894 = vmatpush1.msra.mxu0 0.0
        %895 = vmatprep.subr.mxu0 0.0
        %896 = vmatpush1.msra.mxu0 0.0
        %897 = vmatprep.subr.mxu0 0.0
        %898 = vmatpush1.msra.mxu0 0.0
        %899 = vmatprep.subr.mxu0 0.0
        %900 = vmatpush1.msra.mxu0 0.0
        %901 = vmatprep.subr.mxu0 0.0
        %902 = vmatpush1.msra.mxu0 0.0
        %903 = vmatprep.subr.mxu0 0.0
        %904 = vmatpush1.msra.mxu0 0.0
        %905 = vmatprep.subr.mxu0 0.0
        %906 = vmatpush1.msra.mxu0 0.0
        %907 = vmatprep.subr.mxu0 0.0
        %908 = vmatpush1.msra.mxu0 0.0
        %909 = vmatprep.subr.mxu0 0.0
        %910 = vmatpush1.msra.mxu0 0.0
        %911 = vmatprep.subr.mxu0 0.0
        %912 = vmatpush1.msra.mxu0 0.0
        %913 = vmatprep.mubr.f32.mxu0 0.0
        %914 = vmatmul.mubr.f32.gmra.mrb[0].mxu0 %v607
        %v915 = vpop.f32.mrb[0].mxu0
        %v916 = vadd.f32 %v771, %v915
        %v917 = vpop.f32.mrb[0].mxu0
        %918 = vmatprep.mubr.f32.mxu0 0.0
        %919 = vmatmul.mubr.f32.gmra.mrb[0].mxu0 %v608
        %v920 = vpop.f32.mrb[0].mxu0
        %v921 = vadd.f32 %v776, %v920
        %v922 = vpop.f32.mrb[0].mxu0
        %923 = vmatprep.mubr.f32.mxu0 0.0
        %924 = vmatmul.mubr.f32.gmra.mrb[0].mxu0 %v609
        %v925 = vpop.f32.mrb[0].mxu0
        %v926 = vadd.f32 %v781, %v925
        %v927 = vpop.f32.mrb[0].mxu0
        %928 = vmatprep.mubr.f32.mxu0 0.0
        %929 = vmatmul.mubr.f32.gmra.mrb[0].mxu0 %v610
        %v930 = vpop.f32.mrb[0].mxu0
        %v931 = vadd.f32 %v786, %v930
        %v932 = vpop.f32.mrb[0].mxu0
        %933 = vmatprep.mubr.f32.mxu0 0.0
        %934 = vmatmul.mubr.f32.gmra.mrb[0].mxu0 %v611
        %v935 = vpop.f32.mrb[0].mxu0
        %v936 = vadd.f32 %v791, %v935
        %v937 = vpop.f32.mrb[0].mxu0
        %938 = vmatprep.mubr.f32.mxu0 0.0
        %939 = vmatmul.mubr.f32.gmra.mrb[0].mxu0 %v612
        %v940 = vpop.f32.mrb[0].mxu0
        %v941 = vadd.f32 %v796, %v940
        %v942 = vpop.f32.mrb[0].mxu0
        %943 = vmatprep.mubr.f32.mxu0 0.0
        %944 = vmatmul.mubr.f32.gmra.mrb[0].mxu0 %v613
        %v945 = vpop.f32.mrb[0].mxu0
        %v946 = vadd.f32 %v801, %v945
        %v947 = vpop.f32.mrb[0].mxu0
        %948 = vmatprep.mubr.f32.mxu0 0.0
        %949 = vmatmul.mubr.f32.gmra.mrb[0].mxu0 %v614
        %v950 = vpop.f32.mrb[0].mxu0
        %v951 = vadd.f32 %v806, %v950
        %v952 = vpop.f32.mrb[0].mxu0
        %953 = vmatprep.mubr.f32.mxu0 0.0
        %954 = vmatmul.mubr.f32.gmra.mrb[0].mxu0 %v615
        %v955 = vpop.f32.mrb[0].mxu0
        %v956 = vadd.f32 %v811, %v955
        %v957 = vpop.f32.mrb[0].mxu0
        %958 = vmatprep.mubr.f32.mxu0 0.0
        %959 = vmatmul.mubr.f32.gmra.mrb[0].mxu0 %v616
        %v960 = vpop.f32.mrb[0].mxu0
        %v961 = vadd.f32 %v816, %v960
        %v962 = vpop.f32.mrb[0].mxu0
        %963 = vmatprep.mubr.f32.mxu0 0.0
        %964 = vmatmul.mubr.f32.gmra.mrb[0].mxu0 %v617
        %v965 = vpop.f32.mrb[0].mxu0
        %v966 = vadd.f32 %v821, %v965
        %v967 = vpop.f32.mrb[0].mxu0
        %968 = vmatprep.mubr.f32.mxu0 0.0
        %969 = vmatmul.mubr.f32.gmra.mrb[0].mxu0 %v618
        %v970 = vpop.f32.mrb[0].mxu0
        %v971 = vadd.f32 %v826, %v970
        %v972 = vpop.f32.mrb[0].mxu0
        %973 = vmatprep.mubr.f32.mxu0 0.0
        %974 = vmatmul.mubr.f32.gmra.mrb[0].mxu0 %v619
        %v975 = vpop.f32.mrb[0].mxu0
        %v976 = vadd.f32 %v831, %v975
        %v977 = vpop.f32.mrb[0].mxu0
        %978 = vmatprep.mubr.f32.mxu0 0.0
        %979 = vmatmul.mubr.f32.gmra.mrb[0].mxu0 %v620
        %v980 = vpop.f32.mrb[0].mxu0
        %v981 = vadd.f32 %v836, %v980
        %v982 = vpop.f32.mrb[0].mxu0
        %983 = vmatprep.mubr.f32.mxu0 0.0
        %984 = vmatmul.mubr.f32.gmra.mrb[0].mxu0 %v621
        %v985 = vpop.f32.mrb[0].mxu0
        %v986 = vadd.f32 %v841, %v985
        %v987 = vpop.f32.mrb[0].mxu0
        %988 = vmatprep.mubr.f32.mxu0 0.0
        %989 = vmatmul.mubr.f32.gmra.mrb[0].mxu0 %v622
        %v990 = vpop.f32.mrb[0].mxu0
        %v991 = vadd.f32 %v846, %v990
        %v992 = vpop.f32.mrb[0].mxu0
        %993 = vdwg.mxu0
        %s994 = scalar_lea.vmem [#allocation4], 256
        %v995 = vld [vmem:[%s994] sm:$0xff]
        %v996 = vld [vmem:[%s994 + $0x8] sm:$0xff]
        %v997 = vld [vmem:[%s994 + $0x10] sm:$0xff]
        %v998 = vld [vmem:[%s994 + $0x18] sm:$0xff]
        %v999 = vld [vmem:[%s994 + $0x20] sm:$0xff]
        %v1000 = vld [vmem:[%s994 + $0x28] sm:$0xff]
        %v1001 = vld [vmem:[%s994 + $0x30] sm:$0xff]
        %v1002 = vld [vmem:[%s994 + $0x38] sm:$0xff]
        %v1003 = vld [vmem:[%s994 + $0x40] sm:$0xff]
        %v1004 = vld [vmem:[%s994 + $0x48] sm:$0xff]
        %v1005 = vld [vmem:[%s994 + $0x50] sm:$0xff]
        %v1006 = vld [vmem:[%s994 + $0x58] sm:$0xff]
        %v1007 = vld [vmem:[%s994 + $0x60] sm:$0xff]
        %v1008 = vld [vmem:[%s994 + $0x68] sm:$0xff]
        %v1009 = vld [vmem:[%s994 + $0x70] sm:$0xff]
        %v1010 = vld [vmem:[%s994 + $0x78] sm:$0xff]
        %1011 = vmatprep.subr.mxu0 0.0
        %1012 = vmatpush1.msra.mxu0 %v995
        %1013 = vmatprep.subr.mxu0 0.0
        %1014 = vmatpush1.msra.mxu0 %v996
        %1015 = vmatprep.subr.mxu0 0.0
        %1016 = vmatpush1.msra.mxu0 %v997
        %1017 = vmatprep.subr.mxu0 0.0
        %1018 = vmatpush1.msra.mxu0 %v998
        %1019 = vmatprep.subr.mxu0 0.0
        %1020 = vmatpush1.msra.mxu0 %v999
        %1021 = vmatprep.subr.mxu0 0.0
        %1022 = vmatpush1.msra.mxu0 %v1000
        %1023 = vmatprep.subr.mxu0 0.0
        %1024 = vmatpush1.msra.mxu0 %v1001
        %1025 = vmatprep.subr.mxu0 0.0
        %1026 = vmatpush1.msra.mxu0 %v1002
        %1027 = vmatprep.subr.mxu0 0.0
        %1028 = vmatpush1.msra.mxu0 %v1003
        %1029 = vmatprep.subr.mxu0 0.0
        %1030 = vmatpush1.msra.mxu0 %v1004
        %1031 = vmatprep.subr.mxu0 0.0
        %1032 = vmatpush1.msra.mxu0 %v1005
        %1033 = vmatprep.subr.mxu0 0.0
        %1034 = vmatpush1.msra.mxu0 %v1006
        %1035 = vmatprep.subr.mxu0 0.0
        %1036 = vmatpush1.msra.mxu0 %v1007
        %1037 = vmatprep.subr.mxu0 0.0
        %1038 = vmatpush1.msra.mxu0 %v1008
        %1039 = vmatprep.subr.mxu0 0.0
        %1040 = vmatpush1.msra.mxu0 %v1009
        %1041 = vmatprep.subr.mxu0 0.0
        %1042 = vmatpush1.msra.mxu0 %v1010
        %1043 = vmatprep.subr.mxu0 0.0
        %1044 = vmatpush1.msra.mxu0 0.0
        %1045 = vmatprep.subr.mxu0 0.0
        %1046 = vmatpush1.msra.mxu0 0.0
        %1047 = vmatprep.subr.mxu0 0.0
        %1048 = vmatpush1.msra.mxu0 0.0
        %1049 = vmatprep.subr.mxu0 0.0
        %1050 = vmatpush1.msra.mxu0 0.0
        %1051 = vmatprep.subr.mxu0 0.0
        %1052 = vmatpush1.msra.mxu0 0.0
        %1053 = vmatprep.subr.mxu0 0.0
        %1054 = vmatpush1.msra.mxu0 0.0
        %1055 = vmatprep.subr.mxu0 0.0
        %1056 = vmatpush1.msra.mxu0 0.0
        %1057 = vmatprep.subr.mxu0 0.0
        %1058 = vmatpush1.msra.mxu0 0.0
        %1059 = vmatprep.subr.mxu0 0.0
        %1060 = vmatpush1.msra.mxu0 0.0
        %1061 = vmatprep.subr.mxu0 0.0
        %1062 = vmatpush1.msra.mxu0 0.0
        %1063 = vmatprep.subr.mxu0 0.0
        %1064 = vmatpush1.msra.mxu0 0.0
        %1065 = vmatprep.subr.mxu0 0.0
        %1066 = vmatpush1.msra.mxu0 0.0
        %1067 = vmatprep.subr.mxu0 0.0
        %1068 = vmatpush1.msra.mxu0 0.0
        %1069 = vmatprep.subr.mxu0 0.0
        %1070 = vmatpush1.msra.mxu0 0.0
        %1071 = vmatprep.subr.mxu0 0.0
        %1072 = vmatpush1.msra.mxu0 0.0
        %1073 = vmatprep.subr.mxu0 0.0
        %1074 = vmatpush1.msra.mxu0 0.0
        %1075 = vmatprep.mubr.f32.mxu0 0.0
        %1076 = vmatmul.mubr.f32.gmra.mrb[0].mxu0 %v655
        %v1077 = vpop.f32.mrb[0].mxu0
        %v1078 = vadd.f32 0.0, %v1077
        %v1079 = vpop.f32.mrb[0].mxu0
        %1080 = vmatprep.mubr.f32.mxu0 0.0
        %1081 = vmatmul.mubr.f32.gmra.mrb[0].mxu0 %v656
        %v1082 = vpop.f32.mrb[0].mxu0
        %v1083 = vadd.f32 0.0, %v1082
        %v1084 = vpop.f32.mrb[0].mxu0
        %1085 = vmatprep.mubr.f32.mxu0 0.0
        %1086 = vmatmul.mubr.f32.gmra.mrb[0].mxu0 %v657
        %v1087 = vpop.f32.mrb[0].mxu0
        %v1088 = vadd.f32 0.0, %v1087
        %v1089 = vpop.f32.mrb[0].mxu0
        %1090 = vmatprep.mubr.f32.mxu0 0.0
        %1091 = vmatmul.mubr.f32.gmra.mrb[0].mxu0 %v658
        %v1092 = vpop.f32.mrb[0].mxu0
        %v1093 = vadd.f32 0.0, %v1092
        %v1094 = vpop.f32.mrb[0].mxu0
        %1095 = vmatprep.mubr.f32.mxu0 0.0
        %1096 = vmatmul.mubr.f32.gmra.mrb[0].mxu0 %v659
        %v1097 = vpop.f32.mrb[0].mxu0
        %v1098 = vadd.f32 0.0, %v1097
        %v1099 = vpop.f32.mrb[0].mxu0
        %1100 = vmatprep.mubr.f32.mxu0 0.0
        %1101 = vmatmul.mubr.f32.gmra.mrb[0].mxu0 %v660
        %v1102 = vpop.f32.mrb[0].mxu0
        %v1103 = vadd.f32 0.0, %v1102
        %v1104 = vpop.f32.mrb[0].mxu0
        %1105 = vmatprep.mubr.f32.mxu0 0.0
        %1106 = vmatmul.mubr.f32.gmra.mrb[0].mxu0 %v661
        %v1107 = vpop.f32.mrb[0].mxu0
        %v1108 = vadd.f32 0.0, %v1107
        %v1109 = vpop.f32.mrb[0].mxu0
        %1110 = vmatprep.mubr.f32.mxu0 0.0
        %1111 = vmatmul.mubr.f32.gmra.mrb[0].mxu0 %v662
        %v1112 = vpop.f32.mrb[0].mxu0
        %v1113 = vadd.f32 0.0, %v1112
        %v1114 = vpop.f32.mrb[0].mxu0
        %1115 = vmatprep.mubr.f32.mxu0 0.0
        %1116 = vmatmul.mubr.f32.gmra.mrb[0].mxu0 %v663
        %v1117 = vpop.f32.mrb[0].mxu0
        %v1118 = vadd.f32 0.0, %v1117
        %v1119 = vpop.f32.mrb[0].mxu0
        %1120 = vmatprep.mubr.f32.mxu0 0.0
        %1121 = vmatmul.mubr.f32.gmra.mrb[0].mxu0 %v664
        %v1122 = vpop.f32.mrb[0].mxu0
        %v1123 = vadd.f32 0.0, %v1122
        %v1124 = vpop.f32.mrb[0].mxu0
        %1125 = vmatprep.mubr.f32.mxu0 0.0
        %1126 = vmatmul.mubr.f32.gmra.mrb[0].mxu0 %v665
        %v1127 = vpop.f32.mrb[0].mxu0
        %v1128 = vadd.f32 0.0, %v1127
        %v1129 = vpop.f32.mrb[0].mxu0
        %1130 = vmatprep.mubr.f32.mxu0 0.0
        %1131 = vmatmul.mubr.f32.gmra.mrb[0].mxu0 %v666
        %v1132 = vpop.f32.mrb[0].mxu0
        %v1133 = vadd.f32 0.0, %v1132
        %v1134 = vpop.f32.mrb[0].mxu0
        %1135 = vmatprep.mubr.f32.mxu0 0.0
        %1136 = vmatmul.mubr.f32.gmra.mrb[0].mxu0 %v667
        %v1137 = vpop.f32.mrb[0].mxu0
        %v1138 = vadd.f32 0.0, %v1137
        %v1139 = vpop.f32.mrb[0].mxu0
        %1140 = vmatprep.mubr.f32.mxu0 0.0
        %1141 = vmatmul.mubr.f32.gmra.mrb[0].mxu0 %v668
        %v1142 = vpop.f32.mrb[0].mxu0
        %v1143 = vadd.f32 0.0, %v1142
        %v1144 = vpop.f32.mrb[0].mxu0
        %1145 = vmatprep.mubr.f32.mxu0 0.0
        %1146 = vmatmul.mubr.f32.gmra.mrb[0].mxu0 %v669
        %v1147 = vpop.f32.mrb[0].mxu0
        %v1148 = vadd.f32 0.0, %v1147
        %v1149 = vpop.f32.mrb[0].mxu0
        %1150 = vmatprep.mubr.f32.mxu0 0.0
        %1151 = vmatmul.mubr.f32.gmra.mrb[0].mxu0 %v670
        %v1152 = vpop.f32.mrb[0].mxu0
        %v1153 = vadd.f32 0.0, %v1152
        %v1154 = vpop.f32.mrb[0].mxu0
        %1155 = vdwg.mxu0
        %v1156 = vadd.f32 %v916, %v1078
        %v1157 = vadd.f32 %v921, %v1083
        %v1158 = vadd.f32 %v926, %v1088
        %v1159 = vadd.f32 %v931, %v1093
        %v1160 = vadd.f32 %v936, %v1098
        %v1161 = vadd.f32 %v941, %v1103
        %v1162 = vadd.f32 %v946, %v1108
        %v1163 = vadd.f32 %v951, %v1113
        %v1164 = vadd.f32 %v956, %v1118
        %v1165 = vadd.f32 %v961, %v1123
        %v1166 = vadd.f32 %v966, %v1128
        %v1167 = vadd.f32 %v971, %v1133
        %v1168 = vadd.f32 %v976, %v1138
        %v1169 = vadd.f32 %v981, %v1143
        %v1170 = vadd.f32 %v986, %v1148
        %v1171 = vadd.f32 %v991, %v1153
        %v1172 = vld [vmem:[%s242 + $0x20] sm:$0xff]
        %v1173 = vld [vmem:[%s242 + $0x28] sm:$0xff]
        %v1174 = vld [vmem:[%s242 + $0x30] sm:$0xff]
        %v1175 = vld [vmem:[%s242 + $0x38] sm:$0xff]
        %v1176 = vld [vmem:[%s242 + $0x40] sm:$0xff]
        %v1177 = vld [vmem:[%s242 + $0x48] sm:$0xff]
        %v1178 = vld [vmem:[%s242 + $0x50] sm:$0xff]
        %v1179 = vld [vmem:[%s242 + $0x58] sm:$0xff]
        %v1180 = vld [vmem:[%s242 + $0x60] sm:$0xff]
        %v1181 = vld [vmem:[%s242 + $0x68] sm:$0xff]
        %v1182 = vld [vmem:[%s242 + $0x70] sm:$0xff]
        %v1183 = vld [vmem:[%s242 + $0x78] sm:$0xff]
        %v1184 = vld [vmem:[%s242 + $0x80] sm:$0xff]
        %v1185 = vld [vmem:[%s242 + $0x88] sm:$0xff]
        %v1186 = vld [vmem:[%s242 + $0x90] sm:$0xff]
        %v1187 = vld [vmem:[%s242 + $0x98] sm:$0xff]
        %v1188 = vld [vmem:[%s242 + $0x1f] sm:$0xff]
        %v1189 = vld [vmem:[%s242 + $0x27] sm:$0xff]
        %v1190 = vld [vmem:[%s242 + $0x2f] sm:$0xff]
        %v1191 = vld [vmem:[%s242 + $0x37] sm:$0xff]
        %v1192 = vld [vmem:[%s242 + $0x3f] sm:$0xff]
        %v1193 = vld [vmem:[%s242 + $0x47] sm:$0xff]
        %v1194 = vld [vmem:[%s242 + $0x4f] sm:$0xff]
        %v1195 = vld [vmem:[%s242 + $0x57] sm:$0xff]
        %v1196 = vld [vmem:[%s242 + $0x5f] sm:$0xff]
        %v1197 = vld [vmem:[%s242 + $0x67] sm:$0xff]
        %v1198 = vld [vmem:[%s242 + $0x6f] sm:$0xff]
        %v1199 = vld [vmem:[%s242 + $0x77] sm:$0xff]
        %v1200 = vld [vmem:[%s242 + $0x7f] sm:$0xff]
        %v1201 = vld [vmem:[%s242 + $0x87] sm:$0xff]
        %v1202 = vld [vmem:[%s242 + $0x8f] sm:$0xff]
        %v1203 = vld [vmem:[%s242 + $0x97] sm:$0xff]
        %v1204 = vld [vmem:[%s242 + $0x21] sm:$0xff]
        %v1205 = vld [vmem:[%s242 + $0x29] sm:$0xff]
        %v1206 = vld [vmem:[%s242 + $0x31] sm:$0xff]
        %v1207 = vld [vmem:[%s242 + $0x39] sm:$0xff]
        %v1208 = vld [vmem:[%s242 + $0x41] sm:$0xff]
        %v1209 = vld [vmem:[%s242 + $0x49] sm:$0xff]
        %v1210 = vld [vmem:[%s242 + $0x51] sm:$0xff]
        %v1211 = vld [vmem:[%s242 + $0x59] sm:$0xff]
        %v1212 = vld [vmem:[%s242 + $0x61] sm:$0xff]
        %v1213 = vld [vmem:[%s242 + $0x69] sm:$0xff]
        %v1214 = vld [vmem:[%s242 + $0x71] sm:$0xff]
        %v1215 = vld [vmem:[%s242 + $0x79] sm:$0xff]
        %v1216 = vld [vmem:[%s242 + $0x81] sm:$0xff]
        %v1217 = vld [vmem:[%s242 + $0x89] sm:$0xff]
        %v1218 = vld [vmem:[%s242 + $0x91] sm:$0xff]
        %v1219 = vld [vmem:[%s242 + $0x99] sm:$0xff]
        %v1220 = vsel %vm591, %v1188, 0.0
        %v1221 = vsel %vm592, %v1189, 0.0
        %v1222 = vsel %vm593, %v1190, 0.0
        %v1223 = vsel %vm594, %v1191, 0.0
        %v1224 = vsel %vm595, %v1192, 0.0
        %v1225 = vsel %vm596, %v1193, 0.0
        %v1226 = vsel %vm597, %v1194, 0.0
        %v1227 = vsel %vm598, %v1195, 0.0
        %v1228 = vsel %vm599, %v1196, 0.0
        %v1229 = vsel %vm600, %v1197, 0.0
        %v1230 = vsel %vm601, %v1198, 0.0
        %v1231 = vsel %vm602, %v1199, 0.0
        %v1232 = vsel %vm603, %v1200, 0.0
        %v1233 = vsel %vm604, %v1201, 0.0
        %v1234 = vsel %vm605, %v1202, 0.0
        %v1235 = vsel %vm606, %v1203, 0.0
        %v1236 = vsel %vm639, %v1204, 0.0
        %v1237 = vsel %vm640, %v1205, 0.0
        %v1238 = vsel %vm641, %v1206, 0.0
        %v1239 = vsel %vm642, %v1207, 0.0
        %v1240 = vsel %vm643, %v1208, 0.0
        %v1241 = vsel %vm644, %v1209, 0.0
        %v1242 = vsel %vm645, %v1210, 0.0
        %v1243 = vsel %vm646, %v1211, 0.0
        %v1244 = vsel %vm647, %v1212, 0.0
        %v1245 = vsel %vm648, %v1213, 0.0
        %v1246 = vsel %vm649, %v1214, 0.0
        %v1247 = vsel %vm650, %v1215, 0.0
        %v1248 = vsel %vm651, %v1216, 0.0
        %v1249 = vsel %vm652, %v1217, 0.0
        %v1250 = vsel %vm653, %v1218, 0.0
        %v1251 = vsel %vm654, %v1219, 0.0
        %s1252 = scalar_lea.vmem [#allocation4], 384
        %v1253 = vld [vmem:[%s1252] sm:$0xff]
        %v1254 = vld [vmem:[%s1252 + $0x8] sm:$0xff]
        %v1255 = vld [vmem:[%s1252 + $0x10] sm:$0xff]
        %v1256 = vld [vmem:[%s1252 + $0x18] sm:$0xff]
        %v1257 = vld [vmem:[%s1252 + $0x20] sm:$0xff]
        %v1258 = vld [vmem:[%s1252 + $0x28] sm:$0xff]
        %v1259 = vld [vmem:[%s1252 + $0x30] sm:$0xff]
        %v1260 = vld [vmem:[%s1252 + $0x38] sm:$0xff]
        %v1261 = vld [vmem:[%s1252 + $0x40] sm:$0xff]
        %v1262 = vld [vmem:[%s1252 + $0x48] sm:$0xff]
        %v1263 = vld [vmem:[%s1252 + $0x50] sm:$0xff]
        %v1264 = vld [vmem:[%s1252 + $0x58] sm:$0xff]
        %v1265 = vld [vmem:[%s1252 + $0x60] sm:$0xff]
        %v1266 = vld [vmem:[%s1252 + $0x68] sm:$0xff]
        %v1267 = vld [vmem:[%s1252 + $0x70] sm:$0xff]
        %v1268 = vld [vmem:[%s1252 + $0x78] sm:$0xff]
        %1269 = vmatprep.subr.mxu0 0.0
        %1270 = vmatpush1.msra.mxu0 %v1253
        %1271 = vmatprep.subr.mxu0 0.0
        %1272 = vmatpush1.msra.mxu0 %v1254
        %1273 = vmatprep.subr.mxu0 0.0
        %1274 = vmatpush1.msra.mxu0 %v1255
        %1275 = vmatprep.subr.mxu0 0.0
        %1276 = vmatpush1.msra.mxu0 %v1256
        %1277 = vmatprep.subr.mxu0 0.0
        %1278 = vmatpush1.msra.mxu0 %v1257
        %1279 = vmatprep.subr.mxu0 0.0
        %1280 = vmatpush1.msra.mxu0 %v1258
        %1281 = vmatprep.subr.mxu0 0.0
        %1282 = vmatpush1.msra.mxu0 %v1259
        %1283 = vmatprep.subr.mxu0 0.0
        %1284 = vmatpush1.msra.mxu0 %v1260
        %1285 = vmatprep.subr.mxu0 0.0
        %1286 = vmatpush1.msra.mxu0 %v1261
        %1287 = vmatprep.subr.mxu0 0.0
        %1288 = vmatpush1.msra.mxu0 %v1262
        %1289 = vmatprep.subr.mxu0 0.0
        %1290 = vmatpush1.msra.mxu0 %v1263
        %1291 = vmatprep.subr.mxu0 0.0
        %1292 = vmatpush1.msra.mxu0 %v1264
        %1293 = vmatprep.subr.mxu0 0.0
        %1294 = vmatpush1.msra.mxu0 %v1265
        %1295 = vmatprep.subr.mxu0 0.0
        %1296 = vmatpush1.msra.mxu0 %v1266
        %1297 = vmatprep.subr.mxu0 0.0
        %1298 = vmatpush1.msra.mxu0 %v1267
        %1299 = vmatprep.subr.mxu0 0.0
        %1300 = vmatpush1.msra.mxu0 %v1268
        %1301 = vmatprep.subr.mxu0 0.0
        %1302 = vmatpush1.msra.mxu0 0.0
        %1303 = vmatprep.subr.mxu0 0.0
        %1304 = vmatpush1.msra.mxu0 0.0
        %1305 = vmatprep.subr.mxu0 0.0
        %1306 = vmatpush1.msra.mxu0 0.0
        %1307 = vmatprep.subr.mxu0 0.0
        %1308 = vmatpush1.msra.mxu0 0.0
        %1309 = vmatprep.subr.mxu0 0.0
        %1310 = vmatpush1.msra.mxu0 0.0
        %1311 = vmatprep.subr.mxu0 0.0
        %1312 = vmatpush1.msra.mxu0 0.0
        %1313 = vmatprep.subr.mxu0 0.0
        %1314 = vmatpush1.msra.mxu0 0.0
        %1315 = vmatprep.subr.mxu0 0.0
        %1316 = vmatpush1.msra.mxu0 0.0
        %1317 = vmatprep.subr.mxu0 0.0
        %1318 = vmatpush1.msra.mxu0 0.0
        %1319 = vmatprep.subr.mxu0 0.0
        %1320 = vmatpush1.msra.mxu0 0.0
        %1321 = vmatprep.subr.mxu0 0.0
        %1322 = vmatpush1.msra.mxu0 0.0
        %1323 = vmatprep.subr.mxu0 0.0
        %1324 = vmatpush1.msra.mxu0 0.0
        %1325 = vmatprep.subr.mxu0 0.0
        %1326 = vmatpush1.msra.mxu0 0.0
        %1327 = vmatprep.subr.mxu0 0.0
        %1328 = vmatpush1.msra.mxu0 0.0
        %1329 = vmatprep.subr.mxu0 0.0
        %1330 = vmatpush1.msra.mxu0 0.0
        %1331 = vmatprep.subr.mxu0 0.0
        %1332 = vmatpush1.msra.mxu0 0.0
        %1333 = vmatprep.mubr.f32.mxu0 0.0
        %1334 = vmatmul.mubr.f32.gmra.mrb[0].mxu0 %v1220
        %v1335 = vpop.f32.mrb[0].mxu0
        %v1336 = vadd.f32 0.0, %v1335
        %v1337 = vpop.f32.mrb[0].mxu0
        %1338 = vmatprep.mubr.f32.mxu0 0.0
        %1339 = vmatmul.mubr.f32.gmra.mrb[0].mxu0 %v1221
        %v1340 = vpop.f32.mrb[0].mxu0
        %v1341 = vadd.f32 0.0, %v1340
        %v1342 = vpop.f32.mrb[0].mxu0
        %1343 = vmatprep.mubr.f32.mxu0 0.0
        %1344 = vmatmul.mubr.f32.gmra.mrb[0].mxu0 %v1222
        %v1345 = vpop.f32.mrb[0].mxu0
        %v1346 = vadd.f32 0.0, %v1345
        %v1347 = vpop.f32.mrb[0].mxu0
        %1348 = vmatprep.mubr.f32.mxu0 0.0
        %1349 = vmatmul.mubr.f32.gmra.mrb[0].mxu0 %v1223
        %v1350 = vpop.f32.mrb[0].mxu0
        %v1351 = vadd.f32 0.0, %v1350
        %v1352 = vpop.f32.mrb[0].mxu0
        %1353 = vmatprep.mubr.f32.mxu0 0.0
        %1354 = vmatmul.mubr.f32.gmra.mrb[0].mxu0 %v1224
        %v1355 = vpop.f32.mrb[0].mxu0
        %v1356 = vadd.f32 0.0, %v1355
        %v1357 = vpop.f32.mrb[0].mxu0
        %1358 = vmatprep.mubr.f32.mxu0 0.0
        %1359 = vmatmul.mubr.f32.gmra.mrb[0].mxu0 %v1225
        %v1360 = vpop.f32.mrb[0].mxu0
        %v1361 = vadd.f32 0.0, %v1360
        %v1362 = vpop.f32.mrb[0].mxu0
        %1363 = vmatprep.mubr.f32.mxu0 0.0
        %1364 = vmatmul.mubr.f32.gmra.mrb[0].mxu0 %v1226
        %v1365 = vpop.f32.mrb[0].mxu0
        %v1366 = vadd.f32 0.0, %v1365
        %v1367 = vpop.f32.mrb[0].mxu0
        %1368 = vmatprep.mubr.f32.mxu0 0.0
        %1369 = vmatmul.mubr.f32.gmra.mrb[0].mxu0 %v1227
        %v1370 = vpop.f32.mrb[0].mxu0
        %v1371 = vadd.f32 0.0, %v1370
        %v1372 = vpop.f32.mrb[0].mxu0
        %1373 = vmatprep.mubr.f32.mxu0 0.0
        %1374 = vmatmul.mubr.f32.gmra.mrb[0].mxu0 %v1228
        %v1375 = vpop.f32.mrb[0].mxu0
        %v1376 = vadd.f32 0.0, %v1375
        %v1377 = vpop.f32.mrb[0].mxu0
        %1378 = vmatprep.mubr.f32.mxu0 0.0
        %1379 = vmatmul.mubr.f32.gmra.mrb[0].mxu0 %v1229
        %v1380 = vpop.f32.mrb[0].mxu0
        %v1381 = vadd.f32 0.0, %v1380
        %v1382 = vpop.f32.mrb[0].mxu0
        %1383 = vmatprep.mubr.f32.mxu0 0.0
        %1384 = vmatmul.mubr.f32.gmra.mrb[0].mxu0 %v1230
        %v1385 = vpop.f32.mrb[0].mxu0
        %v1386 = vadd.f32 0.0, %v1385
        %v1387 = vpop.f32.mrb[0].mxu0
        %1388 = vmatprep.mubr.f32.mxu0 0.0
        %1389 = vmatmul.mubr.f32.gmra.mrb[0].mxu0 %v1231
        %v1390 = vpop.f32.mrb[0].mxu0
        %v1391 = vadd.f32 0.0, %v1390
        %v1392 = vpop.f32.mrb[0].mxu0
        %1393 = vmatprep.mubr.f32.mxu0 0.0
        %1394 = vmatmul.mubr.f32.gmra.mrb[0].mxu0 %v1232
        %v1395 = vpop.f32.mrb[0].mxu0
        %v1396 = vadd.f32 0.0, %v1395
        %v1397 = vpop.f32.mrb[0].mxu0
        %1398 = vmatprep.mubr.f32.mxu0 0.0
        %1399 = vmatmul.mubr.f32.gmra.mrb[0].mxu0 %v1233
        %v1400 = vpop.f32.mrb[0].mxu0
        %v1401 = vadd.f32 0.0, %v1400
        %v1402 = vpop.f32.mrb[0].mxu0
        %1403 = vmatprep.mubr.f32.mxu0 0.0
        %1404 = vmatmul.mubr.f32.gmra.mrb[0].mxu0 %v1234
        %v1405 = vpop.f32.mrb[0].mxu0
        %v1406 = vadd.f32 0.0, %v1405
        %v1407 = vpop.f32.mrb[0].mxu0
        %1408 = vmatprep.mubr.f32.mxu0 0.0
        %1409 = vmatmul.mubr.f32.gmra.mrb[0].mxu0 %v1235
        %v1410 = vpop.f32.mrb[0].mxu0
        %v1411 = vadd.f32 0.0, %v1410
        %v1412 = vpop.f32.mrb[0].mxu0
        %1413 = vdwg.mxu0
        %v1414 = vadd.f32 %v1156, %v1336
        %v1415 = vadd.f32 %v1157, %v1341
        %v1416 = vadd.f32 %v1158, %v1346
        %v1417 = vadd.f32 %v1159, %v1351
        %v1418 = vadd.f32 %v1160, %v1356
        %v1419 = vadd.f32 %v1161, %v1361
        %v1420 = vadd.f32 %v1162, %v1366
        %v1421 = vadd.f32 %v1163, %v1371
        %v1422 = vadd.f32 %v1164, %v1376
        %v1423 = vadd.f32 %v1165, %v1381
        %v1424 = vadd.f32 %v1166, %v1386
        %v1425 = vadd.f32 %v1167, %v1391
        %v1426 = vadd.f32 %v1168, %v1396
        %v1427 = vadd.f32 %v1169, %v1401
        %v1428 = vadd.f32 %v1170, %v1406
        %v1429 = vadd.f32 %v1171, %v1411
        %s1430 = scalar_lea.vmem [#allocation4], 512
        %v1431 = vld [vmem:[%s1430] sm:$0xff]
        %v1432 = vld [vmem:[%s1430 + $0x8] sm:$0xff]
        %v1433 = vld [vmem:[%s1430 + $0x10] sm:$0xff]
        %v1434 = vld [vmem:[%s1430 + $0x18] sm:$0xff]
        %v1435 = vld [vmem:[%s1430 + $0x20] sm:$0xff]
        %v1436 = vld [vmem:[%s1430 + $0x28] sm:$0xff]
        %v1437 = vld [vmem:[%s1430 + $0x30] sm:$0xff]
        %v1438 = vld [vmem:[%s1430 + $0x38] sm:$0xff]
        %v1439 = vld [vmem:[%s1430 + $0x40] sm:$0xff]
        %v1440 = vld [vmem:[%s1430 + $0x48] sm:$0xff]
        %v1441 = vld [vmem:[%s1430 + $0x50] sm:$0xff]
        %v1442 = vld [vmem:[%s1430 + $0x58] sm:$0xff]
        %v1443 = vld [vmem:[%s1430 + $0x60] sm:$0xff]
        %v1444 = vld [vmem:[%s1430 + $0x68] sm:$0xff]
        %v1445 = vld [vmem:[%s1430 + $0x70] sm:$0xff]
        %v1446 = vld [vmem:[%s1430 + $0x78] sm:$0xff]
        %1447 = vmatprep.subr.mxu0 0.0
        %1448 = vmatpush1.msra.mxu0 %v1431
        %1449 = vmatprep.subr.mxu0 0.0
        %1450 = vmatpush1.msra.mxu0 %v1432
        %1451 = vmatprep.subr.mxu0 0.0
        %1452 = vmatpush1.msra.mxu0 %v1433
        %1453 = vmatprep.subr.mxu0 0.0
        %1454 = vmatpush1.msra.mxu0 %v1434
        %1455 = vmatprep.subr.mxu0 0.0
        %1456 = vmatpush1.msra.mxu0 %v1435
        %1457 = vmatprep.subr.mxu0 0.0
        %1458 = vmatpush1.msra.mxu0 %v1436
        %1459 = vmatprep.subr.mxu0 0.0
        %1460 = vmatpush1.msra.mxu0 %v1437
        %1461 = vmatprep.subr.mxu0 0.0
        %1462 = vmatpush1.msra.mxu0 %v1438
        %1463 = vmatprep.subr.mxu0 0.0
        %1464 = vmatpush1.msra.mxu0 %v1439
        %1465 = vmatprep.subr.mxu0 0.0
        %1466 = vmatpush1.msra.mxu0 %v1440
        %1467 = vmatprep.subr.mxu0 0.0
        %1468 = vmatpush1.msra.mxu0 %v1441
        %1469 = vmatprep.subr.mxu0 0.0
        %1470 = vmatpush1.msra.mxu0 %v1442
        %1471 = vmatprep.subr.mxu0 0.0
        %1472 = vmatpush1.msra.mxu0 %v1443
        %1473 = vmatprep.subr.mxu0 0.0
        %1474 = vmatpush1.msra.mxu0 %v1444
        %1475 = vmatprep.subr.mxu0 0.0
        %1476 = vmatpush1.msra.mxu0 %v1445
        %1477 = vmatprep.subr.mxu0 0.0
        %1478 = vmatpush1.msra.mxu0 %v1446
        %1479 = vmatprep.subr.mxu0 0.0
        %1480 = vmatpush1.msra.mxu0 0.0
        %1481 = vmatprep.subr.mxu0 0.0
        %1482 = vmatpush1.msra.mxu0 0.0
        %1483 = vmatprep.subr.mxu0 0.0
        %1484 = vmatpush1.msra.mxu0 0.0
        %1485 = vmatprep.subr.mxu0 0.0
        %1486 = vmatpush1.msra.mxu0 0.0
        %1487 = vmatprep.subr.mxu0 0.0
        %1488 = vmatpush1.msra.mxu0 0.0
        %1489 = vmatprep.subr.mxu0 0.0
        %1490 = vmatpush1.msra.mxu0 0.0
        %1491 = vmatprep.subr.mxu0 0.0
        %1492 = vmatpush1.msra.mxu0 0.0
        %1493 = vmatprep.subr.mxu0 0.0
        %1494 = vmatpush1.msra.mxu0 0.0
        %1495 = vmatprep.subr.mxu0 0.0
        %1496 = vmatpush1.msra.mxu0 0.0
        %1497 = vmatprep.subr.mxu0 0.0
        %1498 = vmatpush1.msra.mxu0 0.0
        %1499 = vmatprep.subr.mxu0 0.0
        %1500 = vmatpush1.msra.mxu0 0.0
        %1501 = vmatprep.subr.mxu0 0.0
        %1502 = vmatpush1.msra.mxu0 0.0
        %1503 = vmatprep.subr.mxu0 0.0
        %1504 = vmatpush1.msra.mxu0 0.0
        %1505 = vmatprep.subr.mxu0 0.0
        %1506 = vmatpush1.msra.mxu0 0.0
        %1507 = vmatprep.subr.mxu0 0.0
        %1508 = vmatpush1.msra.mxu0 0.0
        %1509 = vmatprep.subr.mxu0 0.0
        %1510 = vmatpush1.msra.mxu0 0.0
        %1511 = vmatprep.mubr.f32.mxu0 0.0
        %1512 = vmatmul.mubr.f32.gmra.mrb[0].mxu0 %v1172
        %v1513 = vpop.f32.mrb[0].mxu0
        %v1514 = vadd.f32 0.0, %v1513
        %v1515 = vpop.f32.mrb[0].mxu0
        %1516 = vmatprep.mubr.f32.mxu0 0.0
        %1517 = vmatmul.mubr.f32.gmra.mrb[0].mxu0 %v1173
        %v1518 = vpop.f32.mrb[0].mxu0
        %v1519 = vadd.f32 0.0, %v1518
        %v1520 = vpop.f32.mrb[0].mxu0
        %1521 = vmatprep.mubr.f32.mxu0 0.0
        %1522 = vmatmul.mubr.f32.gmra.mrb[0].mxu0 %v1174
        %v1523 = vpop.f32.mrb[0].mxu0
        %v1524 = vadd.f32 0.0, %v1523
        %v1525 = vpop.f32.mrb[0].mxu0
        %1526 = vmatprep.mubr.f32.mxu0 0.0
        %1527 = vmatmul.mubr.f32.gmra.mrb[0].mxu0 %v1175
        %v1528 = vpop.f32.mrb[0].mxu0
        %v1529 = vadd.f32 0.0, %v1528
        %v1530 = vpop.f32.mrb[0].mxu0
        %1531 = vmatprep.mubr.f32.mxu0 0.0
        %1532 = vmatmul.mubr.f32.gmra.mrb[0].mxu0 %v1176
        %v1533 = vpop.f32.mrb[0].mxu0
        %v1534 = vadd.f32 0.0, %v1533
        %v1535 = vpop.f32.mrb[0].mxu0
        %1536 = vmatprep.mubr.f32.mxu0 0.0
        %1537 = vmatmul.mubr.f32.gmra.mrb[0].mxu0 %v1177
        %v1538 = vpop.f32.mrb[0].mxu0
        %v1539 = vadd.f32 0.0, %v1538
        %v1540 = vpop.f32.mrb[0].mxu0
        %1541 = vmatprep.mubr.f32.mxu0 0.0
        %1542 = vmatmul.mubr.f32.gmra.mrb[0].mxu0 %v1178
        %v1543 = vpop.f32.mrb[0].mxu0
        %v1544 = vadd.f32 0.0, %v1543
        %v1545 = vpop.f32.mrb[0].mxu0
        %1546 = vmatprep.mubr.f32.mxu0 0.0
        %1547 = vmatmul.mubr.f32.gmra.mrb[0].mxu0 %v1179
        %v1548 = vpop.f32.mrb[0].mxu0
        %v1549 = vadd.f32 0.0, %v1548
        %v1550 = vpop.f32.mrb[0].mxu0
        %1551 = vmatprep.mubr.f32.mxu0 0.0
        %1552 = vmatmul.mubr.f32.gmra.mrb[0].mxu0 %v1180
        %v1553 = vpop.f32.mrb[0].mxu0
        %v1554 = vadd.f32 0.0, %v1553
        %v1555 = vpop.f32.mrb[0].mxu0
        %1556 = vmatprep.mubr.f32.mxu0 0.0
        %1557 = vmatmul.mubr.f32.gmra.mrb[0].mxu0 %v1181
        %v1558 = vpop.f32.mrb[0].mxu0
        %v1559 = vadd.f32 0.0, %v1558
        %v1560 = vpop.f32.mrb[0].mxu0
        %1561 = vmatprep.mubr.f32.mxu0 0.0
        %1562 = vmatmul.mubr.f32.gmra.mrb[0].mxu0 %v1182
        %v1563 = vpop.f32.mrb[0].mxu0
        %v1564 = vadd.f32 0.0, %v1563
        %v1565 = vpop.f32.mrb[0].mxu0
        %1566 = vmatprep.mubr.f32.mxu0 0.0
        %1567 = vmatmul.mubr.f32.gmra.mrb[0].mxu0 %v1183
        %v1568 = vpop.f32.mrb[0].mxu0
        %v1569 = vadd.f32 0.0, %v1568
        %v1570 = vpop.f32.mrb[0].mxu0
        %1571 = vmatprep.mubr.f32.mxu0 0.0
        %1572 = vmatmul.mubr.f32.gmra.mrb[0].mxu0 %v1184
        %v1573 = vpop.f32.mrb[0].mxu0
        %v1574 = vadd.f32 0.0, %v1573
        %v1575 = vpop.f32.mrb[0].mxu0
        %1576 = vmatprep.mubr.f32.mxu0 0.0
        %1577 = vmatmul.mubr.f32.gmra.mrb[0].mxu0 %v1185
        %v1578 = vpop.f32.mrb[0].mxu0
        %v1579 = vadd.f32 0.0, %v1578
        %v1580 = vpop.f32.mrb[0].mxu0
        %1581 = vmatprep.mubr.f32.mxu0 0.0
        %1582 = vmatmul.mubr.f32.gmra.mrb[0].mxu0 %v1186
        %v1583 = vpop.f32.mrb[0].mxu0
        %v1584 = vadd.f32 0.0, %v1583
        %v1585 = vpop.f32.mrb[0].mxu0
        %1586 = vmatprep.mubr.f32.mxu0 0.0
        %1587 = vmatmul.mubr.f32.gmra.mrb[0].mxu0 %v1187
        %v1588 = vpop.f32.mrb[0].mxu0
        %v1589 = vadd.f32 0.0, %v1588
        %v1590 = vpop.f32.mrb[0].mxu0
        %1591 = vdwg.mxu0
        %v1592 = vadd.f32 %v1414, %v1514
        %v1593 = vadd.f32 %v1415, %v1519
        %v1594 = vadd.f32 %v1416, %v1524
        %v1595 = vadd.f32 %v1417, %v1529
        %v1596 = vadd.f32 %v1418, %v1534
        %v1597 = vadd.f32 %v1419, %v1539
        %v1598 = vadd.f32 %v1420, %v1544
        %v1599 = vadd.f32 %v1421, %v1549
        %v1600 = vadd.f32 %v1422, %v1554
        %v1601 = vadd.f32 %v1423, %v1559
        %v1602 = vadd.f32 %v1424, %v1564
        %v1603 = vadd.f32 %v1425, %v1569
        %v1604 = vadd.f32 %v1426, %v1574
        %v1605 = vadd.f32 %v1427, %v1579
        %v1606 = vadd.f32 %v1428, %v1584
        %v1607 = vadd.f32 %v1429, %v1589
        %s1608 = scalar_lea.vmem [#allocation4], 640
        %v1609 = vld [vmem:[%s1608] sm:$0xff]
        %v1610 = vld [vmem:[%s1608 + $0x8] sm:$0xff]
        %v1611 = vld [vmem:[%s1608 + $0x10] sm:$0xff]
        %v1612 = vld [vmem:[%s1608 + $0x18] sm:$0xff]
        %v1613 = vld [vmem:[%s1608 + $0x20] sm:$0xff]
        %v1614 = vld [vmem:[%s1608 + $0x28] sm:$0xff]
        %v1615 = vld [vmem:[%s1608 + $0x30] sm:$0xff]
        %v1616 = vld [vmem:[%s1608 + $0x38] sm:$0xff]
        %v1617 = vld [vmem:[%s1608 + $0x40] sm:$0xff]
        %v1618 = vld [vmem:[%s1608 + $0x48] sm:$0xff]
        %v1619 = vld [vmem:[%s1608 + $0x50] sm:$0xff]
        %v1620 = vld [vmem:[%s1608 + $0x58] sm:$0xff]
        %v1621 = vld [vmem:[%s1608 + $0x60] sm:$0xff]
        %v1622 = vld [vmem:[%s1608 + $0x68] sm:$0xff]
        %v1623 = vld [vmem:[%s1608 + $0x70] sm:$0xff]
        %v1624 = vld [vmem:[%s1608 + $0x78] sm:$0xff]
        %1625 = vmatprep.subr.mxu0 0.0
        %1626 = vmatpush1.msra.mxu0 %v1609
        %1627 = vmatprep.subr.mxu0 0.0
        %1628 = vmatpush1.msra.mxu0 %v1610
        %1629 = vmatprep.subr.mxu0 0.0
        %1630 = vmatpush1.msra.mxu0 %v1611
        %1631 = vmatprep.subr.mxu0 0.0
        %1632 = vmatpush1.msra.mxu0 %v1612
        %1633 = vmatprep.subr.mxu0 0.0
        %1634 = vmatpush1.msra.mxu0 %v1613
        %1635 = vmatprep.subr.mxu0 0.0
        %1636 = vmatpush1.msra.mxu0 %v1614
        %1637 = vmatprep.subr.mxu0 0.0
        %1638 = vmatpush1.msra.mxu0 %v1615
        %1639 = vmatprep.subr.mxu0 0.0
        %1640 = vmatpush1.msra.mxu0 %v1616
        %1641 = vmatprep.subr.mxu0 0.0
        %1642 = vmatpush1.msra.mxu0 %v1617
        %1643 = vmatprep.subr.mxu0 0.0
        %1644 = vmatpush1.msra.mxu0 %v1618
        %1645 = vmatprep.subr.mxu0 0.0
        %1646 = vmatpush1.msra.mxu0 %v1619
        %1647 = vmatprep.subr.mxu0 0.0
        %1648 = vmatpush1.msra.mxu0 %v1620
        %1649 = vmatprep.subr.mxu0 0.0
        %1650 = vmatpush1.msra.mxu0 %v1621
        %1651 = vmatprep.subr.mxu0 0.0
        %1652 = vmatpush1.msra.mxu0 %v1622
        %1653 = vmatprep.subr.mxu0 0.0
        %1654 = vmatpush1.msra.mxu0 %v1623
        %1655 = vmatprep.subr.mxu0 0.0
        %1656 = vmatpush1.msra.mxu0 %v1624
        %1657 = vmatprep.subr.mxu0 0.0
        %1658 = vmatpush1.msra.mxu0 0.0
        %1659 = vmatprep.subr.mxu0 0.0
        %1660 = vmatpush1.msra.mxu0 0.0
        %1661 = vmatprep.subr.mxu0 0.0
        %1662 = vmatpush1.msra.mxu0 0.0
        %1663 = vmatprep.subr.mxu0 0.0
        %1664 = vmatpush1.msra.mxu0 0.0
        %1665 = vmatprep.subr.mxu0 0.0
        %1666 = vmatpush1.msra.mxu0 0.0
        %1667 = vmatprep.subr.mxu0 0.0
        %1668 = vmatpush1.msra.mxu0 0.0
        %1669 = vmatprep.subr.mxu0 0.0
        %1670 = vmatpush1.msra.mxu0 0.0
        %1671 = vmatprep.subr.mxu0 0.0
        %1672 = vmatpush1.msra.mxu0 0.0
        %1673 = vmatprep.subr.mxu0 0.0
        %1674 = vmatpush1.msra.mxu0 0.0
        %1675 = vmatprep.subr.mxu0 0.0
        %1676 = vmatpush1.msra.mxu0 0.0
        %1677 = vmatprep.subr.mxu0 0.0
        %1678 = vmatpush1.msra.mxu0 0.0
        %1679 = vmatprep.subr.mxu0 0.0
        %1680 = vmatpush1.msra.mxu0 0.0
        %1681 = vmatprep.subr.mxu0 0.0
        %1682 = vmatpush1.msra.mxu0 0.0
        %1683 = vmatprep.subr.mxu0 0.0
        %1684 = vmatpush1.msra.mxu0 0.0
        %1685 = vmatprep.subr.mxu0 0.0
        %1686 = vmatpush1.msra.mxu0 0.0
        %1687 = vmatprep.subr.mxu0 0.0
        %1688 = vmatpush1.msra.mxu0 0.0
        %1689 = vmatprep.mubr.f32.mxu0 0.0
        %1690 = vmatmul.mubr.f32.gmra.mrb[0].mxu0 %v1236
        %v1691 = vpop.f32.mrb[0].mxu0
        %v1692 = vadd.f32 0.0, %v1691
        %v1693 = vpop.f32.mrb[0].mxu0
        %1694 = vmatprep.mubr.f32.mxu0 0.0
        %1695 = vmatmul.mubr.f32.gmra.mrb[0].mxu0 %v1237
        %v1696 = vpop.f32.mrb[0].mxu0
        %v1697 = vadd.f32 0.0, %v1696
        %v1698 = vpop.f32.mrb[0].mxu0
        %1699 = vmatprep.mubr.f32.mxu0 0.0
        %1700 = vmatmul.mubr.f32.gmra.mrb[0].mxu0 %v1238
        %v1701 = vpop.f32.mrb[0].mxu0
        %v1702 = vadd.f32 0.0, %v1701
        %v1703 = vpop.f32.mrb[0].mxu0
        %1704 = vmatprep.mubr.f32.mxu0 0.0
        %1705 = vmatmul.mubr.f32.gmra.mrb[0].mxu0 %v1239
        %v1706 = vpop.f32.mrb[0].mxu0
        %v1707 = vadd.f32 0.0, %v1706
        %v1708 = vpop.f32.mrb[0].mxu0
        %1709 = vmatprep.mubr.f32.mxu0 0.0
        %1710 = vmatmul.mubr.f32.gmra.mrb[0].mxu0 %v1240
        %v1711 = vpop.f32.mrb[0].mxu0
        %v1712 = vadd.f32 0.0, %v1711
        %v1713 = vpop.f32.mrb[0].mxu0
        %1714 = vmatprep.mubr.f32.mxu0 0.0
        %1715 = vmatmul.mubr.f32.gmra.mrb[0].mxu0 %v1241
        %v1716 = vpop.f32.mrb[0].mxu0
        %v1717 = vadd.f32 0.0, %v1716
        %v1718 = vpop.f32.mrb[0].mxu0
        %1719 = vmatprep.mubr.f32.mxu0 0.0
        %1720 = vmatmul.mubr.f32.gmra.mrb[0].mxu0 %v1242
        %v1721 = vpop.f32.mrb[0].mxu0
        %v1722 = vadd.f32 0.0, %v1721
        %v1723 = vpop.f32.mrb[0].mxu0
        %1724 = vmatprep.mubr.f32.mxu0 0.0
        %1725 = vmatmul.mubr.f32.gmra.mrb[0].mxu0 %v1243
        %v1726 = vpop.f32.mrb[0].mxu0
        %v1727 = vadd.f32 0.0, %v1726
        %v1728 = vpop.f32.mrb[0].mxu0
        %1729 = vmatprep.mubr.f32.mxu0 0.0
        %1730 = vmatmul.mubr.f32.gmra.mrb[0].mxu0 %v1244
        %v1731 = vpop.f32.mrb[0].mxu0
        %v1732 = vadd.f32 0.0, %v1731
        %v1733 = vpop.f32.mrb[0].mxu0
        %1734 = vmatprep.mubr.f32.mxu0 0.0
        %1735 = vmatmul.mubr.f32.gmra.mrb[0].mxu0 %v1245
        %v1736 = vpop.f32.mrb[0].mxu0
        %v1737 = vadd.f32 0.0, %v1736
        %v1738 = vpop.f32.mrb[0].mxu0
        %1739 = vmatprep.mubr.f32.mxu0 0.0
        %1740 = vmatmul.mubr.f32.gmra.mrb[0].mxu0 %v1246
        %v1741 = vpop.f32.mrb[0].mxu0
        %v1742 = vadd.f32 0.0, %v1741
        %v1743 = vpop.f32.mrb[0].mxu0
        %1744 = vmatprep.mubr.f32.mxu0 0.0
        %1745 = vmatmul.mubr.f32.gmra.mrb[0].mxu0 %v1247
        %v1746 = vpop.f32.mrb[0].mxu0
        %v1747 = vadd.f32 0.0, %v1746
        %v1748 = vpop.f32.mrb[0].mxu0
        %1749 = vmatprep.mubr.f32.mxu0 0.0
        %1750 = vmatmul.mubr.f32.gmra.mrb[0].mxu0 %v1248
        %v1751 = vpop.f32.mrb[0].mxu0
        %v1752 = vadd.f32 0.0, %v1751
        %v1753 = vpop.f32.mrb[0].mxu0
        %1754 = vmatprep.mubr.f32.mxu0 0.0
        %1755 = vmatmul.mubr.f32.gmra.mrb[0].mxu0 %v1249
        %v1756 = vpop.f32.mrb[0].mxu0
        %v1757 = vadd.f32 0.0, %v1756
        %v1758 = vpop.f32.mrb[0].mxu0
        %1759 = vmatprep.mubr.f32.mxu0 0.0
        %1760 = vmatmul.mubr.f32.gmra.mrb[0].mxu0 %v1250
        %v1761 = vpop.f32.mrb[0].mxu0
        %v1762 = vadd.f32 0.0, %v1761
        %v1763 = vpop.f32.mrb[0].mxu0
        %1764 = vmatprep.mubr.f32.mxu0 0.0
        %1765 = vmatmul.mubr.f32.gmra.mrb[0].mxu0 %v1251
        %v1766 = vpop.f32.mrb[0].mxu0
        %v1767 = vadd.f32 0.0, %v1766
        %v1768 = vpop.f32.mrb[0].mxu0
        %1769 = vdwg.mxu0
        %v1770 = vadd.f32 %v1592, %v1692
        %v1771 = vadd.f32 %v1593, %v1697
        %v1772 = vadd.f32 %v1594, %v1702
        %v1773 = vadd.f32 %v1595, %v1707
        %v1774 = vadd.f32 %v1596, %v1712
        %v1775 = vadd.f32 %v1597, %v1717
        %v1776 = vadd.f32 %v1598, %v1722
        %v1777 = vadd.f32 %v1599, %v1727
        %v1778 = vadd.f32 %v1600, %v1732
        %v1779 = vadd.f32 %v1601, %v1737
        %v1780 = vadd.f32 %v1602, %v1742
        %v1781 = vadd.f32 %v1603, %v1747
        %v1782 = vadd.f32 %v1604, %v1752
        %v1783 = vadd.f32 %v1605, %v1757
        %v1784 = vadd.f32 %v1606, %v1762
        %v1785 = vadd.f32 %v1607, %v1767
        %v1786 = vld [vmem:[%s242 + $0x30] sm:$0xff]
        %v1787 = vld [vmem:[%s242 + $0x38] sm:$0xff]
        %v1788 = vld [vmem:[%s242 + $0x40] sm:$0xff]
        %v1789 = vld [vmem:[%s242 + $0x48] sm:$0xff]
        %v1790 = vld [vmem:[%s242 + $0x50] sm:$0xff]
        %v1791 = vld [vmem:[%s242 + $0x58] sm:$0xff]
        %v1792 = vld [vmem:[%s242 + $0x60] sm:$0xff]
        %v1793 = vld [vmem:[%s242 + $0x68] sm:$0xff]
        %v1794 = vld [vmem:[%s242 + $0x70] sm:$0xff]
        %v1795 = vld [vmem:[%s242 + $0x78] sm:$0xff]
        %v1796 = vld [vmem:[%s242 + $0x80] sm:$0xff]
        %v1797 = vld [vmem:[%s242 + $0x88] sm:$0xff]
        %v1798 = vld [vmem:[%s242 + $0x90] sm:$0xff]
        %v1799 = vld [vmem:[%s242 + $0x98] sm:$0xff]
        %v1800 = vld [vmem:[%s242 + $0xa0] sm:$0xff]
        %v1801 = vld [vmem:[%s242 + $0xa8] sm:$0xff]
        %v1802 = vld [vmem:[%s242 + $0x2f] sm:$0xff]
        %v1803 = vld [vmem:[%s242 + $0x37] sm:$0xff]
        %v1804 = vld [vmem:[%s242 + $0x3f] sm:$0xff]
        %v1805 = vld [vmem:[%s242 + $0x47] sm:$0xff]
        %v1806 = vld [vmem:[%s242 + $0x4f] sm:$0xff]
        %v1807 = vld [vmem:[%s242 + $0x57] sm:$0xff]
        %v1808 = vld [vmem:[%s242 + $0x5f] sm:$0xff]
        %v1809 = vld [vmem:[%s242 + $0x67] sm:$0xff]
        %v1810 = vld [vmem:[%s242 + $0x6f] sm:$0xff]
        %v1811 = vld [vmem:[%s242 + $0x77] sm:$0xff]
        %v1812 = vld [vmem:[%s242 + $0x7f] sm:$0xff]
        %v1813 = vld [vmem:[%s242 + $0x87] sm:$0xff]
        %v1814 = vld [vmem:[%s242 + $0x8f] sm:$0xff]
        %v1815 = vld [vmem:[%s242 + $0x97] sm:$0xff]
        %v1816 = vld [vmem:[%s242 + $0x9f] sm:$0xff]
        %v1817 = vld [vmem:[%s242 + $0xa7] sm:$0xff]
        %v1818 = vld [vmem:[%s242 + $0x31] sm:$0xff]
        %v1819 = vld [vmem:[%s242 + $0x39] sm:$0xff]
        %v1820 = vld [vmem:[%s242 + $0x41] sm:$0xff]
        %v1821 = vld [vmem:[%s242 + $0x49] sm:$0xff]
        %v1822 = vld [vmem:[%s242 + $0x51] sm:$0xff]
        %v1823 = vld [vmem:[%s242 + $0x59] sm:$0xff]
        %v1824 = vld [vmem:[%s242 + $0x61] sm:$0xff]
        %v1825 = vld [vmem:[%s242 + $0x69] sm:$0xff]
        %v1826 = vld [vmem:[%s242 + $0x71] sm:$0xff]
        %v1827 = vld [vmem:[%s242 + $0x79] sm:$0xff]
        %v1828 = vld [vmem:[%s242 + $0x81] sm:$0xff]
        %v1829 = vld [vmem:[%s242 + $0x89] sm:$0xff]
        %v1830 = vld [vmem:[%s242 + $0x91] sm:$0xff]
        %v1831 = vld [vmem:[%s242 + $0x99] sm:$0xff]
        %v1832 = vld [vmem:[%s242 + $0xa1] sm:$0xff]
        %v1833 = vld [vmem:[%s242 + $0xa9] sm:$0xff]
        %v1834 = vsel %vm591, %v1802, 0.0
        %v1835 = vsel %vm592, %v1803, 0.0
        %v1836 = vsel %vm593, %v1804, 0.0
        %v1837 = vsel %vm594, %v1805, 0.0
        %v1838 = vsel %vm595, %v1806, 0.0
        %v1839 = vsel %vm596, %v1807, 0.0
        %v1840 = vsel %vm597, %v1808, 0.0
        %v1841 = vsel %vm598, %v1809, 0.0
        %v1842 = vsel %vm599, %v1810, 0.0
        %v1843 = vsel %vm600, %v1811, 0.0
        %v1844 = vsel %vm601, %v1812, 0.0
        %v1845 = vsel %vm602, %v1813, 0.0
        %v1846 = vsel %vm603, %v1814, 0.0
        %v1847 = vsel %vm604, %v1815, 0.0
        %v1848 = vsel %vm605, %v1816, 0.0
        %v1849 = vsel %vm606, %v1817, 0.0
        %v1850 = vsel %vm639, %v1818, 0.0
        %v1851 = vsel %vm640, %v1819, 0.0
        %v1852 = vsel %vm641, %v1820, 0.0
        %v1853 = vsel %vm642, %v1821, 0.0
        %v1854 = vsel %vm643, %v1822, 0.0
        %v1855 = vsel %vm644, %v1823, 0.0
        %v1856 = vsel %vm645, %v1824, 0.0
        %v1857 = vsel %vm646, %v1825, 0.0
        %v1858 = vsel %vm647, %v1826, 0.0
        %v1859 = vsel %vm648, %v1827, 0.0
        %v1860 = vsel %vm649, %v1828, 0.0
        %v1861 = vsel %vm650, %v1829, 0.0
        %v1862 = vsel %vm651, %v1830, 0.0
        %v1863 = vsel %vm652, %v1831, 0.0
        %v1864 = vsel %vm653, %v1832, 0.0
        %v1865 = vsel %vm654, %v1833, 0.0
        %s1866 = scalar_lea.vmem [#allocation4], 768
        %v1867 = vld [vmem:[%s1866] sm:$0xff]
        %v1868 = vld [vmem:[%s1866 + $0x8] sm:$0xff]
        %v1869 = vld [vmem:[%s1866 + $0x10] sm:$0xff]
        %v1870 = vld [vmem:[%s1866 + $0x18] sm:$0xff]
        %v1871 = vld [vmem:[%s1866 + $0x20] sm:$0xff]
        %v1872 = vld [vmem:[%s1866 + $0x28] sm:$0xff]
        %v1873 = vld [vmem:[%s1866 + $0x30] sm:$0xff]
        %v1874 = vld [vmem:[%s1866 + $0x38] sm:$0xff]
        %v1875 = vld [vmem:[%s1866 + $0x40] sm:$0xff]
        %v1876 = vld [vmem:[%s1866 + $0x48] sm:$0xff]
        %v1877 = vld [vmem:[%s1866 + $0x50] sm:$0xff]
        %v1878 = vld [vmem:[%s1866 + $0x58] sm:$0xff]
        %v1879 = vld [vmem:[%s1866 + $0x60] sm:$0xff]
        %v1880 = vld [vmem:[%s1866 + $0x68] sm:$0xff]
        %v1881 = vld [vmem:[%s1866 + $0x70] sm:$0xff]
        %v1882 = vld [vmem:[%s1866 + $0x78] sm:$0xff]
        %1883 = vmatprep.subr.mxu0 0.0
        %1884 = vmatpush1.msra.mxu0 %v1867
        %1885 = vmatprep.subr.mxu0 0.0
        %1886 = vmatpush1.msra.mxu0 %v1868
        %1887 = vmatprep.subr.mxu0 0.0
        %1888 = vmatpush1.msra.mxu0 %v1869
        %1889 = vmatprep.subr.mxu0 0.0
        %1890 = vmatpush1.msra.mxu0 %v1870
        %1891 = vmatprep.subr.mxu0 0.0
        %1892 = vmatpush1.msra.mxu0 %v1871
        %1893 = vmatprep.subr.mxu0 0.0
        %1894 = vmatpush1.msra.mxu0 %v1872
        %1895 = vmatprep.subr.mxu0 0.0
        %1896 = vmatpush1.msra.mxu0 %v1873
        %1897 = vmatprep.subr.mxu0 0.0
        %1898 = vmatpush1.msra.mxu0 %v1874
        %1899 = vmatprep.subr.mxu0 0.0
        %1900 = vmatpush1.msra.mxu0 %v1875
        %1901 = vmatprep.subr.mxu0 0.0
        %1902 = vmatpush1.msra.mxu0 %v1876
        %1903 = vmatprep.subr.mxu0 0.0
        %1904 = vmatpush1.msra.mxu0 %v1877
        %1905 = vmatprep.subr.mxu0 0.0
        %1906 = vmatpush1.msra.mxu0 %v1878
        %1907 = vmatprep.subr.mxu0 0.0
        %1908 = vmatpush1.msra.mxu0 %v1879
        %1909 = vmatprep.subr.mxu0 0.0
        %1910 = vmatpush1.msra.mxu0 %v1880
        %1911 = vmatprep.subr.mxu0 0.0
        %1912 = vmatpush1.msra.mxu0 %v1881
        %1913 = vmatprep.subr.mxu0 0.0
        %1914 = vmatpush1.msra.mxu0 %v1882
        %1915 = vmatprep.subr.mxu0 0.0
        %1916 = vmatpush1.msra.mxu0 0.0
        %1917 = vmatprep.subr.mxu0 0.0
        %1918 = vmatpush1.msra.mxu0 0.0
        %1919 = vmatprep.subr.mxu0 0.0
        %1920 = vmatpush1.msra.mxu0 0.0
        %1921 = vmatprep.subr.mxu0 0.0
        %1922 = vmatpush1.msra.mxu0 0.0
        %1923 = vmatprep.subr.mxu0 0.0
        %1924 = vmatpush1.msra.mxu0 0.0
        %1925 = vmatprep.subr.mxu0 0.0
        %1926 = vmatpush1.msra.mxu0 0.0
        %1927 = vmatprep.subr.mxu0 0.0
        %1928 = vmatpush1.msra.mxu0 0.0
        %1929 = vmatprep.subr.mxu0 0.0
        %1930 = vmatpush1.msra.mxu0 0.0
        %1931 = vmatprep.subr.mxu0 0.0
        %1932 = vmatpush1.msra.mxu0 0.0
        %1933 = vmatprep.subr.mxu0 0.0
        %1934 = vmatpush1.msra.mxu0 0.0
        %1935 = vmatprep.subr.mxu0 0.0
        %1936 = vmatpush1.msra.mxu0 0.0
        %1937 = vmatprep.subr.mxu0 0.0
        %1938 = vmatpush1.msra.mxu0 0.0
        %1939 = vmatprep.subr.mxu0 0.0
        %1940 = vmatpush1.msra.mxu0 0.0
        %1941 = vmatprep.subr.mxu0 0.0
        %1942 = vmatpush1.msra.mxu0 0.0
        %1943 = vmatprep.subr.mxu0 0.0
        %1944 = vmatpush1.msra.mxu0 0.0
        %1945 = vmatprep.subr.mxu0 0.0
        %1946 = vmatpush1.msra.mxu0 0.0
        %1947 = vmatprep.mubr.f32.mxu0 0.0
        %1948 = vmatmul.mubr.f32.gmra.mrb[0].mxu0 %v1834
        %v1949 = vpop.f32.mrb[0].mxu0
        %v1950 = vadd.f32 0.0, %v1949
        %v1951 = vpop.f32.mrb[0].mxu0
        %1952 = vmatprep.mubr.f32.mxu0 0.0
        %1953 = vmatmul.mubr.f32.gmra.mrb[0].mxu0 %v1835
        %v1954 = vpop.f32.mrb[0].mxu0
        %v1955 = vadd.f32 0.0, %v1954
        %v1956 = vpop.f32.mrb[0].mxu0
        %1957 = vmatprep.mubr.f32.mxu0 0.0
        %1958 = vmatmul.mubr.f32.gmra.mrb[0].mxu0 %v1836
        %v1959 = vpop.f32.mrb[0].mxu0
        %v1960 = vadd.f32 0.0, %v1959
        %v1961 = vpop.f32.mrb[0].mxu0
        %1962 = vmatprep.mubr.f32.mxu0 0.0
        %1963 = vmatmul.mubr.f32.gmra.mrb[0].mxu0 %v1837
        %v1964 = vpop.f32.mrb[0].mxu0
        %v1965 = vadd.f32 0.0, %v1964
        %v1966 = vpop.f32.mrb[0].mxu0
        %1967 = vmatprep.mubr.f32.mxu0 0.0
        %1968 = vmatmul.mubr.f32.gmra.mrb[0].mxu0 %v1838
        %v1969 = vpop.f32.mrb[0].mxu0
        %v1970 = vadd.f32 0.0, %v1969
        %v1971 = vpop.f32.mrb[0].mxu0
        %1972 = vmatprep.mubr.f32.mxu0 0.0
        %1973 = vmatmul.mubr.f32.gmra.mrb[0].mxu0 %v1839
        %v1974 = vpop.f32.mrb[0].mxu0
        %v1975 = vadd.f32 0.0, %v1974
        %v1976 = vpop.f32.mrb[0].mxu0
        %1977 = vmatprep.mubr.f32.mxu0 0.0
        %1978 = vmatmul.mubr.f32.gmra.mrb[0].mxu0 %v1840
        %v1979 = vpop.f32.mrb[0].mxu0
        %v1980 = vadd.f32 0.0, %v1979
        %v1981 = vpop.f32.mrb[0].mxu0
        %1982 = vmatprep.mubr.f32.mxu0 0.0
        %1983 = vmatmul.mubr.f32.gmra.mrb[0].mxu0 %v1841
        %v1984 = vpop.f32.mrb[0].mxu0
        %v1985 = vadd.f32 0.0, %v1984
        %v1986 = vpop.f32.mrb[0].mxu0
        %1987 = vmatprep.mubr.f32.mxu0 0.0
        %1988 = vmatmul.mubr.f32.gmra.mrb[0].mxu0 %v1842
        %v1989 = vpop.f32.mrb[0].mxu0
        %v1990 = vadd.f32 0.0, %v1989
        %v1991 = vpop.f32.mrb[0].mxu0
        %1992 = vmatprep.mubr.f32.mxu0 0.0
        %1993 = vmatmul.mubr.f32.gmra.mrb[0].mxu0 %v1843
        %v1994 = vpop.f32.mrb[0].mxu0
        %v1995 = vadd.f32 0.0, %v1994
        %v1996 = vpop.f32.mrb[0].mxu0
        %1997 = vmatprep.mubr.f32.mxu0 0.0
        %1998 = vmatmul.mubr.f32.gmra.mrb[0].mxu0 %v1844
        %v1999 = vpop.f32.mrb[0].mxu0
        %v2000 = vadd.f32 0.0, %v1999
        %v2001 = vpop.f32.mrb[0].mxu0
        %2002 = vmatprep.mubr.f32.mxu0 0.0
        %2003 = vmatmul.mubr.f32.gmra.mrb[0].mxu0 %v1845
        %v2004 = vpop.f32.mrb[0].mxu0
        %v2005 = vadd.f32 0.0, %v2004
        %v2006 = vpop.f32.mrb[0].mxu0
        %2007 = vmatprep.mubr.f32.mxu0 0.0
        %2008 = vmatmul.mubr.f32.gmra.mrb[0].mxu0 %v1846
        %v2009 = vpop.f32.mrb[0].mxu0
        %v2010 = vadd.f32 0.0, %v2009
        %v2011 = vpop.f32.mrb[0].mxu0
        %2012 = vmatprep.mubr.f32.mxu0 0.0
        %2013 = vmatmul.mubr.f32.gmra.mrb[0].mxu0 %v1847
        %v2014 = vpop.f32.mrb[0].mxu0
        %v2015 = vadd.f32 0.0, %v2014
        %v2016 = vpop.f32.mrb[0].mxu0
        %2017 = vmatprep.mubr.f32.mxu0 0.0
        %2018 = vmatmul.mubr.f32.gmra.mrb[0].mxu0 %v1848
        %v2019 = vpop.f32.mrb[0].mxu0
        %v2020 = vadd.f32 0.0, %v2019
        %v2021 = vpop.f32.mrb[0].mxu0
        %2022 = vmatprep.mubr.f32.mxu0 0.0
        %2023 = vmatmul.mubr.f32.gmra.mrb[0].mxu0 %v1849
        %v2024 = vpop.f32.mrb[0].mxu0
        %v2025 = vadd.f32 0.0, %v2024
        %v2026 = vpop.f32.mrb[0].mxu0
        %2027 = vdwg.mxu0
        %v2028 = vadd.f32 %v1770, %v1950
        %v2029 = vadd.f32 %v1771, %v1955
        %v2030 = vadd.f32 %v1772, %v1960
        %v2031 = vadd.f32 %v1773, %v1965
        %v2032 = vadd.f32 %v1774, %v1970
        %v2033 = vadd.f32 %v1775, %v1975
        %v2034 = vadd.f32 %v1776, %v1980
        %v2035 = vadd.f32 %v1777, %v1985
        %v2036 = vadd.f32 %v1778, %v1990
        %v2037 = vadd.f32 %v1779, %v1995
        %v2038 = vadd.f32 %v1780, %v2000
        %v2039 = vadd.f32 %v1781, %v2005
        %v2040 = vadd.f32 %v1782, %v2010
        %v2041 = vadd.f32 %v1783, %v2015
        %v2042 = vadd.f32 %v1784, %v2020
        %v2043 = vadd.f32 %v1785, %v2025
        %s2044 = scalar_lea.vmem [#allocation4], 896
        %v2045 = vld [vmem:[%s2044] sm:$0xff]
        %v2046 = vld [vmem:[%s2044 + $0x8] sm:$0xff]
        %v2047 = vld [vmem:[%s2044 + $0x10] sm:$0xff]
        %v2048 = vld [vmem:[%s2044 + $0x18] sm:$0xff]
        %v2049 = vld [vmem:[%s2044 + $0x20] sm:$0xff]
        %v2050 = vld [vmem:[%s2044 + $0x28] sm:$0xff]
        %v2051 = vld [vmem:[%s2044 + $0x30] sm:$0xff]
        %v2052 = vld [vmem:[%s2044 + $0x38] sm:$0xff]
        %v2053 = vld [vmem:[%s2044 + $0x40] sm:$0xff]
        %v2054 = vld [vmem:[%s2044 + $0x48] sm:$0xff]
        %v2055 = vld [vmem:[%s2044 + $0x50] sm:$0xff]
        %v2056 = vld [vmem:[%s2044 + $0x58] sm:$0xff]
        %v2057 = vld [vmem:[%s2044 + $0x60] sm:$0xff]
        %v2058 = vld [vmem:[%s2044 + $0x68] sm:$0xff]
        %v2059 = vld [vmem:[%s2044 + $0x70] sm:$0xff]
        %v2060 = vld [vmem:[%s2044 + $0x78] sm:$0xff]
        %2061 = vmatprep.subr.mxu0 0.0
        %2062 = vmatpush1.msra.mxu0 %v2045
        %2063 = vmatprep.subr.mxu0 0.0
        %2064 = vmatpush1.msra.mxu0 %v2046
        %2065 = vmatprep.subr.mxu0 0.0
        %2066 = vmatpush1.msra.mxu0 %v2047
        %2067 = vmatprep.subr.mxu0 0.0
        %2068 = vmatpush1.msra.mxu0 %v2048
        %2069 = vmatprep.subr.mxu0 0.0
        %2070 = vmatpush1.msra.mxu0 %v2049
        %2071 = vmatprep.subr.mxu0 0.0
        %2072 = vmatpush1.msra.mxu0 %v2050
        %2073 = vmatprep.subr.mxu0 0.0
        %2074 = vmatpush1.msra.mxu0 %v2051
        %2075 = vmatprep.subr.mxu0 0.0
        %2076 = vmatpush1.msra.mxu0 %v2052
        %2077 = vmatprep.subr.mxu0 0.0
        %2078 = vmatpush1.msra.mxu0 %v2053
        %2079 = vmatprep.subr.mxu0 0.0
        %2080 = vmatpush1.msra.mxu0 %v2054
        %2081 = vmatprep.subr.mxu0 0.0
        %2082 = vmatpush1.msra.mxu0 %v2055
        %2083 = vmatprep.subr.mxu0 0.0
        %2084 = vmatpush1.msra.mxu0 %v2056
        %2085 = vmatprep.subr.mxu0 0.0
        %2086 = vmatpush1.msra.mxu0 %v2057
        %2087 = vmatprep.subr.mxu0 0.0
        %2088 = vmatpush1.msra.mxu0 %v2058
        %2089 = vmatprep.subr.mxu0 0.0
        %2090 = vmatpush1.msra.mxu0 %v2059
        %2091 = vmatprep.subr.mxu0 0.0
        %2092 = vmatpush1.msra.mxu0 %v2060
        %2093 = vmatprep.subr.mxu0 0.0
        %2094 = vmatpush1.msra.mxu0 0.0
        %2095 = vmatprep.subr.mxu0 0.0
        %2096 = vmatpush1.msra.mxu0 0.0
        %2097 = vmatprep.subr.mxu0 0.0
        %2098 = vmatpush1.msra.mxu0 0.0
        %2099 = vmatprep.subr.mxu0 0.0
        %2100 = vmatpush1.msra.mxu0 0.0
        %2101 = vmatprep.subr.mxu0 0.0
        %2102 = vmatpush1.msra.mxu0 0.0
        %2103 = vmatprep.subr.mxu0 0.0
        %2104 = vmatpush1.msra.mxu0 0.0
        %2105 = vmatprep.subr.mxu0 0.0
        %2106 = vmatpush1.msra.mxu0 0.0
        %2107 = vmatprep.subr.mxu0 0.0
        %2108 = vmatpush1.msra.mxu0 0.0
        %2109 = vmatprep.subr.mxu0 0.0
        %2110 = vmatpush1.msra.mxu0 0.0
        %2111 = vmatprep.subr.mxu0 0.0
        %2112 = vmatpush1.msra.mxu0 0.0
        %2113 = vmatprep.subr.mxu0 0.0
        %2114 = vmatpush1.msra.mxu0 0.0
        %2115 = vmatprep.subr.mxu0 0.0
        %2116 = vmatpush1.msra.mxu0 0.0
        %2117 = vmatprep.subr.mxu0 0.0
        %2118 = vmatpush1.msra.mxu0 0.0
        %2119 = vmatprep.subr.mxu0 0.0
        %2120 = vmatpush1.msra.mxu0 0.0
        %2121 = vmatprep.subr.mxu0 0.0
        %2122 = vmatpush1.msra.mxu0 0.0
        %2123 = vmatprep.subr.mxu0 0.0
        %2124 = vmatpush1.msra.mxu0 0.0
        %2125 = vmatprep.mubr.f32.mxu0 0.0
        %2126 = vmatmul.mubr.f32.gmra.mrb[0].mxu0 %v1786
        %v2127 = vpop.f32.mrb[0].mxu0
        %v2128 = vadd.f32 0.0, %v2127
        %v2129 = vpop.f32.mrb[0].mxu0
        %2130 = vmatprep.mubr.f32.mxu0 0.0
        %2131 = vmatmul.mubr.f32.gmra.mrb[0].mxu0 %v1787
        %v2132 = vpop.f32.mrb[0].mxu0
        %v2133 = vadd.f32 0.0, %v2132
        %v2134 = vpop.f32.mrb[0].mxu0
        %2135 = vmatprep.mubr.f32.mxu0 0.0
        %2136 = vmatmul.mubr.f32.gmra.mrb[0].mxu0 %v1788
        %v2137 = vpop.f32.mrb[0].mxu0
        %v2138 = vadd.f32 0.0, %v2137
        %v2139 = vpop.f32.mrb[0].mxu0
        %2140 = vmatprep.mubr.f32.mxu0 0.0
        %2141 = vmatmul.mubr.f32.gmra.mrb[0].mxu0 %v1789
        %v2142 = vpop.f32.mrb[0].mxu0
        %v2143 = vadd.f32 0.0, %v2142
        %v2144 = vpop.f32.mrb[0].mxu0
        %2145 = vmatprep.mubr.f32.mxu0 0.0
        %2146 = vmatmul.mubr.f32.gmra.mrb[0].mxu0 %v1790
        %v2147 = vpop.f32.mrb[0].mxu0
        %v2148 = vadd.f32 0.0, %v2147
        %v2149 = vpop.f32.mrb[0].mxu0
        %2150 = vmatprep.mubr.f32.mxu0 0.0
        %2151 = vmatmul.mubr.f32.gmra.mrb[0].mxu0 %v1791
        %v2152 = vpop.f32.mrb[0].mxu0
        %v2153 = vadd.f32 0.0, %v2152
        %v2154 = vpop.f32.mrb[0].mxu0
        %2155 = vmatprep.mubr.f32.mxu0 0.0
        %2156 = vmatmul.mubr.f32.gmra.mrb[0].mxu0 %v1792
        %v2157 = vpop.f32.mrb[0].mxu0
        %v2158 = vadd.f32 0.0, %v2157
        %v2159 = vpop.f32.mrb[0].mxu0
        %2160 = vmatprep.mubr.f32.mxu0 0.0
        %2161 = vmatmul.mubr.f32.gmra.mrb[0].mxu0 %v1793
        %v2162 = vpop.f32.mrb[0].mxu0
        %v2163 = vadd.f32 0.0, %v2162
        %v2164 = vpop.f32.mrb[0].mxu0
        %2165 = vmatprep.mubr.f32.mxu0 0.0
        %2166 = vmatmul.mubr.f32.gmra.mrb[0].mxu0 %v1794
        %v2167 = vpop.f32.mrb[0].mxu0
        %v2168 = vadd.f32 0.0, %v2167
        %v2169 = vpop.f32.mrb[0].mxu0
        %2170 = vmatprep.mubr.f32.mxu0 0.0
        %2171 = vmatmul.mubr.f32.gmra.mrb[0].mxu0 %v1795
        %v2172 = vpop.f32.mrb[0].mxu0
        %v2173 = vadd.f32 0.0, %v2172
        %v2174 = vpop.f32.mrb[0].mxu0
        %2175 = vmatprep.mubr.f32.mxu0 0.0
        %2176 = vmatmul.mubr.f32.gmra.mrb[0].mxu0 %v1796
        %v2177 = vpop.f32.mrb[0].mxu0
        %v2178 = vadd.f32 0.0, %v2177
        %v2179 = vpop.f32.mrb[0].mxu0
        %2180 = vmatprep.mubr.f32.mxu0 0.0
        %2181 = vmatmul.mubr.f32.gmra.mrb[0].mxu0 %v1797
        %v2182 = vpop.f32.mrb[0].mxu0
        %v2183 = vadd.f32 0.0, %v2182
        %v2184 = vpop.f32.mrb[0].mxu0
        %2185 = vmatprep.mubr.f32.mxu0 0.0
        %2186 = vmatmul.mubr.f32.gmra.mrb[0].mxu0 %v1798
        %v2187 = vpop.f32.mrb[0].mxu0
        %v2188 = vadd.f32 0.0, %v2187
        %v2189 = vpop.f32.mrb[0].mxu0
        %2190 = vmatprep.mubr.f32.mxu0 0.0
        %2191 = vmatmul.mubr.f32.gmra.mrb[0].mxu0 %v1799
        %v2192 = vpop.f32.mrb[0].mxu0
        %v2193 = vadd.f32 0.0, %v2192
        %v2194 = vpop.f32.mrb[0].mxu0
        %2195 = vmatprep.mubr.f32.mxu0 0.0
        %2196 = vmatmul.mubr.f32.gmra.mrb[0].mxu0 %v1800
        %v2197 = vpop.f32.mrb[0].mxu0
        %v2198 = vadd.f32 0.0, %v2197
        %v2199 = vpop.f32.mrb[0].mxu0
        %2200 = vmatprep.mubr.f32.mxu0 0.0
        %2201 = vmatmul.mubr.f32.gmra.mrb[0].mxu0 %v1801
        %v2202 = vpop.f32.mrb[0].mxu0
        %v2203 = vadd.f32 0.0, %v2202
        %v2204 = vpop.f32.mrb[0].mxu0
        %2205 = vdwg.mxu0
        %v2206 = vadd.f32 %v2028, %v2128
        %v2207 = vadd.f32 %v2029, %v2133
        %v2208 = vadd.f32 %v2030, %v2138
        %v2209 = vadd.f32 %v2031, %v2143
        %v2210 = vadd.f32 %v2032, %v2148
        %v2211 = vadd.f32 %v2033, %v2153
        %v2212 = vadd.f32 %v2034, %v2158
        %v2213 = vadd.f32 %v2035, %v2163
        %v2214 = vadd.f32 %v2036, %v2168
        %v2215 = vadd.f32 %v2037, %v2173
        %v2216 = vadd.f32 %v2038, %v2178
        %v2217 = vadd.f32 %v2039, %v2183
        %v2218 = vadd.f32 %v2040, %v2188
        %v2219 = vadd.f32 %v2041, %v2193
        %v2220 = vadd.f32 %v2042, %v2198
        %v2221 = vadd.f32 %v2043, %v2203
        %s2222 = scalar_lea.vmem [#allocation4], 1024
        %v2223 = vld [vmem:[%s2222] sm:$0xff]
        %v2224 = vld [vmem:[%s2222 + $0x8] sm:$0xff]
        %v2225 = vld [vmem:[%s2222 + $0x10] sm:$0xff]
        %v2226 = vld [vmem:[%s2222 + $0x18] sm:$0xff]
        %v2227 = vld [vmem:[%s2222 + $0x20] sm:$0xff]
        %v2228 = vld [vmem:[%s2222 + $0x28] sm:$0xff]
        %v2229 = vld [vmem:[%s2222 + $0x30] sm:$0xff]
        %v2230 = vld [vmem:[%s2222 + $0x38] sm:$0xff]
        %v2231 = vld [vmem:[%s2222 + $0x40] sm:$0xff]
        %v2232 = vld [vmem:[%s2222 + $0x48] sm:$0xff]
        %v2233 = vld [vmem:[%s2222 + $0x50] sm:$0xff]
        %v2234 = vld [vmem:[%s2222 + $0x58] sm:$0xff]
        %v2235 = vld [vmem:[%s2222 + $0x60] sm:$0xff]
        %v2236 = vld [vmem:[%s2222 + $0x68] sm:$0xff]
        %v2237 = vld [vmem:[%s2222 + $0x70] sm:$0xff]
        %v2238 = vld [vmem:[%s2222 + $0x78] sm:$0xff]
        %2239 = vmatprep.subr.mxu0 0.0
        %2240 = vmatpush1.msra.mxu0 %v2223
        %2241 = vmatprep.subr.mxu0 0.0
        %2242 = vmatpush1.msra.mxu0 %v2224
        %2243 = vmatprep.subr.mxu0 0.0
        %2244 = vmatpush1.msra.mxu0 %v2225
        %2245 = vmatprep.subr.mxu0 0.0
        %2246 = vmatpush1.msra.mxu0 %v2226
        %2247 = vmatprep.subr.mxu0 0.0
        %2248 = vmatpush1.msra.mxu0 %v2227
        %2249 = vmatprep.subr.mxu0 0.0
        %2250 = vmatpush1.msra.mxu0 %v2228
        %2251 = vmatprep.subr.mxu0 0.0
        %2252 = vmatpush1.msra.mxu0 %v2229
        %2253 = vmatprep.subr.mxu0 0.0
        %2254 = vmatpush1.msra.mxu0 %v2230
        %2255 = vmatprep.subr.mxu0 0.0
        %2256 = vmatpush1.msra.mxu0 %v2231
        %2257 = vmatprep.subr.mxu0 0.0
        %2258 = vmatpush1.msra.mxu0 %v2232
        %2259 = vmatprep.subr.mxu0 0.0
        %2260 = vmatpush1.msra.mxu0 %v2233
        %2261 = vmatprep.subr.mxu0 0.0
        %2262 = vmatpush1.msra.mxu0 %v2234
        %2263 = vmatprep.subr.mxu0 0.0
        %2264 = vmatpush1.msra.mxu0 %v2235
        %2265 = vmatprep.subr.mxu0 0.0
        %2266 = vmatpush1.msra.mxu0 %v2236
        %2267 = vmatprep.subr.mxu0 0.0
        %2268 = vmatpush1.msra.mxu0 %v2237
        %2269 = vmatprep.subr.mxu0 0.0
        %2270 = vmatpush1.msra.mxu0 %v2238
        %2271 = vmatprep.subr.mxu0 0.0
        %2272 = vmatpush1.msra.mxu0 0.0
        %2273 = vmatprep.subr.mxu0 0.0
        %2274 = vmatpush1.msra.mxu0 0.0
        %2275 = vmatprep.subr.mxu0 0.0
        %2276 = vmatpush1.msra.mxu0 0.0
        %2277 = vmatprep.subr.mxu0 0.0
        %2278 = vmatpush1.msra.mxu0 0.0
        %2279 = vmatprep.subr.mxu0 0.0
        %2280 = vmatpush1.msra.mxu0 0.0
        %2281 = vmatprep.subr.mxu0 0.0
        %2282 = vmatpush1.msra.mxu0 0.0
        %2283 = vmatprep.subr.mxu0 0.0
        %2284 = vmatpush1.msra.mxu0 0.0
        %2285 = vmatprep.subr.mxu0 0.0
        %2286 = vmatpush1.msra.mxu0 0.0
        %2287 = vmatprep.subr.mxu0 0.0
        %2288 = vmatpush1.msra.mxu0 0.0
        %2289 = vmatprep.subr.mxu0 0.0
        %2290 = vmatpush1.msra.mxu0 0.0
        %2291 = vmatprep.subr.mxu0 0.0
        %2292 = vmatpush1.msra.mxu0 0.0
        %2293 = vmatprep.subr.mxu0 0.0
        %2294 = vmatpush1.msra.mxu0 0.0
        %2295 = vmatprep.subr.mxu0 0.0
        %2296 = vmatpush1.msra.mxu0 0.0
        %2297 = vmatprep.subr.mxu0 0.0
        %2298 = vmatpush1.msra.mxu0 0.0
        %2299 = vmatprep.subr.mxu0 0.0
        %2300 = vmatpush1.msra.mxu0 0.0
        %2301 = vmatprep.subr.mxu0 0.0
        %2302 = vmatpush1.msra.mxu0 0.0
        %2303 = vmatprep.mubr.f32.mxu0 0.0
        %2304 = vmatmul.mubr.f32.gmra.mrb[0].mxu0 %v1850
        %v2305 = vpop.f32.mrb[0].mxu0
        %v2306 = vadd.f32 0.0, %v2305
        %v2307 = vpop.f32.mrb[0].mxu0
        %2308 = vmatprep.mubr.f32.mxu0 0.0
        %2309 = vmatmul.mubr.f32.gmra.mrb[0].mxu0 %v1851
        %v2310 = vpop.f32.mrb[0].mxu0
        %v2311 = vadd.f32 0.0, %v2310
        %v2312 = vpop.f32.mrb[0].mxu0
        %2313 = vmatprep.mubr.f32.mxu0 0.0
        %2314 = vmatmul.mubr.f32.gmra.mrb[0].mxu0 %v1852
        %v2315 = vpop.f32.mrb[0].mxu0
        %v2316 = vadd.f32 0.0, %v2315
        %v2317 = vpop.f32.mrb[0].mxu0
        %2318 = vmatprep.mubr.f32.mxu0 0.0
        %2319 = vmatmul.mubr.f32.gmra.mrb[0].mxu0 %v1853
        %v2320 = vpop.f32.mrb[0].mxu0
        %v2321 = vadd.f32 0.0, %v2320
        %v2322 = vpop.f32.mrb[0].mxu0
        %2323 = vmatprep.mubr.f32.mxu0 0.0
        %2324 = vmatmul.mubr.f32.gmra.mrb[0].mxu0 %v1854
        %v2325 = vpop.f32.mrb[0].mxu0
        %v2326 = vadd.f32 0.0, %v2325
        %v2327 = vpop.f32.mrb[0].mxu0
        %2328 = vmatprep.mubr.f32.mxu0 0.0
        %2329 = vmatmul.mubr.f32.gmra.mrb[0].mxu0 %v1855
        %v2330 = vpop.f32.mrb[0].mxu0
        %v2331 = vadd.f32 0.0, %v2330
        %v2332 = vpop.f32.mrb[0].mxu0
        %2333 = vmatprep.mubr.f32.mxu0 0.0
        %2334 = vmatmul.mubr.f32.gmra.mrb[0].mxu0 %v1856
        %v2335 = vpop.f32.mrb[0].mxu0
        %v2336 = vadd.f32 0.0, %v2335
        %v2337 = vpop.f32.mrb[0].mxu0
        %2338 = vmatprep.mubr.f32.mxu0 0.0
        %2339 = vmatmul.mubr.f32.gmra.mrb[0].mxu0 %v1857
        %v2340 = vpop.f32.mrb[0].mxu0
        %v2341 = vadd.f32 0.0, %v2340
        %v2342 = vpop.f32.mrb[0].mxu0
        %2343 = vmatprep.mubr.f32.mxu0 0.0
        %2344 = vmatmul.mubr.f32.gmra.mrb[0].mxu0 %v1858
        %v2345 = vpop.f32.mrb[0].mxu0
        %v2346 = vadd.f32 0.0, %v2345
        %v2347 = vpop.f32.mrb[0].mxu0
        %2348 = vmatprep.mubr.f32.mxu0 0.0
        %2349 = vmatmul.mubr.f32.gmra.mrb[0].mxu0 %v1859
        %v2350 = vpop.f32.mrb[0].mxu0
        %v2351 = vadd.f32 0.0, %v2350
        %v2352 = vpop.f32.mrb[0].mxu0
        %2353 = vmatprep.mubr.f32.mxu0 0.0
        %2354 = vmatmul.mubr.f32.gmra.mrb[0].mxu0 %v1860
        %v2355 = vpop.f32.mrb[0].mxu0
        %v2356 = vadd.f32 0.0, %v2355
        %v2357 = vpop.f32.mrb[0].mxu0
        %2358 = vmatprep.mubr.f32.mxu0 0.0
        %2359 = vmatmul.mubr.f32.gmra.mrb[0].mxu0 %v1861
        %v2360 = vpop.f32.mrb[0].mxu0
        %v2361 = vadd.f32 0.0, %v2360
        %v2362 = vpop.f32.mrb[0].mxu0
        %2363 = vmatprep.mubr.f32.mxu0 0.0
        %2364 = vmatmul.mubr.f32.gmra.mrb[0].mxu0 %v1862
        %v2365 = vpop.f32.mrb[0].mxu0
        %v2366 = vadd.f32 0.0, %v2365
        %v2367 = vpop.f32.mrb[0].mxu0
        %2368 = vmatprep.mubr.f32.mxu0 0.0
        %2369 = vmatmul.mubr.f32.gmra.mrb[0].mxu0 %v1863
        %v2370 = vpop.f32.mrb[0].mxu0
        %v2371 = vadd.f32 0.0, %v2370
        %v2372 = vpop.f32.mrb[0].mxu0
        %2373 = vmatprep.mubr.f32.mxu0 0.0
        %2374 = vmatmul.mubr.f32.gmra.mrb[0].mxu0 %v1864
        %v2375 = vpop.f32.mrb[0].mxu0
        %v2376 = vadd.f32 0.0, %v2375
        %v2377 = vpop.f32.mrb[0].mxu0
        %2378 = vmatprep.mubr.f32.mxu0 0.0
        %2379 = vmatmul.mubr.f32.gmra.mrb[0].mxu0 %v1865
        %v2380 = vpop.f32.mrb[0].mxu0
        %v2381 = vadd.f32 0.0, %v2380
        %v2382 = vpop.f32.mrb[0].mxu0
        %2383 = vdwg.mxu0
        %v2384 = vadd.f32 %v2206, %v2306
        %v2385 = vadd.f32 %v2207, %v2311
        %v2386 = vadd.f32 %v2208, %v2316
        %v2387 = vadd.f32 %v2209, %v2321
        %v2388 = vadd.f32 %v2210, %v2326
        %v2389 = vadd.f32 %v2211, %v2331
        %v2390 = vadd.f32 %v2212, %v2336
        %v2391 = vadd.f32 %v2213, %v2341
        %v2392 = vadd.f32 %v2214, %v2346
        %v2393 = vadd.f32 %v2215, %v2351
        %v2394 = vadd.f32 %v2216, %v2356
        %v2395 = vadd.f32 %v2217, %v2361
        %v2396 = vadd.f32 %v2218, %v2366
        %v2397 = vadd.f32 %v2219, %v2371
        %v2398 = vadd.f32 %v2220, %v2376
        %v2399 = vadd.f32 %v2221, %v2381
        %v2400 = vld [vmem:[%s3] sm:$0x1]
        %v2402 = vlaneseq
        %v2403 = vshrl.u32 %v2402, 7
        %v2404 = vsub.s32 0, %v2403
        %v2405 = vrot.slane %v2400, %v2404
        %v2407 = vadd.f32 %v2384, %v2405
        %v2408 = vadd.f32 %v2385, %v2405
        %v2409 = vadd.f32 %v2386, %v2405
        %v2410 = vadd.f32 %v2387, %v2405
        %v2411 = vadd.f32 %v2388, %v2405
        %v2412 = vadd.f32 %v2389, %v2405
        %v2413 = vadd.f32 %v2390, %v2405
        %v2414 = vadd.f32 %v2391, %v2405
        %v2415 = vadd.f32 %v2392, %v2405
        %v2416 = vadd.f32 %v2393, %v2405
        %v2417 = vadd.f32 %v2394, %v2405
        %v2418 = vadd.f32 %v2395, %v2405
        %v2419 = vadd.f32 %v2396, %v2405
        %v2420 = vadd.f32 %v2397, %v2405
        %v2421 = vadd.f32 %v2398, %v2405
        %v2422 = vadd.f32 %v2399, %v2405
        %v2423 = vmax.f32 %v2407, 0.0
        %v2424 = vmax.f32 %v2408, 0.0
        %v2425 = vmax.f32 %v2409, 0.0
        %v2426 = vmax.f32 %v2410, 0.0
        %v2427 = vmax.f32 %v2411, 0.0
        %v2428 = vmax.f32 %v2412, 0.0
        %v2429 = vmax.f32 %v2413, 0.0
        %v2430 = vmax.f32 %v2414, 0.0
        %v2431 = vmax.f32 %v2415, 0.0
        %v2432 = vmax.f32 %v2416, 0.0
        %v2433 = vmax.f32 %v2417, 0.0
        %v2434 = vmax.f32 %v2418, 0.0
        %v2435 = vmax.f32 %v2419, 0.0
        %v2436 = vmax.f32 %v2420, 0.0
        %v2437 = vmax.f32 %v2421, 0.0
        %v2438 = vmax.f32 %v2422, 0.0
        %v2439 = vld [vmem:[%s2] sm:$0xff]
        %v2440 = vld [vmem:[%s2 + $0x8] sm:$0xff]
        %v2441 = vld [vmem:[%s2 + $0x10] sm:$0xff]
        %v2442 = vld [vmem:[%s2 + $0x18] sm:$0xff]
        %v2443 = vld [vmem:[%s2 + $0x20] sm:$0xff]
        %v2444 = vld [vmem:[%s2 + $0x28] sm:$0xff]
        %v2445 = vld [vmem:[%s2 + $0x30] sm:$0xff]
        %v2446 = vld [vmem:[%s2 + $0x38] sm:$0xff]
        %v2447 = vld [vmem:[%s2 + $0x40] sm:$0xff]
        %v2448 = vld [vmem:[%s2 + $0x48] sm:$0xff]
        %v2449 = vld [vmem:[%s2 + $0x50] sm:$0xff]
        %v2450 = vld [vmem:[%s2 + $0x58] sm:$0xff]
        %v2451 = vld [vmem:[%s2 + $0x60] sm:$0xff]
        %v2452 = vld [vmem:[%s2 + $0x68] sm:$0xff]
        %v2453 = vld [vmem:[%s2 + $0x70] sm:$0xff]
        %v2454 = vld [vmem:[%s2 + $0x78] sm:$0xff]
        %v2455 = vld [vmem:[%s4] sm:$0x1]
        %v2457 = vlaneseq
        %v2458 = vshrl.u32 %v2457, 7
        %v2459 = vsub.s32 0, %v2458
        %v2460 = vrot.slane %v2455, %v2459
        %2462 = vmatprep.subr.mxu0 0.0
        %2463 = vmatpush1.msra.mxu0 %v2439
        %2464 = vmatprep.subr.mxu0 0.0
        %2465 = vmatpush1.msra.mxu0 %v2440
        %2466 = vmatprep.subr.mxu0 0.0
        %2467 = vmatpush1.msra.mxu0 %v2441
        %2468 = vmatprep.subr.mxu0 0.0
        %2469 = vmatpush1.msra.mxu0 %v2442
        %2470 = vmatprep.subr.mxu0 0.0
        %2471 = vmatpush1.msra.mxu0 %v2443
        %2472 = vmatprep.subr.mxu0 0.0
        %2473 = vmatpush1.msra.mxu0 %v2444
        %2474 = vmatprep.subr.mxu0 0.0
        %2475 = vmatpush1.msra.mxu0 %v2445
        %2476 = vmatprep.subr.mxu0 0.0
        %2477 = vmatpush1.msra.mxu0 %v2446
        %2478 = vmatprep.subr.mxu0 0.0
        %2479 = vmatpush1.msra.mxu0 %v2447
        %2480 = vmatprep.subr.mxu0 0.0
        %2481 = vmatpush1.msra.mxu0 %v2448
        %2482 = vmatprep.subr.mxu0 0.0
        %2483 = vmatpush1.msra.mxu0 %v2449
        %2484 = vmatprep.subr.mxu0 0.0
        %2485 = vmatpush1.msra.mxu0 %v2450
        %2486 = vmatprep.subr.mxu0 0.0
        %2487 = vmatpush1.msra.mxu0 %v2451
        %2488 = vmatprep.subr.mxu0 0.0
        %2489 = vmatpush1.msra.mxu0 %v2452
        %2490 = vmatprep.subr.mxu0 0.0
        %2491 = vmatpush1.msra.mxu0 %v2453
        %2492 = vmatprep.subr.mxu0 0.0
        %2493 = vmatpush1.msra.mxu0 %v2454
        %2494 = vmatprep.subr.mxu0 0.0
        %2495 = vmatpush1.msra.mxu0 0.0
        %2496 = vmatprep.subr.mxu0 0.0
        %2497 = vmatpush1.msra.mxu0 0.0
        %2498 = vmatprep.subr.mxu0 0.0
        %2499 = vmatpush1.msra.mxu0 0.0
        %2500 = vmatprep.subr.mxu0 0.0
        %2501 = vmatpush1.msra.mxu0 0.0
        %2502 = vmatprep.subr.mxu0 0.0
        %2503 = vmatpush1.msra.mxu0 0.0
        %2504 = vmatprep.subr.mxu0 0.0
        %2505 = vmatpush1.msra.mxu0 0.0
        %2506 = vmatprep.subr.mxu0 0.0
        %2507 = vmatpush1.msra.mxu0 0.0
        %2508 = vmatprep.subr.mxu0 0.0
        %2509 = vmatpush1.msra.mxu0 0.0
        %2510 = vmatprep.subr.mxu0 0.0
        %2511 = vmatpush1.msra.mxu0 0.0
        %2512 = vmatprep.subr.mxu0 0.0
        %2513 = vmatpush1.msra.mxu0 0.0
        %2514 = vmatprep.subr.mxu0 0.0
        %2515 = vmatpush1.msra.mxu0 0.0
        %2516 = vmatprep.subr.mxu0 0.0
        %2517 = vmatpush1.msra.mxu0 0.0
        %2518 = vmatprep.subr.mxu0 0.0
        %2519 = vmatpush1.msra.mxu0 0.0
        %2520 = vmatprep.subr.mxu0 0.0
        %2521 = vmatpush1.msra.mxu0 0.0
        %2522 = vmatprep.subr.mxu0 0.0
        %2523 = vmatpush1.msra.mxu0 0.0
        %2524 = vmatprep.subr.mxu0 0.0
        %2525 = vmatpush1.msra.mxu0 0.0
        %2526 = vmatprep.mubr.f32.mxu0 0.0
        %2527 = vmatmul.mubr.f32.gmra.mrb[0].mxu0 %v2423
        %v2528 = vpop.f32.mrb[0].mxu0
        %v2529 = vadd.f32 %v2460, %v2528
        %v2530 = vpop.f32.mrb[0].mxu0
        %2531 = vmatprep.mubr.f32.mxu0 0.0
        %2532 = vmatmul.mubr.f32.gmra.mrb[0].mxu0 %v2424
        %v2533 = vpop.f32.mrb[0].mxu0
        %v2534 = vadd.f32 %v2460, %v2533
        %v2535 = vpop.f32.mrb[0].mxu0
        %2536 = vmatprep.mubr.f32.mxu0 0.0
        %2537 = vmatmul.mubr.f32.gmra.mrb[0].mxu0 %v2425
        %v2538 = vpop.f32.mrb[0].mxu0
        %v2539 = vadd.f32 %v2460, %v2538
        %v2540 = vpop.f32.mrb[0].mxu0
        %2541 = vmatprep.mubr.f32.mxu0 0.0
        %2542 = vmatmul.mubr.f32.gmra.mrb[0].mxu0 %v2426
        %v2543 = vpop.f32.mrb[0].mxu0
        %v2544 = vadd.f32 %v2460, %v2543
        %v2545 = vpop.f32.mrb[0].mxu0
        %2546 = vmatprep.mubr.f32.mxu0 0.0
        %2547 = vmatmul.mubr.f32.gmra.mrb[0].mxu0 %v2427
        %v2548 = vpop.f32.mrb[0].mxu0
        %v2549 = vadd.f32 %v2460, %v2548
        %v2550 = vpop.f32.mrb[0].mxu0
        %2551 = vmatprep.mubr.f32.mxu0 0.0
        %2552 = vmatmul.mubr.f32.gmra.mrb[0].mxu0 %v2428
        %v2553 = vpop.f32.mrb[0].mxu0
        %v2554 = vadd.f32 %v2460, %v2553
        %v2555 = vpop.f32.mrb[0].mxu0
        %2556 = vmatprep.mubr.f32.mxu0 0.0
        %2557 = vmatmul.mubr.f32.gmra.mrb[0].mxu0 %v2429
        %v2558 = vpop.f32.mrb[0].mxu0
        %v2559 = vadd.f32 %v2460, %v2558
        %v2560 = vpop.f32.mrb[0].mxu0
        %2561 = vmatprep.mubr.f32.mxu0 0.0
        %2562 = vmatmul.mubr.f32.gmra.mrb[0].mxu0 %v2430
        %v2563 = vpop.f32.mrb[0].mxu0
        %v2564 = vadd.f32 %v2460, %v2563
        %v2565 = vpop.f32.mrb[0].mxu0
        %2566 = vmatprep.mubr.f32.mxu0 0.0
        %2567 = vmatmul.mubr.f32.gmra.mrb[0].mxu0 %v2431
        %v2568 = vpop.f32.mrb[0].mxu0
        %v2569 = vadd.f32 %v2460, %v2568
        %v2570 = vpop.f32.mrb[0].mxu0
        %2571 = vmatprep.mubr.f32.mxu0 0.0
        %2572 = vmatmul.mubr.f32.gmra.mrb[0].mxu0 %v2432
        %v2573 = vpop.f32.mrb[0].mxu0
        %v2574 = vadd.f32 %v2460, %v2573
        %v2575 = vpop.f32.mrb[0].mxu0
        %2576 = vmatprep.mubr.f32.mxu0 0.0
        %2577 = vmatmul.mubr.f32.gmra.mrb[0].mxu0 %v2433
        %v2578 = vpop.f32.mrb[0].mxu0
        %v2579 = vadd.f32 %v2460, %v2578
        %v2580 = vpop.f32.mrb[0].mxu0
        %2581 = vmatprep.mubr.f32.mxu0 0.0
        %2582 = vmatmul.mubr.f32.gmra.mrb[0].mxu0 %v2434
        %v2583 = vpop.f32.mrb[0].mxu0
        %v2584 = vadd.f32 %v2460, %v2583
        %v2585 = vpop.f32.mrb[0].mxu0
        %2586 = vmatprep.mubr.f32.mxu0 0.0
        %2587 = vmatmul.mubr.f32.gmra.mrb[0].mxu0 %v2435
        %v2588 = vpop.f32.mrb[0].mxu0
        %v2589 = vadd.f32 %v2460, %v2588
        %v2590 = vpop.f32.mrb[0].mxu0
        %2591 = vmatprep.mubr.f32.mxu0 0.0
        %2592 = vmatmul.mubr.f32.gmra.mrb[0].mxu0 %v2436
        %v2593 = vpop.f32.mrb[0].mxu0
        %v2594 = vadd.f32 %v2460, %v2593
        %v2595 = vpop.f32.mrb[0].mxu0
        %2596 = vmatprep.mubr.f32.mxu0 0.0
        %2597 = vmatmul.mubr.f32.gmra.mrb[0].mxu0 %v2437
        %v2598 = vpop.f32.mrb[0].mxu0
        %v2599 = vadd.f32 %v2460, %v2598
        %v2600 = vpop.f32.mrb[0].mxu0
        %2601 = vmatprep.mubr.f32.mxu0 0.0
        %2602 = vmatmul.mubr.f32.gmra.mrb[0].mxu0 %v2438
        %v2603 = vpop.f32.mrb[0].mxu0
        %v2604 = vadd.f32 %v2460, %v2603
        %v2605 = vpop.f32.mrb[0].mxu0
        %2606 = vdwg.mxu0
        %vm2607 = vcmask 39936
        %2608 = vst.msk [vmem:[%s285] sm:$0xff] %vm2607, %v2529
        %2609 = vst.msk [vmem:[%s285 + $0x8] sm:$0xff] %vm2607, %v2534
        %2610 = vst.msk [vmem:[%s285 + $0x10] sm:$0xff] %vm2607, %v2539
        %2611 = vst.msk [vmem:[%s285 + $0x18] sm:$0xff] %vm2607, %v2544
        %2612 = vst.msk [vmem:[%s285 + $0x20] sm:$0xff] %vm2607, %v2549
        %2613 = vst.msk [vmem:[%s285 + $0x28] sm:$0xff] %vm2607, %v2554
        %2614 = vst.msk [vmem:[%s285 + $0x30] sm:$0xff] %vm2607, %v2559
        %2615 = vst.msk [vmem:[%s285 + $0x38] sm:$0xff] %vm2607, %v2564
        %2616 = vst.msk [vmem:[%s285 + $0x40] sm:$0xff] %vm2607, %v2569
        %2617 = vst.msk [vmem:[%s285 + $0x48] sm:$0xff] %vm2607, %v2574
        %2618 = vst.msk [vmem:[%s285 + $0x50] sm:$0xff] %vm2607, %v2579
        %2619 = vst.msk [vmem:[%s285 + $0x58] sm:$0xff] %vm2607, %v2584
        %2620 = vst.msk [vmem:[%s285 + $0x60] sm:$0xff] %vm2607, %v2589
        %2621 = vst.msk [vmem:[%s285 + $0x68] sm:$0xff] %vm2607, %v2594
        %2622 = vst.msk [vmem:[%s285 + $0x70] sm:$0xff] %vm2607, %v2599
        %2623 = vst.msk [vmem:[%s285 + $0x78] sm:$0xff] %vm2607, %v2604
        %p2624 = scmp.lt.s32.totalorder %s24, 1
        %s2625 = scalar_select %p2624, %s24, 1
        %p2626 = scmp.lt.s32.totalorder %s25, 1
        %s2627 = scalar_select %p2626, %s25, 1
        %s2628 = smul.addr %s2627, 16
        %s2629 = smul.addr %s2625, 32
        %s2630 = sadd.s32 %s2628, %s2629
        %s2631 = smul.addr %s2630, 8
        %s2632 = scalar_lea.vmem %s5, %s2631
        // Predicated region
        $region49: #{tpu_custom_call.1} parent=39 // pred_check
          %p2633 = pneg %p164
        $region50: #{tpu_custom_call.1} parent=39 // pred_check_branch
          %2635 = sbr.rel (%p2633) target = $region52
        $region51: #{tpu_custom_call.1} parent=39 // pred_region
          _
        $region52: #{tpu_custom_call.1} parent=39 // pred_fallthru
          _
      $region40: #{tpu_custom_call.1} parent=5 // pred_fallthru
        _
      %p2636 = scmp.le.s32.totalorder 2, %s15
      // Predicated region
      $region53: #{tpu_custom_call.1} parent=5 // pred_check
        %p2637 = pneg %p2636
      $region54: #{tpu_custom_call.1} parent=5 // pred_check_branch
        %2639 = sbr.rel (%p2637) target = $region56
      $region55: #{tpu_custom_call.1} parent=5 // pred_region
        %s2640 = ssub.s32 %s15, 2
        // Predicated region
        $region57: #{tpu_custom_call.1} parent=55 // pred_check
          %p2641 = pneg %p170
        $region58: #{tpu_custom_call.1} parent=55 // pred_check_branch
          %2643 = sbr.rel (%p2641) target = $region60
        $region59: #{tpu_custom_call.1} parent=55 // pred_region
          %p2644 = scmp.lt.s32.totalorder %s26, 1
          %s2645 = scalar_select %p2644, %s26, 1
          %p2646 = scmp.lt.s32.totalorder %s27, 1
          %s2647 = scalar_select %p2646, %s27, 1
          %s2648 = smul.addr %s2647, 16
          %s2649 = smul.addr %s2645, 32
          %s2650 = sadd.s32 %s2648, %s2649
          %s2651 = smul.addr %s2650, 8
          %s2652 = scalar_lea.vmem %s5, %s2651
        $region60: #{tpu_custom_call.1} parent=55 // pred_fallthru
          _
      $region56: #{tpu_custom_call.1} parent=5 // pred_fallthru
        _
    $region6: #{tpu_custom_call.1} parent=1 // loop_footer
      %s19 = sadd.s32 1, %s15
    $region7: #{tpu_custom_call.1} parent=1 // loop_footer_branch
      %14 = sbr.rel target = $region3
    $region8: #{tpu_custom_call.1} parent=1 // loop_exit
      _
    %2653 = vsyncpa [#allocation3], 1
    %s2654 = scalar_lea.sflag [#allocation3], 1
    %2655 = vsyncpa %s2654, 1
    %2656 = vsyncpa [#allocation5], 1

</llo_original>
